<compile_context>
chip_gen: v6e
topology: v6e:2x2x1
jax: 0.10.0
libtpu: 0.0.40
codegen_flags: <defaults>
</compile_context>

<pallas_src>
import functools

import jax
import jax.numpy as jnp
from jax.experimental import pallas as pl
from jax.experimental.pallas import tpu as pltpu

GROUP_DIM = 8          # GroupNorm groups (from the reference module)
LEAKY_SLOPE = 0.01     # nn.LeakyReLU default negative_slope
GN_EPS = 1e-5          # nn.GroupNorm default eps


def _leaky_relu(x):
    return jnp.where(x > 0, x, LEAKY_SLOPE * x)


def _conv3x3_matmul(xp, w_flat, B, H, W, C):
    """3x3 'same' conv as MXU matmul(s); returns (B*H*W, Cout) f32.

    xp:     (B, H+2, W+2, C) zero-padded activation (f32 or bf16).
    w_flat: (9*C, Cout) bf16 weights, tap-major rows (kh, kw, cin).

    Small C (< 128): one im2col matmul with K = 9*C so the contraction is
    MXU-sized even for narrow layers.
    Large C (>= 128): nine per-tap dots with K = C, accumulated in f32, which
    never materializes the (B*HW, 9*C) patch matrix (v7x 64 MiB VMEM).
    Operands are bf16 (MXU-native on v5e/v6e/v7x); accumulation is f32 via
    preferred_element_type, matching XLA's default-precision conv numerics.
    """
    taps = [xp[:, kh:kh + H, kw:kw + W, :].reshape(B * H * W, C)
            for kh in range(3) for kw in range(3)]
    if C < 128:
        patches = jnp.concatenate(taps, axis=-1).astype(jnp.bfloat16)   # (BHW, 9C)
        return jnp.dot(patches, w_flat, preferred_element_type=jnp.float32)
    cout = w_flat.shape[-1]
    acc = jnp.zeros((B * H * W, cout), jnp.float32)
    for t in range(9):
        acc = acc + jnp.dot(taps[t].astype(jnp.bfloat16),
                            w_flat[t * C:(t + 1) * C, :],
                            preferred_element_type=jnp.float32)
    return acc


def _gn_scale_shift(y, gamma, beta, gmat):
    """GroupNorm folded into a per-channel affine (f32 throughout).
    y: (B, HW, C); gamma/beta: (1, C); gmat: (C, C) group-averaging matrix
    (gmat[i, j] = 1/(HW*C/G) iff channels i, j share a group).
    Single pass over y; var = E[x^2] - mean^2, clamped at 0."""
    B = y.shape[0]
    s = jnp.concatenate([jnp.sum(y, axis=1), jnp.sum(y * y, axis=1)], axis=0)  # (2B, C)
    g = jnp.dot(s, gmat, preferred_element_type=jnp.float32)                   # (2B, C)
    mean, msq = g[:B], g[B:]
    var = jnp.maximum(msq - mean * mean, 0.0)          # guard cancellation
    scale = gamma * jax.lax.rsqrt(var + GN_EPS)        # (B, C)
    shift = beta - mean * scale
    return scale[:, None, :], shift[:, None, :]


def basic_block_kernel(xp_ref, w1_ref, g1_ref, b1_ref, w2_ref, g2_ref, b2_ref,
                       gmat_ref, o_ref, a1pad_ref, *, transpose_out):
    B, Hp, Wp, C = xp_ref.shape
    H, W = Hp - 2, Wp - 2
    HW = H * W

    xp = xp_ref[...]                                   # (B, H+2, W+2, C) f32
    gmat = gmat_ref[...]                               # (C, C) f32

    # Residual = the un-padded input (stride=1 / downsample=None path), f32.
    residual = xp[:, 1:H + 1, 1:W + 1, :].reshape(B, HW, C)

    # --- conv1 (bf16 MXU operands, f32 accumulation) --------------------------
    y1 = _conv3x3_matmul(xp, w1_ref[...], B, H, W, C).reshape(B, HW, C)

    # --- gn1 + LeakyReLU: one-pass stats + fused per-channel FMA --------------
    s1, t1 = _gn_scale_shift(y1, g1_ref[...], b1_ref[...], gmat)
    a1 = _leaky_relu(y1 * s1 + t1)                     # (B, HW, C) f32

    # --- conv2 via a persistent zero-halo VMEM scratch (no in-kernel jnp.pad) -
    # Only the interior is rewritten each step.  The halo is re-zeroed every
    # step (border-only, cheap) rather than once under pl.when(program_id==0),
    # which would be wrong when the "parallel" batch axis is sharded across
    # the two v7x TensorCores (the second core never sees step 0).
    zdt = a1pad_ref.dtype
    zrow = jnp.zeros((B, 1, Wp, C), zdt)
    zcol = jnp.zeros((B, H, 1, C), zdt)
    a1pad_ref[:, 0:1, :, :] = zrow
    a1pad_ref[:, H + 1:H + 2, :, :] = zrow
    a1pad_ref[:, 1:H + 1, 0:1, :] = zcol
    a1pad_ref[:, 1:H + 1, W + 1:W + 2, :] = zcol
    a1pad_ref[:, 1:H + 1, 1:W + 1, :] = a1.reshape(B, H, W, C).astype(zdt)

    y2 = _conv3x3_matmul(a1pad_ref[...], w2_ref[...], B, H, W, C).reshape(B, HW, C)

    # --- gn2 + residual + LeakyReLU in one fused elementwise pass -------------
    s2, t2 = _gn_scale_shift(y2, g2_ref[...], b2_ref[...], gmat)
    out = _leaky_relu(y2 * s2 + t2 + residual)

    # --- store -----------------------------------------------------------------
    if transpose_out:
        # Small C: lane dim C wastes vreg lanes, so store (C, HW): last dim is
        # H*W (lane-dense; note HW not a multiple of 128, e.g. 56*56=3136,
        # still leaves a masked tail vreg per row) and the HBM result is
        # already NCHW-flat.  One batched XLU transpose + one store.
        o_ref[...] = jnp.transpose(out, (0, 2, 1)).astype(o_ref.dtype)
    else:
        # C >= 128: lane dim C is already dense; skip the XLU transpose and
        # let the wrapper do the NCHW reshape in XLA.
        o_ref[...] = out.astype(o_ref.dtype)


def _vmem_limit_bytes():
    """Per-generation scoped-VMEM budget: ~7/8 of physical VMEM
    (~56 MiB on v7x, ~112 MiB on v5e/v6e); safe fallback if the query fails."""
    try:
        cap = int(pltpu.get_tpu_info().vmem_capacity_bytes)
    except Exception:
        cap = 64 * 1024 * 1024
    return (cap // 8) * 7


def basic_block(x_nchw, w1_oihw, gamma1, beta1, w2_oihw, gamma2, beta2,
                *, images_per_step=1):
    """Fused BasicBlock forward (stride=1 / downsample=None path).

    x_nchw: (N, C, H, W) f32; conv weights in PyTorch OIHW layout.
    Returns (N, C, H, W) f32.

    images_per_step (B): images folded into one grid step.  Keep N // B >= 2
    so BlockSpec double-buffering overlaps input DMA / output writeback with
    compute (v5e/v6e), and keep the grid length even on v7x so both
    TensorCores get work ("parallel" batch axis).  Raise B (within VMEM) to
    grow the matmul M rather than collapsing the grid to a single step.
    """
    N, Cin, H, W = x_nchw.shape
    Cout, Cin_w, kh, kw = w1_oihw.shape
    assert (kh, kw) == (3, 3) and Cin_w == Cin
    assert Cin == Cout, "stride=1 / downsample=None path requires inplanes == planes"
    assert Cout % GROUP_DIM == 0
    assert N % images_per_step == 0
    B, C, HW = images_per_step, Cout, H * W

    # Layout glue (XLA, outside the kernel):
    #  * NCHW -> NHWC, zero-pad the spatial dims once (kernel never pads x).
    #    x stays f32 in HBM so the residual add is exact; conv operands are
    #    cast to bf16 inside the kernel.
    #  * OIHW conv weights -> (kh, kw, cin, cout) -> flat (9*Cin, Cout) bf16,
    #    matching the im2col tap order (kh, kw, cin).
    x_pad = jnp.pad(jnp.transpose(x_nchw, (0, 2, 3, 1)),
                    ((0, 0), (1, 1), (1, 1), (0, 0)))
    w1_flat = jnp.transpose(w1_oihw, (2, 3, 1, 0)).reshape(9 * Cin, C).astype(jnp.bfloat16)
    w2_flat = jnp.transpose(w2_oihw, (2, 3, 1, 0)).reshape(9 * C, C).astype(jnp.bfloat16)
    g1_2d, b1_2d = gamma1.reshape(1, C), beta1.reshape(1, C)
    g2_2d, b2_2d = gamma2.reshape(1, C), beta2.reshape(1, C)

    # Group-averaging matrix: gmat[i, j] = 1/(H*W*C/G) iff i, j share a group.
    cg = C // GROUP_DIM
    grp = jnp.arange(C) // cg
    gmat = (grp[:, None] == grp[None, :]).astype(jnp.float32) / float(HW * cg)

    transpose_out = C < 128
    if transpose_out:
        out_shape = jax.ShapeDtypeStruct((N, C, HW), jnp.float32)
        out_spec = pl.BlockSpec((B, C, HW), lambda n: (n, 0, 0))
        scratch_dtype = jnp.float32    # small-C path concatenates f32 taps
    else:
        out_shape = jax.ShapeDtypeStruct((N, HW, C), jnp.float32)
        out_spec = pl.BlockSpec((B, HW, C), lambda n: (n, 0, 0))
        scratch_dtype = jnp.bfloat16   # only ever consumed as an MXU operand

    kernel = functools.partial(basic_block_kernel, transpose_out=transpose_out)

    # TODO(synk): at realistic v7x sizes (e.g. C=256, 56x56) add a second
    # "arbitrary" spatial grid axis with a two-pass (stats then normalize)
    # GroupNorm so whole-image residency drops below the 64 MiB VMEM.
    out = pl.pallas_call(
        kernel,
        out_shape=out_shape,
        grid=(N // B,),
        in_specs=[
            pl.BlockSpec((B, H + 2, W + 2, Cin), lambda n: (n, 0, 0, 0)),
            # NOTE: w1/w2/gmat/gamma/beta are grid-invariant (constant
            # index_map -> no re-fetch) but still double-buffered; at C=256 on
            # v7x, pipeline_mode=pl.Buffered(1) on these specs (or a one-time
            # DMA into scratch) would reclaim a few MiB of VMEM.
            pl.BlockSpec((9 * Cin, C), lambda n: (0, 0)),
            pl.BlockSpec((1, C), lambda n: (0, 0)),
            pl.BlockSpec((1, C), lambda n: (0, 0)),
            pl.BlockSpec((9 * C, C), lambda n: (0, 0)),
            pl.BlockSpec((1, C), lambda n: (0, 0)),
            pl.BlockSpec((1, C), lambda n: (0, 0)),
            pl.BlockSpec((C, C), lambda n: (0, 0)),
        ],
        out_specs=out_spec,
        scratch_shapes=[pltpu.VMEM((B, H + 2, W + 2, C), scratch_dtype)],
        compiler_params=pltpu.CompilerParams(
            dimension_semantics=("parallel",),
            vmem_limit_bytes=_vmem_limit_bytes()),
    )(x_pad, w1_flat, g1_2d, b1_2d, w2_flat, g2_2d, b2_2d, gmat)

    if transpose_out:
        # (N, C, H*W) is already NCHW-flat; just split the spatial dim back.
        return out.reshape(N, C, H, W)
    return jnp.transpose(out, (0, 2, 1)).reshape(N, C, H, W)


def _reference(x, w1, g1, b1, w2, g2, b2):
    """Pure-JAX reference of the PyTorch BasicBlock forward (stride=1)."""
    def conv(x, w):
        return jax.lax.conv_general_dilated(
            x, w, window_strides=(1, 1), padding=((1, 1), (1, 1)),
            dimension_numbers=("NCHW", "OIHW", "NCHW"))

    def gn(x, gamma, beta):
        N, C, H, W = x.shape
        xg = x.reshape(N, GROUP_DIM, C // GROUP_DIM, H, W)
        mean = xg.mean(axis=(2, 3, 4), keepdims=True)
        var = ((xg - mean) ** 2).mean(axis=(2, 3, 4), keepdims=True)
        xn = ((xg - mean) * jax.lax.rsqrt(var + GN_EPS)).reshape(N, C, H, W)
        return xn * gamma.reshape(1, C, 1, 1) + beta.reshape(1, C, 1, 1)

    out = _leaky_relu(gn(conv(x, w1), g1, b1))
    out = gn(conv(out, w2), g2, b2)
    return _leaky_relu(out + x)


if __name__ == "__main__":
    # Small shapes consistent with the module: inplanes = planes = 16
    # (divisible by group_dim=8), batch=2, spatial=16, stride=1, downsample=None.
    N, C, H, W = 2, 16, 16, 16
    key = jax.random.PRNGKey(0)
    kx, kw1, kw2, kg1, kb1, kg2, kb2 = jax.random.split(key, 7)

    x = jax.random.normal(kx, (N, C, H, W), jnp.float32)

    # PyTorch-style OIHW conv weights and GroupNorm affine parameters.
    fan_in = C * 3 * 3
    w1 = jax.random.normal(kw1, (C, C, 3, 3), jnp.float32) * (2.0 / fan_in) ** 0.5
    w2 = jax.random.normal(kw2, (C, C, 3, 3), jnp.float32) * (2.0 / fan_in) ** 0.5
    g1 = 1.0 + 0.1 * jax.random.normal(kg1, (C,), jnp.float32)
    b1 = 0.1 * jax.random.normal(kb1, (C,), jnp.float32)
    g2 = 1.0 + 0.1 * jax.random.normal(kg2, (C,), jnp.float32)
    b2 = 0.1 * jax.random.normal(kb2, (C,), jnp.float32)

    # TODO(synk): the stride=2 branch of conv3x3 (padding=2) and a non-None
    # downsample are not implemented / exercised here.

    out = basic_block(x, w1, g1, b1, w2, g2, b2)
    jax.block_until_ready(out)
    assert out.shape == (N, C, H, W)
    assert bool(jnp.all(jnp.isfinite(out)))

    ref = _reference(x, w1, g1, b1, w2, g2, b2)
    max_err = float(jnp.max(jnp.abs(out - ref)))
    # Kernel uses bf16 MXU operands with f32 accumulation; the reference conv
    # runs at XLA's default TPU precision -> differences of a few e-3 typical.
    assert max_err < 5e-2, f"mismatch vs reference: {max_err}"

    print("KERNEL_OK")
</pallas_src>

<mosaic_0001>
module attributes {stable_mosaic.version = 11 : i64} {
  func.func @basic_block_kernel(%arg0: i32, %arg1: memref<1x18x18x16xf32, #tpu.memory_space<vmem>>, %arg2: memref<144x16xbf16, #tpu.memory_space<vmem>>, %arg3: memref<1x16xf32, #tpu.memory_space<vmem>>, %arg4: memref<1x16xf32, #tpu.memory_space<vmem>>, %arg5: memref<144x16xbf16, #tpu.memory_space<vmem>>, %arg6: memref<1x16xf32, #tpu.memory_space<vmem>>, %arg7: memref<1x16xf32, #tpu.memory_space<vmem>>, %arg8: memref<16x16xf32, #tpu.memory_space<vmem>>, %arg9: memref<1x16x256xf32, #tpu.memory_space<vmem>>, %arg10: memref<1x18x18x16xf32, #tpu.memory_space<vmem>>) attributes {dimension_semantics = [#tpu.dimension_semantics<parallel>], iteration_bounds = array<i64: 2>, scalar_prefetch = 0 : i64, scratch_operands = 1 : i64, tpu.core_type = #tpu.core_type<tc>, window_params = [{transform_indices = @transform_0, window_bounds = array<i64: 1, 18, 18, 16>}, {pipeline_mode = #tpu.pipeline_mode<synchronous>, transform_indices = @transform_1, window_bounds = array<i64: 144, 16>}, {pipeline_mode = #tpu.pipeline_mode<synchronous>, transform_indices = @transform_2, window_bounds = array<i64: 1, 16>}, {pipeline_mode = #tpu.pipeline_mode<synchronous>, transform_indices = @transform_3, window_bounds = array<i64: 1, 16>}, {pipeline_mode = #tpu.pipeline_mode<synchronous>, transform_indices = @transform_4, window_bounds = array<i64: 144, 16>}, {pipeline_mode = #tpu.pipeline_mode<synchronous>, transform_indices = @transform_5, window_bounds = array<i64: 1, 16>}, {pipeline_mode = #tpu.pipeline_mode<synchronous>, transform_indices = @transform_6, window_bounds = array<i64: 1, 16>}, {pipeline_mode = #tpu.pipeline_mode<synchronous>, transform_indices = @transform_7, window_bounds = array<i64: 16, 16>}, {transform_indices = @transform_8, window_bounds = array<i64: 1, 16, 256>}]} {
    %c0 = arith.constant 0 : index
    %c0_0 = arith.constant 0 : index
    %c0_1 = arith.constant 0 : index
    %c0_2 = arith.constant 0 : index
    %0 = vector.load %arg1[%c0, %c0_0, %c0_1, %c0_2] : memref<1x18x18x16xf32, #tpu.memory_space<vmem>>, vector<1x18x18x16xf32>
    %c0_3 = arith.constant 0 : index
    %c0_4 = arith.constant 0 : index
    %1 = vector.load %arg8[%c0_3, %c0_4] : memref<16x16xf32, #tpu.memory_space<vmem>>, vector<16x16xf32>
    %2 = vector.extract_strided_slice %0 {offsets = [0, 1, 1, 0], sizes = [1, 16, 16, 16], strides = [1, 1, 1, 1]} : vector<1x18x18x16xf32> to vector<1x16x16x16xf32>
    %3 = vector.shape_cast %2 : vector<1x16x16x16xf32> to vector<1x256x16xf32>
    %c0_5 = arith.constant 0 : index
    %c0_6 = arith.constant 0 : index
    %4 = vector.load %arg2[%c0_5, %c0_6] : memref<144x16xbf16, #tpu.memory_space<vmem>>, vector<144x16xbf16>
    %5 = vector.extract_strided_slice %0 {offsets = [0, 0, 0, 0], sizes = [1, 16, 16, 16], strides = [1, 1, 1, 1]} : vector<1x18x18x16xf32> to vector<1x16x16x16xf32>
    %6 = vector.shape_cast %5 : vector<1x16x16x16xf32> to vector<256x16xf32>
    %7 = vector.extract_strided_slice %0 {offsets = [0, 0, 1, 0], sizes = [1, 16, 16, 16], strides = [1, 1, 1, 1]} : vector<1x18x18x16xf32> to vector<1x16x16x16xf32>
    %8 = vector.shape_cast %7 : vector<1x16x16x16xf32> to vector<256x16xf32>
    %9 = vector.extract_strided_slice %0 {offsets = [0, 0, 2, 0], sizes = [1, 16, 16, 16], strides = [1, 1, 1, 1]} : vector<1x18x18x16xf32> to vector<1x16x16x16xf32>
    %10 = vector.shape_cast %9 : vector<1x16x16x16xf32> to vector<256x16xf32>
    %11 = vector.extract_strided_slice %0 {offsets = [0, 1, 0, 0], sizes = [1, 16, 16, 16], strides = [1, 1, 1, 1]} : vector<1x18x18x16xf32> to vector<1x16x16x16xf32>
    %12 = vector.shape_cast %11 : vector<1x16x16x16xf32> to vector<256x16xf32>
    %13 = vector.extract_strided_slice %0 {offsets = [0, 1, 1, 0], sizes = [1, 16, 16, 16], strides = [1, 1, 1, 1]} : vector<1x18x18x16xf32> to vector<1x16x16x16xf32>
    %14 = vector.shape_cast %13 : vector<1x16x16x16xf32> to vector<256x16xf32>
    %15 = vector.extract_strided_slice %0 {offsets = [0, 1, 2, 0], sizes = [1, 16, 16, 16], strides = [1, 1, 1, 1]} : vector<1x18x18x16xf32> to vector<1x16x16x16xf32>
    %16 = vector.shape_cast %15 : vector<1x16x16x16xf32> to vector<256x16xf32>
    %17 = vector.extract_strided_slice %0 {offsets = [0, 2, 0, 0], sizes = [1, 16, 16, 16], strides = [1, 1, 1, 1]} : vector<1x18x18x16xf32> to vector<1x16x16x16xf32>
    %18 = vector.shape_cast %17 : vector<1x16x16x16xf32> to vector<256x16xf32>
    %19 = vector.extract_strided_slice %0 {offsets = [0, 2, 1, 0], sizes = [1, 16, 16, 16], strides = [1, 1, 1, 1]} : vector<1x18x18x16xf32> to vector<1x16x16x16xf32>
    %20 = vector.shape_cast %19 : vector<1x16x16x16xf32> to vector<256x16xf32>
    %21 = vector.extract_strided_slice %0 {offsets = [0, 2, 2, 0], sizes = [1, 16, 16, 16], strides = [1, 1, 1, 1]} : vector<1x18x18x16xf32> to vector<1x16x16x16xf32>
    %22 = vector.shape_cast %21 : vector<1x16x16x16xf32> to vector<256x16xf32>
    %23 = tpu.concatenate %6, %8, %10, %12, %14, %16, %18, %20, %22 in 1 : vector<256x16xf32>, vector<256x16xf32>, vector<256x16xf32>, vector<256x16xf32>, vector<256x16xf32>, vector<256x16xf32>, vector<256x16xf32>, vector<256x16xf32>, vector<256x16xf32> -> vector<256x144xf32>
    %24 = arith.truncf %23 : vector<256x144xf32> to vector<256x144xbf16>
    %cst = arith.constant dense<0.000000e+00> : vector<256x16xf32>
    %25 = tpu.matmul %24, %4, %cst {dimension_numbers = #tpu.dot_dimension_numbers<[1], [0], [0], [1], [0, 0, 1, 1], [], []>} : vector<256x144xbf16>, vector<144x16xbf16>, vector<256x16xf32> -> vector<256x16xf32>
    %26 = vector.shape_cast %25 : vector<256x16xf32> to vector<1x256x16xf32>
    %c0_7 = arith.constant 0 : index
    %c0_8 = arith.constant 0 : index
    %27 = vector.load %arg3[%c0_7, %c0_8] : memref<1x16xf32, #tpu.memory_space<vmem>>, vector<1x16xf32>
    %c0_9 = arith.constant 0 : index
    %c0_10 = arith.constant 0 : index
    %28 = vector.load %arg4[%c0_9, %c0_10] : memref<1x16xf32, #tpu.memory_space<vmem>>, vector<1x16xf32>
    %cst_11 = arith.constant dense<0.000000e+00> : vector<1x16xf32>
    %29 = vector.multi_reduction <add>, %26, %cst_11 [1] : vector<1x256x16xf32> to vector<1x16xf32>
    %30 = arith.mulf %26, %26 : vector<1x256x16xf32>
    %cst_12 = arith.constant dense<0.000000e+00> : vector<1x16xf32>
    %31 = vector.multi_reduction <add>, %30, %cst_12 [1] : vector<1x256x16xf32> to vector<1x16xf32>
    %32 = tpu.concatenate %29, %31 in 0 : vector<1x16xf32>, vector<1x16xf32> -> vector<2x16xf32>
    %cst_13 = arith.constant dense<0.000000e+00> : vector<2x16xf32>
    %33 = tpu.matmul %32, %1, %cst_13 {dimension_numbers = #tpu.dot_dimension_numbers<[1], [0], [0], [1], [0, 0, 1, 1], [], []>} : vector<2x16xf32>, vector<16x16xf32>, vector<2x16xf32> -> vector<2x16xf32>
    %34 = vector.extract_strided_slice %33 {offsets = [0, 0], sizes = [1, 16], strides = [1, 1]} : vector<2x16xf32> to vector<1x16xf32>
    %35 = vector.extract_strided_slice %33 {offsets = [1, 0], sizes = [1, 16], strides = [1, 1]} : vector<2x16xf32> to vector<1x16xf32>
    %36 = arith.mulf %34, %34 : vector<1x16xf32>
    %37 = arith.subf %35, %36 : vector<1x16xf32>
    %cst_14 = arith.constant 0.000000e+00 : f32
    %38 = vector.broadcast %cst_14 : f32 to vector<1x16xf32>
    %39 = arith.maximumf %37, %38 : vector<1x16xf32>
    %cst_15 = arith.constant 9.99999974E-6 : f32
    %40 = vector.broadcast %cst_15 : f32 to vector<1x16xf32>
    %41 = arith.addf %39, %40 : vector<1x16xf32>
    %42 = math.rsqrt %41 : vector<1x16xf32>
    %43 = arith.mulf %27, %42 : vector<1x16xf32>
    %44 = arith.mulf %34, %43 : vector<1x16xf32>
    %45 = arith.subf %28, %44 : vector<1x16xf32>
    %46 = vector.shape_cast %43 : vector<1x16xf32> to vector<1x1x16xf32>
    %47 = vector.shape_cast %45 : vector<1x16xf32> to vector<1x1x16xf32>
    %48 = vector.broadcast %46 : vector<1x1x16xf32> to vector<1x256x16xf32>
    %49 = arith.mulf %26, %48 : vector<1x256x16xf32>
    %50 = vector.broadcast %47 : vector<1x1x16xf32> to vector<1x256x16xf32>
    %51 = arith.addf %49, %50 : vector<1x256x16xf32>
    %cst_16 = arith.constant 0.000000e+00 : f32
    %52 = vector.broadcast %cst_16 : f32 to vector<1x256x16xf32>
    %53 = arith.cmpf ogt, %51, %52 : vector<1x256x16xf32>
    %cst_17 = arith.constant 0.00999999977 : f32
    %54 = vector.broadcast %cst_17 : f32 to vector<1x256x16xf32>
    %55 = arith.mulf %54, %51 : vector<1x256x16xf32>
    %56 = arith.select %53, %51, %55 : vector<1x256x16xi1>, vector<1x256x16xf32>
    %cst_18 = arith.constant 0.000000e+00 : f32
    %57 = vector.broadcast %cst_18 : f32 to vector<1x1x18x16xf32>
    %cst_19 = arith.constant 0.000000e+00 : f32
    %58 = vector.broadcast %cst_19 : f32 to vector<1x16x1x16xf32>
    %c0_20 = arith.constant 0 : index
    %c0_21 = arith.constant 0 : index
    %c0_22 = arith.constant 0 : index
    %c0_23 = arith.constant 0 : index
    %59 = vector.load %arg10[%c0_20, %c0_21, %c0_22, %c0_23] : memref<1x18x18x16xf32, #tpu.memory_space<vmem>>, vector<1x1x18x16xf32>
    tpu.vector_store %arg10[%c0_20, %c0_21, %c0_22, %c0_23], %57 {strides = array<i32>} : memref<1x18x18x16xf32, #tpu.memory_space<vmem>>, vector<1x1x18x16xf32>,
    %c0_24 = arith.constant 0 : index
    %c17 = arith.constant 17 : index
    %c0_25 = arith.constant 0 : index
    %c0_26 = arith.constant 0 : index
    %60 = vector.load %arg10[%c0_24, %c17, %c0_25, %c0_26] : memref<1x18x18x16xf32, #tpu.memory_space<vmem>>, vector<1x1x18x16xf32>
    tpu.vector_store %arg10[%c0_24, %c17, %c0_25, %c0_26], %57 {strides = array<i32>} : memref<1x18x18x16xf32, #tpu.memory_space<vmem>>, vector<1x1x18x16xf32>,
    %c0_27 = arith.constant 0 : index
    %c1 = arith.constant 1 : index
    %c0_28 = arith.constant 0 : index
    %c0_29 = arith.constant 0 : index
    %61 = vector.load %arg10[%c0_27, %c1, %c0_28, %c0_29] : memref<1x18x18x16xf32, #tpu.memory_space<vmem>>, vector<1x16x1x16xf32>
    tpu.vector_store %arg10[%c0_27, %c1, %c0_28, %c0_29], %58 {strides = array<i32>} : memref<1x18x18x16xf32, #tpu.memory_space<vmem>>, vector<1x16x1x16xf32>,
    %c0_30 = arith.constant 0 : index
    %c1_31 = arith.constant 1 : index
    %c17_32 = arith.constant 17 : index
    %c0_33 = arith.constant 0 : index
    %62 = vector.load %arg10[%c0_30, %c1_31, %c17_32, %c0_33] : memref<1x18x18x16xf32, #tpu.memory_space<vmem>>, vector<1x16x1x16xf32>
    tpu.vector_store %arg10[%c0_30, %c1_31, %c17_32, %c0_33], %58 {strides = array<i32>} : memref<1x18x18x16xf32, #tpu.memory_space<vmem>>, vector<1x16x1x16xf32>,
    %63 = vector.shape_cast %56 : vector<1x256x16xf32> to vector<1x16x16x16xf32>
    %c0_34 = arith.constant 0 : index
    %c1_35 = arith.constant 1 : index
    %c1_36 = arith.constant 1 : index
    %c0_37 = arith.constant 0 : index
    %64 = vector.load %arg10[%c0_34, %c1_35, %c1_36, %c0_37] : memref<1x18x18x16xf32, #tpu.memory_space<vmem>>, vector<1x16x16x16xf32>
    tpu.vector_store %arg10[%c0_34, %c1_35, %c1_36, %c0_37], %63 {strides = array<i32>} : memref<1x18x18x16xf32, #tpu.memory_space<vmem>>, vector<1x16x16x16xf32>,
    %c0_38 = arith.constant 0 : index
    %c0_39 = arith.constant 0 : index
    %c0_40 = arith.constant 0 : index
    %c0_41 = arith.constant 0 : index
    %65 = vector.load %arg10[%c0_38, %c0_39, %c0_40, %c0_41] : memref<1x18x18x16xf32, #tpu.memory_space<vmem>>, vector<1x18x18x16xf32>
    %c0_42 = arith.constant 0 : index
    %c0_43 = arith.constant 0 : index
    %66 = vector.load %arg5[%c0_42, %c0_43] : memref<144x16xbf16, #tpu.memory_space<vmem>>, vector<144x16xbf16>
    %67 = vector.extract_strided_slice %65 {offsets = [0, 0, 0, 0], sizes = [1, 16, 16, 16], strides = [1, 1, 1, 1]} : vector<1x18x18x16xf32> to vector<1x16x16x16xf32>
    %68 = vector.shape_cast %67 : vector<1x16x16x16xf32> to vector<256x16xf32>
    %69 = vector.extract_strided_slice %65 {offsets = [0, 0, 1, 0], sizes = [1, 16, 16, 16], strides = [1, 1, 1, 1]} : vector<1x18x18x16xf32> to vector<1x16x16x16xf32>
    %70 = vector.shape_cast %69 : vector<1x16x16x16xf32> to vector<256x16xf32>
    %71 = vector.extract_strided_slice %65 {offsets = [0, 0, 2, 0], sizes = [1, 16, 16, 16], strides = [1, 1, 1, 1]} : vector<1x18x18x16xf32> to vector<1x16x16x16xf32>
    %72 = vector.shape_cast %71 : vector<1x16x16x16xf32> to vector<256x16xf32>
    %73 = vector.extract_strided_slice %65 {offsets = [0, 1, 0, 0], sizes = [1, 16, 16, 16], strides = [1, 1, 1, 1]} : vector<1x18x18x16xf32> to vector<1x16x16x16xf32>
    %74 = vector.shape_cast %73 : vector<1x16x16x16xf32> to vector<256x16xf32>
    %75 = vector.extract_strided_slice %65 {offsets = [0, 1, 1, 0], sizes = [1, 16, 16, 16], strides = [1, 1, 1, 1]} : vector<1x18x18x16xf32> to vector<1x16x16x16xf32>
    %76 = vector.shape_cast %75 : vector<1x16x16x16xf32> to vector<256x16xf32>
    %77 = vector.extract_strided_slice %65 {offsets = [0, 1, 2, 0], sizes = [1, 16, 16, 16], strides = [1, 1, 1, 1]} : vector<1x18x18x16xf32> to vector<1x16x16x16xf32>
    %78 = vector.shape_cast %77 : vector<1x16x16x16xf32> to vector<256x16xf32>
    %79 = vector.extract_strided_slice %65 {offsets = [0, 2, 0, 0], sizes = [1, 16, 16, 16], strides = [1, 1, 1, 1]} : vector<1x18x18x16xf32> to vector<1x16x16x16xf32>
    %80 = vector.shape_cast %79 : vector<1x16x16x16xf32> to vector<256x16xf32>
    %81 = vector.extract_strided_slice %65 {offsets = [0, 2, 1, 0], sizes = [1, 16, 16, 16], strides = [1, 1, 1, 1]} : vector<1x18x18x16xf32> to vector<1x16x16x16xf32>
    %82 = vector.shape_cast %81 : vector<1x16x16x16xf32> to vector<256x16xf32>
    %83 = vector.extract_strided_slice %65 {offsets = [0, 2, 2, 0], sizes = [1, 16, 16, 16], strides = [1, 1, 1, 1]} : vector<1x18x18x16xf32> to vector<1x16x16x16xf32>
    %84 = vector.shape_cast %83 : vector<1x16x16x16xf32> to vector<256x16xf32>
    %85 = tpu.concatenate %68, %70, %72, %74, %76, %78, %80, %82, %84 in 1 : vector<256x16xf32>, vector<256x16xf32>, vector<256x16xf32>, vector<256x16xf32>, vector<256x16xf32>, vector<256x16xf32>, vector<256x16xf32>, vector<256x16xf32>, vector<256x16xf32> -> vector<256x144xf32>
    %86 = arith.truncf %85 : vector<256x144xf32> to vector<256x144xbf16>
    %cst_44 = arith.constant dense<0.000000e+00> : vector<256x16xf32>
    %87 = tpu.matmul %86, %66, %cst_44 {dimension_numbers = #tpu.dot_dimension_numbers<[1], [0], [0], [1], [0, 0, 1, 1], [], []>} : vector<256x144xbf16>, vector<144x16xbf16>, vector<256x16xf32> -> vector<256x16xf32>
    %88 = vector.shape_cast %87 : vector<256x16xf32> to vector<1x256x16xf32>
    %c0_45 = arith.constant 0 : index
    %c0_46 = arith.constant 0 : index
    %89 = vector.load %arg6[%c0_45, %c0_46] : memref<1x16xf32, #tpu.memory_space<vmem>>, vector<1x16xf32>
    %c0_47 = arith.constant 0 : index
    %c0_48 = arith.constant 0 : index
    %90 = vector.load %arg7[%c0_47, %c0_48] : memref<1x16xf32, #tpu.memory_space<vmem>>, vector<1x16xf32>
    %cst_49 = arith.constant dense<0.000000e+00> : vector<1x16xf32>
    %91 = vector.multi_reduction <add>, %88, %cst_49 [1] : vector<1x256x16xf32> to vector<1x16xf32>
    %92 = arith.mulf %88, %88 : vector<1x256x16xf32>
    %cst_50 = arith.constant dense<0.000000e+00> : vector<1x16xf32>
    %93 = vector.multi_reduction <add>, %92, %cst_50 [1] : vector<1x256x16xf32> to vector<1x16xf32>
    %94 = tpu.concatenate %91, %93 in 0 : vector<1x16xf32>, vector<1x16xf32> -> vector<2x16xf32>
    %cst_51 = arith.constant dense<0.000000e+00> : vector<2x16xf32>
    %95 = tpu.matmul %94, %1, %cst_51 {dimension_numbers = #tpu.dot_dimension_numbers<[1], [0], [0], [1], [0, 0, 1, 1], [], []>} : vector<2x16xf32>, vector<16x16xf32>, vector<2x16xf32> -> vector<2x16xf32>
    %96 = vector.extract_strided_slice %95 {offsets = [0, 0], sizes = [1, 16], strides = [1, 1]} : vector<2x16xf32> to vector<1x16xf32>
    %97 = vector.extract_strided_slice %95 {offsets = [1, 0], sizes = [1, 16], strides = [1, 1]} : vector<2x16xf32> to vector<1x16xf32>
    %98 = arith.mulf %96, %96 : vector<1x16xf32>
    %99 = arith.subf %97, %98 : vector<1x16xf32>
    %cst_52 = arith.constant 0.000000e+00 : f32
    %100 = vector.broadcast %cst_52 : f32 to vector<1x16xf32>
    %101 = arith.maximumf %99, %100 : vector<1x16xf32>
    %cst_53 = arith.constant 9.99999974E-6 : f32
    %102 = vector.broadcast %cst_53 : f32 to vector<1x16xf32>
    %103 = arith.addf %101, %102 : vector<1x16xf32>
    %104 = math.rsqrt %103 : vector<1x16xf32>
    %105 = arith.mulf %89, %104 : vector<1x16xf32>
    %106 = arith.mulf %96, %105 : vector<1x16xf32>
    %107 = arith.subf %90, %106 : vector<1x16xf32>
    %108 = vector.shape_cast %105 : vector<1x16xf32> to vector<1x1x16xf32>
    %109 = vector.shape_cast %107 : vector<1x16xf32> to vector<1x1x16xf32>
    %110 = vector.broadcast %108 : vector<1x1x16xf32> to vector<1x256x16xf32>
    %111 = arith.mulf %88, %110 : vector<1x256x16xf32>
    %112 = vector.broadcast %109 : vector<1x1x16xf32> to vector<1x256x16xf32>
    %113 = arith.addf %111, %112 : vector<1x256x16xf32>
    %114 = arith.addf %113, %3 : vector<1x256x16xf32>
    %cst_54 = arith.constant 0.000000e+00 : f32
    %115 = vector.broadcast %cst_54 : f32 to vector<1x256x16xf32>
    %116 = arith.cmpf ogt, %114, %115 : vector<1x256x16xf32>
    %cst_55 = arith.constant 0.00999999977 : f32
    %117 = vector.broadcast %cst_55 : f32 to vector<1x256x16xf32>
    %118 = arith.mulf %117, %114 : vector<1x256x16xf32>
    %119 = arith.select %116, %114, %118 : vector<1x256x16xi1>, vector<1x256x16xf32>
    %120 = tpu.transpose %119, [0, 2, 1] : vector<1x256x16xf32> -> vector<1x16x256xf32>
    %c0_56 = arith.constant 0 : index
    %c0_57 = arith.constant 0 : index
    %c0_58 = arith.constant 0 : index
    %121 = vector.load %arg9[%c0_56, %c0_57, %c0_58] : memref<1x16x256xf32, #tpu.memory_space<vmem>>, vector<1x16x256xf32>
    tpu.vector_store %arg9[%c0_56, %c0_57, %c0_58], %120 {strides = array<i32>} : memref<1x16x256xf32, #tpu.memory_space<vmem>>, vector<1x16x256xf32>,
    return
  }
  func.func @transform_0(%arg0: i32) -> (i32, i32, i32, i32) {
    %c0_i32 = arith.constant 0 : i32
    %c0_i32_0 = arith.constant 0 : i32
    %c0_i32_1 = arith.constant 0 : i32
    %c0_i32_2 = arith.constant 0 : i32
    return %arg0, %c0_i32, %c0_i32_0, %c0_i32_1 : i32, i32, i32, i32
  }
  func.func @transform_1(%arg0: i32) -> (i32, i32) {
    %c0_i32 = arith.constant 0 : i32
    %c0_i32_0 = arith.constant 0 : i32
    %c0_i32_1 = arith.constant 0 : i32
    return %c0_i32, %c0_i32_0 : i32, i32
  }
  func.func @transform_2(%arg0: i32) -> (i32, i32) {
    %c0_i32 = arith.constant 0 : i32
    %c0_i32_0 = arith.constant 0 : i32
    %c0_i32_1 = arith.constant 0 : i32
    return %c0_i32, %c0_i32_0 : i32, i32
  }
  func.func @transform_3(%arg0: i32) -> (i32, i32) {
    %c0_i32 = arith.constant 0 : i32
    %c0_i32_0 = arith.constant 0 : i32
    %c0_i32_1 = arith.constant 0 : i32
    return %c0_i32, %c0_i32_0 : i32, i32
  }
  func.func @transform_4(%arg0: i32) -> (i32, i32) {
    %c0_i32 = arith.constant 0 : i32
    %c0_i32_0 = arith.constant 0 : i32
    %c0_i32_1 = arith.constant 0 : i32
    return %c0_i32, %c0_i32_0 : i32, i32
  }
  func.func @transform_5(%arg0: i32) -> (i32, i32) {
    %c0_i32 = arith.constant 0 : i32
    %c0_i32_0 = arith.constant 0 : i32
    %c0_i32_1 = arith.constant 0 : i32
    return %c0_i32, %c0_i32_0 : i32, i32
  }
  func.func @transform_6(%arg0: i32) -> (i32, i32) {
    %c0_i32 = arith.constant 0 : i32
    %c0_i32_0 = arith.constant 0 : i32
    %c0_i32_1 = arith.constant 0 : i32
    return %c0_i32, %c0_i32_0 : i32, i32
  }
  func.func @transform_7(%arg0: i32) -> (i32, i32) {
    %c0_i32 = arith.constant 0 : i32
    %c0_i32_0 = arith.constant 0 : i32
    %c0_i32_1 = arith.constant 0 : i32
    return %c0_i32, %c0_i32_0 : i32, i32
  }
  func.func @transform_8(%arg0: i32) -> (i32, i32, i32) {
    %c0_i32 = arith.constant 0 : i32
    %c0_i32_0 = arith.constant 0 : i32
    %c0_i32_1 = arith.constant 0 : i32
    return %arg0, %c0_i32, %c0_i32_0 : i32, i32, i32
  }
}

</mosaic_0001>

<llo_original>
// kernel: tpu_custom_call.1
$region0: #{tpu_custom_call.1}
  #allocation0 [shape = 'u32[]', space=smem, size = 0x4, offset = 0x4, fixed_abs, tag = 'smem constant byte address 0x4 - core index']
  #allocation1 [shape = 'u32[144,128]{1,0:T(1,128)}', space=vmem, size = 0x12000, scoped, tag = 'internal scratch']
  #allocation2 [shape = 'f32[1,18,18,16]{3,2,1,0:T(8,128)}', space=vmem, size = 0x36000, scoped, tag = 'scratch operand']
  %s0 = inlined_call_operand.vmem [shape: f32[2,18,18,16], index: 0, kind: input, shape index: {}]
  %s1 = inlined_call_operand.vmem [shape: bf16[144,16], index: 1, kind: input, shape index: {}]
  %s2 = inlined_call_operand.vmem [shape: f32[1,16], index: 2, kind: input, shape index: {}]
  %s3 = inlined_call_operand.vmem [shape: f32[1,16], index: 3, kind: input, shape index: {}]
  %s4 = inlined_call_operand.vmem [shape: bf16[144,16], index: 4, kind: input, shape index: {}]
  %s5 = inlined_call_operand.vmem [shape: f32[1,16], index: 5, kind: input, shape index: {}]
  %s6 = inlined_call_operand.vmem [shape: f32[1,16], index: 6, kind: input, shape index: {}]
  %s7 = inlined_call_operand.vmem [shape: f32[16,16], index: 7, kind: input, shape index: {}]
  %s8 = inlined_call_operand.hbm [shape: f32[2,16,256], index: 8, kind: output, shape index: {}]
  %s9 = sld [smem:[#allocation0]]
  $region65: #{tpu_custom_call.1} parent=0
    _
  %s11 = ssub.s32 1, %s9
  %s12 = scalar_select 0, %s11, %s9
  $region1: #{tpu_custom_call.1} parent=0
    #allocation3 [shape = 'u8[32768]{0}', space=vmem, size = 0x8000, scoped, tag = 'output window, operand 0']
    #allocation4 [shape = 's32[2]{0}', space=sflag, size = 0x8, scoped, tag = 'scoped memory for tpu_custom_call.1']
    %13 = vsyncpa [#allocation4], 0
    %s14 = scalar_lea.sflag [#allocation4], 1
    %15 = vsyncpa %s14, 0
    loop: start=0, step=1, limit=4
    $region2: #{tpu_custom_call.1} parent=1 // loop_pre_header
      _
    $region3: #{tpu_custom_call.1} parent=1 // loop_header
      %s17 = sphi 0, %s21
      %p18 = scmp.ge.s32.totalorder %s17, 4
      %s27 = sphi 0, %s29
      %s30 = sphi 0, %s27
      %s31 = sphi 0, %s30
      %s47 = sphi 0, %s31
      %s51 = sphi 0, %s51
      %s53 = sphi 0, %s51
      %s54 = sphi 0, %s53
      %s68 = sphi 0, %s54
      %s72 = sphi 0, %s72
      %s74 = sphi 0, %s72
      %s75 = sphi 0, %s74
      %s89 = sphi 0, %s75
      %s93 = sphi 0, %s93
      %s95 = sphi 0, %s93
      %s96 = sphi 0, %s95
      %s110 = sphi 0, %s96
      %s114 = sphi 0, %s114
      %s116 = sphi 0, %s114
      %s117 = sphi 0, %s116
      %s131 = sphi 0, %s117
      %s135 = sphi 0, %s135
      %s137 = sphi 0, %s135
      %s138 = sphi 0, %s137
      %s152 = sphi 0, %s138
      %s156 = sphi 0, %s156
      %s158 = sphi 0, %s156
      %s159 = sphi 0, %s158
      %s173 = sphi 0, %s159
      %s177 = sphi 0, %s177
      %s179 = sphi 0, %s177
      %s180 = sphi 0, %s179
      %s194 = sphi 0, %s180
      %s200 = sphi 0, %s202
      %s203 = sphi 0, %s200
      %s204 = sphi 0, %s203
      %s220 = sphi 0, %s204
    $region4: #{tpu_custom_call.1} parent=1 // loop_header_branch
      %20 = sbr.rel (%p18) target = $region8
    $region5: #{tpu_custom_call.1} parent=1 // loop_body
      %s22 = ssub.s32 %s17, 1
      %s23 = ssub.s32 %s17, 2
      %s24 = sadd.s32 %s17, 1
      %s25 = ssub.s32 %s17, %s24
      %p26 = scmp.eq.s32.totalorder %s25, 0
      %s28 = sadd.s32 %s27, 1
      %s29 = scalar_select %p26, %s27, %s28
      %p32 = pneg %p26
      %p33 = scmp.eq.s32.totalorder %s17, 1
      %p34 = por %p32, %p33
      %p35 = scmp.ne.s32.totalorder %s27, %s30
      %p36 = scmp.eq.s32.totalorder %s17, 0
      %p37 = por %p35, %p36
      %p38 = scmp.ne.s32.totalorder %s27, %s30
      %p39 = scmp.eq.s32.totalorder %s22, 1
      %p40 = por %p38, %p39
      %p41 = scmp.ne.s32.totalorder %s30, %s31
      %p42 = scmp.eq.s32.totalorder %s22, 0
      %p43 = por %p41, %p42
      %p44 = scmp.ne.s32.totalorder %s30, %s31
      %p45 = scmp.eq.s32.totalorder %s23, 1
      %p46 = por %p44, %p45
      %p48 = scmp.ne.s32.totalorder %s31, %s47
      %p49 = scmp.eq.s32.totalorder %s23, 0
      %p50 = por %p48, %p49
      %s52 = sadd.s32 %s51, 1
      %p55 = scmp.eq.s32.totalorder %s17, 1
      %p56 = scmp.ne.s32.totalorder %s51, %s53
      %p57 = scmp.eq.s32.totalorder %s17, 0
      %p58 = por %p56, %p57
      %p59 = scmp.ne.s32.totalorder %s51, %s53
      %p60 = scmp.eq.s32.totalorder %s22, 1
      %p61 = por %p59, %p60
      %p62 = scmp.ne.s32.totalorder %s53, %s54
      %p63 = scmp.eq.s32.totalorder %s22, 0
      %p64 = por %p62, %p63
      %p65 = scmp.ne.s32.totalorder %s53, %s54
      %p66 = scmp.eq.s32.totalorder %s23, 1
      %p67 = por %p65, %p66
      %p69 = scmp.ne.s32.totalorder %s54, %s68
      %p70 = scmp.eq.s32.totalorder %s23, 0
      %p71 = por %p69, %p70
      %s73 = sadd.s32 %s72, 1
      %p76 = scmp.eq.s32.totalorder %s17, 1
      %p77 = scmp.ne.s32.totalorder %s72, %s74
      %p78 = scmp.eq.s32.totalorder %s17, 0
      %p79 = por %p77, %p78
      %p80 = scmp.ne.s32.totalorder %s72, %s74
      %p81 = scmp.eq.s32.totalorder %s22, 1
      %p82 = por %p80, %p81
      %p83 = scmp.ne.s32.totalorder %s74, %s75
      %p84 = scmp.eq.s32.totalorder %s22, 0
      %p85 = por %p83, %p84
      %p86 = scmp.ne.s32.totalorder %s74, %s75
      %p87 = scmp.eq.s32.totalorder %s23, 1
      %p88 = por %p86, %p87
      %p90 = scmp.ne.s32.totalorder %s75, %s89
      %p91 = scmp.eq.s32.totalorder %s23, 0
      %p92 = por %p90, %p91
      %s94 = sadd.s32 %s93, 1
      %p97 = scmp.eq.s32.totalorder %s17, 1
      %p98 = scmp.ne.s32.totalorder %s93, %s95
      %p99 = scmp.eq.s32.totalorder %s17, 0
      %p100 = por %p98, %p99
      %p101 = scmp.ne.s32.totalorder %s93, %s95
      %p102 = scmp.eq.s32.totalorder %s22, 1
      %p103 = por %p101, %p102
      %p104 = scmp.ne.s32.totalorder %s95, %s96
      %p105 = scmp.eq.s32.totalorder %s22, 0
      %p106 = por %p104, %p105
      %p107 = scmp.ne.s32.totalorder %s95, %s96
      %p108 = scmp.eq.s32.totalorder %s23, 1
      %p109 = por %p107, %p108
      %p111 = scmp.ne.s32.totalorder %s96, %s110
      %p112 = scmp.eq.s32.totalorder %s23, 0
      %p113 = por %p111, %p112
      %s115 = sadd.s32 %s114, 1
      %p118 = scmp.eq.s32.totalorder %s17, 1
      %p119 = scmp.ne.s32.totalorder %s114, %s116
      %p120 = scmp.eq.s32.totalorder %s17, 0
      %p121 = por %p119, %p120
      %p122 = scmp.ne.s32.totalorder %s114, %s116
      %p123 = scmp.eq.s32.totalorder %s22, 1
      %p124 = por %p122, %p123
      %p125 = scmp.ne.s32.totalorder %s116, %s117
      %p126 = scmp.eq.s32.totalorder %s22, 0
      %p127 = por %p125, %p126
      %p128 = scmp.ne.s32.totalorder %s116, %s117
      %p129 = scmp.eq.s32.totalorder %s23, 1
      %p130 = por %p128, %p129
      %p132 = scmp.ne.s32.totalorder %s117, %s131
      %p133 = scmp.eq.s32.totalorder %s23, 0
      %p134 = por %p132, %p133
      %s136 = sadd.s32 %s135, 1
      %p139 = scmp.eq.s32.totalorder %s17, 1
      %p140 = scmp.ne.s32.totalorder %s135, %s137
      %p141 = scmp.eq.s32.totalorder %s17, 0
      %p142 = por %p140, %p141
      %p143 = scmp.ne.s32.totalorder %s135, %s137
      %p144 = scmp.eq.s32.totalorder %s22, 1
      %p145 = por %p143, %p144
      %p146 = scmp.ne.s32.totalorder %s137, %s138
      %p147 = scmp.eq.s32.totalorder %s22, 0
      %p148 = por %p146, %p147
      %p149 = scmp.ne.s32.totalorder %s137, %s138
      %p150 = scmp.eq.s32.totalorder %s23, 1
      %p151 = por %p149, %p150
      %p153 = scmp.ne.s32.totalorder %s138, %s152
      %p154 = scmp.eq.s32.totalorder %s23, 0
      %p155 = por %p153, %p154
      %s157 = sadd.s32 %s156, 1
      %p160 = scmp.eq.s32.totalorder %s17, 1
      %p161 = scmp.ne.s32.totalorder %s156, %s158
      %p162 = scmp.eq.s32.totalorder %s17, 0
      %p163 = por %p161, %p162
      %p164 = scmp.ne.s32.totalorder %s156, %s158
      %p165 = scmp.eq.s32.totalorder %s22, 1
      %p166 = por %p164, %p165
      %p167 = scmp.ne.s32.totalorder %s158, %s159
      %p168 = scmp.eq.s32.totalorder %s22, 0
      %p169 = por %p167, %p168
      %p170 = scmp.ne.s32.totalorder %s158, %s159
      %p171 = scmp.eq.s32.totalorder %s23, 1
      %p172 = por %p170, %p171
      %p174 = scmp.ne.s32.totalorder %s159, %s173
      %p175 = scmp.eq.s32.totalorder %s23, 0
      %p176 = por %p174, %p175
      %s178 = sadd.s32 %s177, 1
      %p181 = scmp.eq.s32.totalorder %s17, 1
      %p182 = scmp.ne.s32.totalorder %s177, %s179
      %p183 = scmp.eq.s32.totalorder %s17, 0
      %p184 = por %p182, %p183
      %p185 = scmp.ne.s32.totalorder %s177, %s179
      %p186 = scmp.eq.s32.totalorder %s22, 1
      %p187 = por %p185, %p186
      %p188 = scmp.ne.s32.totalorder %s179, %s180
      %p189 = scmp.eq.s32.totalorder %s22, 0
      %p190 = por %p188, %p189
      %p191 = scmp.ne.s32.totalorder %s179, %s180
      %p192 = scmp.eq.s32.totalorder %s23, 1
      %p193 = por %p191, %p192
      %p195 = scmp.ne.s32.totalorder %s180, %s194
      %p196 = scmp.eq.s32.totalorder %s23, 0
      %p197 = por %p195, %p196
      %s198 = ssub.s32 %s17, %s24
      %p199 = scmp.eq.s32.totalorder %s198, 0
      %s201 = sadd.s32 %s200, 1
      %s202 = scalar_select %p199, %s200, %s201
      %p205 = pneg %p199
      %p206 = scmp.eq.s32.totalorder %s17, 1
      %p207 = por %p205, %p206
      %p208 = scmp.ne.s32.totalorder %s200, %s203
      %p209 = scmp.eq.s32.totalorder %s17, 0
      %p210 = por %p208, %p209
      %p211 = scmp.ne.s32.totalorder %s200, %s203
      %p212 = scmp.eq.s32.totalorder %s22, 1
      %p213 = por %p211, %p212
      %p214 = scmp.ne.s32.totalorder %s203, %s204
      %p215 = scmp.eq.s32.totalorder %s22, 0
      %p216 = por %p214, %p215
      %p217 = scmp.ne.s32.totalorder %s203, %s204
      %p218 = scmp.eq.s32.totalorder %s23, 1
      %p219 = por %p217, %p218
      %p221 = scmp.ne.s32.totalorder %s204, %s220
      %p222 = scmp.eq.s32.totalorder %s23, 0
      %p223 = por %p221, %p222
      %p224 = scmp.le.s32.totalorder 1, %s17
      %p225 = scmp.lt.s32.totalorder %s17, 3
      %p226 = pnand %p224, %p225
      %p227 = pneg %p226
      // Predicated region
      $region9: #{tpu_custom_call.1} parent=5 // pred_check
        _
      $region10: #{tpu_custom_call.1} parent=5 // pred_check_branch
        %229 = sbr.rel (%p226) target = $region12
      $region11: #{tpu_custom_call.1} parent=5 // pred_region
        %s230 = ssub.s32 %s17, 1
        // Predicated region
        $region13: #{tpu_custom_call.1} parent=11 // pred_check
          %p231 = pneg %p64
        $region14: #{tpu_custom_call.1} parent=11 // pred_check_branch
          %233 = sbr.rel (%p231) target = $region16
        $region15: #{tpu_custom_call.1} parent=11 // pred_region
          _
        $region16: #{tpu_custom_call.1} parent=11 // pred_fallthru
          _
        // Predicated region
        $region17: #{tpu_custom_call.1} parent=11 // pred_check
          %p234 = pneg %p85
        $region18: #{tpu_custom_call.1} parent=11 // pred_check_branch
          %236 = sbr.rel (%p234) target = $region20
        $region19: #{tpu_custom_call.1} parent=11 // pred_region
          _
        $region20: #{tpu_custom_call.1} parent=11 // pred_fallthru
          _
        // Predicated region
        $region21: #{tpu_custom_call.1} parent=11 // pred_check
          %p237 = pneg %p106
        $region22: #{tpu_custom_call.1} parent=11 // pred_check_branch
          %239 = sbr.rel (%p237) target = $region24
        $region23: #{tpu_custom_call.1} parent=11 // pred_region
          _
        $region24: #{tpu_custom_call.1} parent=11 // pred_fallthru
          _
        // Predicated region
        $region25: #{tpu_custom_call.1} parent=11 // pred_check
          %p240 = pneg %p127
        $region26: #{tpu_custom_call.1} parent=11 // pred_check_branch
          %242 = sbr.rel (%p240) target = $region28
        $region27: #{tpu_custom_call.1} parent=11 // pred_region
          _
        $region28: #{tpu_custom_call.1} parent=11 // pred_fallthru
          _
        // Predicated region
        $region29: #{tpu_custom_call.1} parent=11 // pred_check
          %p243 = pneg %p148
        $region30: #{tpu_custom_call.1} parent=11 // pred_check_branch
          %245 = sbr.rel (%p243) target = $region32
        $region31: #{tpu_custom_call.1} parent=11 // pred_region
          _
        $region32: #{tpu_custom_call.1} parent=11 // pred_fallthru
          _
        // Predicated region
        $region33: #{tpu_custom_call.1} parent=11 // pred_check
          %p246 = pneg %p169
        $region34: #{tpu_custom_call.1} parent=11 // pred_check_branch
          %248 = sbr.rel (%p246) target = $region36
        $region35: #{tpu_custom_call.1} parent=11 // pred_region
          _
        $region36: #{tpu_custom_call.1} parent=11 // pred_fallthru
          _
        // Predicated region
        $region37: #{tpu_custom_call.1} parent=11 // pred_check
          %p249 = pneg %p190
        $region38: #{tpu_custom_call.1} parent=11 // pred_check_branch
          %251 = sbr.rel (%p249) target = $region40
        $region39: #{tpu_custom_call.1} parent=11 // pred_region
          _
        $region40: #{tpu_custom_call.1} parent=11 // pred_fallthru
          _
      $region12: #{tpu_custom_call.1} parent=5 // pred_fallthru
        _
      %p252 = scmp.lt.s32.totalorder %s17, 2
      // Predicated region
      $region41: #{tpu_custom_call.1} parent=5 // pred_check
        %p253 = pneg %p252
      $region42: #{tpu_custom_call.1} parent=5 // pred_check_branch
        %255 = sbr.rel (%p253) target = $region44
      $region43: #{tpu_custom_call.1} parent=5 // pred_region
        // Predicated region
        $region45: #{tpu_custom_call.1} parent=43 // pred_check
          %p256 = pneg %p37
        $region46: #{tpu_custom_call.1} parent=43 // pred_check_branch
          %258 = sbr.rel (%p256) target = $region48
        $region47: #{tpu_custom_call.1} parent=43 // pred_region
          %p259 = scmp.lt.s32.totalorder %s17, 1
          %s260 = scalar_select %p259, %s17, 1
          %s261 = smul.addr %s260, 54
          %s262 = smul.addr %s261, 8
          %s263 = scalar_lea.vmem %s0, %s262
        $region48: #{tpu_custom_call.1} parent=43 // pred_fallthru
          _
      $region44: #{tpu_custom_call.1} parent=5 // pred_fallthru
        _
      %p264 = scmp.le.s32.totalorder 1, %s17
      %p265 = scmp.lt.s32.totalorder %s17, 3
      %p266 = pnand %p264, %p265
      %p267 = pneg %p266
      // Predicated region
      $region49: #{tpu_custom_call.1} parent=5 // pred_check
        _
      $region50: #{tpu_custom_call.1} parent=5 // pred_check_branch
        %269 = sbr.rel (%p266) target = $region52
      $region51: #{tpu_custom_call.1} parent=5 // pred_region
        %s270 = ssub.s32 %s17, 1
        %p271 = scmp.lt.s32.totalorder %s22, 1
        %s272 = scalar_select %p271, %s22, 1
        %s273 = smul.addr %s272, 54
        %s274 = smul.addr %s273, 8
        %s275 = scalar_lea.vmem %s0, %s274
        %p276 = pneg %p43
        %p277 = pneg %p40
        %p278 = pneg %p64
        %p279 = pneg %p61
        %p280 = pneg %p85
        %p281 = pneg %p82
        %p282 = pneg %p106
        %p283 = pneg %p103
        %p284 = pneg %p127
        %p285 = pneg %p124
        %p286 = pneg %p148
        %p287 = pneg %p145
        %p288 = pneg %p169
        %p289 = pneg %p166
        %p290 = pneg %p190
        %p291 = pneg %p187
        %p292 = pneg %p216
        %p293 = pneg %p213
        %s294 = sand.u32 %s203, 1
        %s295 = scalar_lea.sflag [#allocation4], %s294
        %s296 = sand.u32 %s203, 1
        %s297 = smul.addr %s296, 32
        %s298 = scalar_lea.vmem [#allocation3], %s297
        %p299 = scmp.lt.s32.totalorder %s22, 1
        %s300 = scalar_select %p299, %s22, 1
        %s301 = smul.addr %s300, 54
        %s302 = smul.addr %s301, 8
        %s303 = scalar_lea.vmem %s0, %s302
        %v305 = vld [vmem:[%s303] sm:$0xff]
        %v306 = vld [vmem:[%s303 + $0x8] sm:$0xff]
        %v307 = vld [vmem:[%s303 + $0x10] sm:$0x3]
        %v308 = vld [vmem:[%s303 + $0x18] sm:$0xff]
        %v309 = vld [vmem:[%s303 + $0x20] sm:$0xff]
        %v310 = vld [vmem:[%s303 + $0x28] sm:$0x3]
        %v311 = vld [vmem:[%s303 + $0x30] sm:$0xff]
        %v312 = vld [vmem:[%s303 + $0x38] sm:$0xff]
        %v313 = vld [vmem:[%s303 + $0x40] sm:$0x3]
        %v314 = vld [vmem:[%s303 + $0x48] sm:$0xff]
        %v315 = vld [vmem:[%s303 + $0x50] sm:$0xff]
        %v316 = vld [vmem:[%s303 + $0x58] sm:$0x3]
        %v317 = vld [vmem:[%s303 + $0x60] sm:$0xff]
        %v318 = vld [vmem:[%s303 + $0x68] sm:$0xff]
        %v319 = vld [vmem:[%s303 + $0x70] sm:$0x3]
        %v320 = vld [vmem:[%s303 + $0x78] sm:$0xff]
        %v321 = vld [vmem:[%s303 + $0x80] sm:$0xff]
        %v322 = vld [vmem:[%s303 + $0x88] sm:$0x3]
        %v323 = vld [vmem:[%s303 + $0x90] sm:$0xff]
        %v324 = vld [vmem:[%s303 + $0x98] sm:$0xff]
        %v325 = vld [vmem:[%s303 + $0xa0] sm:$0x3]
        %v326 = vld [vmem:[%s303 + $0xa8] sm:$0xff]
        %v327 = vld [vmem:[%s303 + $0xb0] sm:$0xff]
        %v328 = vld [vmem:[%s303 + $0xb8] sm:$0x3]
        %v329 = vld [vmem:[%s303 + $0xc0] sm:$0xff]
        %v330 = vld [vmem:[%s303 + $0xc8] sm:$0xff]
        %v331 = vld [vmem:[%s303 + $0xd0] sm:$0x3]
        %v332 = vld [vmem:[%s303 + $0xd8] sm:$0xff]
        %v333 = vld [vmem:[%s303 + $0xe0] sm:$0xff]
        %v334 = vld [vmem:[%s303 + $0xe8] sm:$0x3]
        %v335 = vld [vmem:[%s303 + $0xf0] sm:$0xff]
        %v336 = vld [vmem:[%s303 + $0xf8] sm:$0xff]
        %v337 = vld [vmem:[%s303 + $0x100] sm:$0x3]
        %v338 = vld [vmem:[%s303 + $0x108] sm:$0xff]
        %v339 = vld [vmem:[%s303 + $0x110] sm:$0xff]
        %v340 = vld [vmem:[%s303 + $0x118] sm:$0x3]
        %v341 = vld [vmem:[%s303 + $0x120] sm:$0xff]
        %v342 = vld [vmem:[%s303 + $0x128] sm:$0xff]
        %v343 = vld [vmem:[%s303 + $0x130] sm:$0x3]
        %v344 = vld [vmem:[%s303 + $0x138] sm:$0xff]
        %v345 = vld [vmem:[%s303 + $0x140] sm:$0xff]
        %v346 = vld [vmem:[%s303 + $0x148] sm:$0x3]
        %v347 = vld [vmem:[%s303 + $0x150] sm:$0xff]
        %v348 = vld [vmem:[%s303 + $0x158] sm:$0xff]
        %v349 = vld [vmem:[%s303 + $0x160] sm:$0x3]
        %v350 = vld [vmem:[%s303 + $0x168] sm:$0xff]
        %v351 = vld [vmem:[%s303 + $0x170] sm:$0xff]
        %v352 = vld [vmem:[%s303 + $0x178] sm:$0x3]
        %v353 = vld [vmem:[%s303 + $0x180] sm:$0xff]
        %v354 = vld [vmem:[%s303 + $0x188] sm:$0xff]
        %v355 = vld [vmem:[%s303 + $0x190] sm:$0x3]
        %v356 = vld [vmem:[%s303 + $0x198] sm:$0xff]
        %v357 = vld [vmem:[%s303 + $0x1a0] sm:$0xff]
        %v358 = vld [vmem:[%s303 + $0x1a8] sm:$0x3]
        %v359 = vld [vmem:[%s7] sm:$0xff]
        %v360 = vld [vmem:[%s7 + $0x8] sm:$0xff]
        %vm409 = vcmask 1046528
        %v410 = vrot.slane %v308, 1
        %v411 = vrot.slane %v309, 1
        %v412 = vsel %vm409, %v410, %v411
        %v413 = vrot.slane %v310, 1
        %v414 = vsel %vm409, %v411, %v413
        %v415 = vrot.slane %v311, 1
        %v416 = vrot.slane %v312, 1
        %v417 = vsel %vm409, %v415, %v416
        %v418 = vrot.slane %v313, 1
        %v419 = vsel %vm409, %v416, %v418
        %v420 = vrot.slane %v314, 1
        %v421 = vrot.slane %v315, 1
        %v422 = vsel %vm409, %v420, %v421
        %v423 = vrot.slane %v316, 1
        %v424 = vsel %vm409, %v421, %v423
        %v425 = vrot.slane %v317, 1
        %v426 = vrot.slane %v318, 1
        %v427 = vsel %vm409, %v425, %v426
        %v428 = vrot.slane %v319, 1
        %v429 = vsel %vm409, %v426, %v428
        %v430 = vrot.slane %v320, 1
        %v431 = vrot.slane %v321, 1
        %v432 = vsel %vm409, %v430, %v431
        %v433 = vrot.slane %v322, 1
        %v434 = vsel %vm409, %v431, %v433
        %v435 = vrot.slane %v323, 1
        %v436 = vrot.slane %v324, 1
        %v437 = vsel %vm409, %v435, %v436
        %v438 = vrot.slane %v325, 1
        %v439 = vsel %vm409, %v436, %v438
        %v440 = vrot.slane %v326, 1
        %v441 = vrot.slane %v327, 1
        %v442 = vsel %vm409, %v440, %v441
        %v443 = vrot.slane %v328, 1
        %v444 = vsel %vm409, %v441, %v443
        %v445 = vrot.slane %v329, 1
        %v446 = vrot.slane %v330, 1
        %v447 = vsel %vm409, %v445, %v446
        %v448 = vrot.slane %v331, 1
        %v449 = vsel %vm409, %v446, %v448
        %v450 = vrot.slane %v332, 1
        %v451 = vrot.slane %v333, 1
        %v452 = vsel %vm409, %v450, %v451
        %v453 = vrot.slane %v334, 1
        %v454 = vsel %vm409, %v451, %v453
        %v455 = vrot.slane %v335, 1
        %v456 = vrot.slane %v336, 1
        %v457 = vsel %vm409, %v455, %v456
        %v458 = vrot.slane %v337, 1
        %v459 = vsel %vm409, %v456, %v458
        %v460 = vrot.slane %v338, 1
        %v461 = vrot.slane %v339, 1
        %v462 = vsel %vm409, %v460, %v461
        %v463 = vrot.slane %v340, 1
        %v464 = vsel %vm409, %v461, %v463
        %v465 = vrot.slane %v341, 1
        %v466 = vrot.slane %v342, 1
        %v467 = vsel %vm409, %v465, %v466
        %v468 = vrot.slane %v343, 1
        %v469 = vsel %vm409, %v466, %v468
        %v470 = vrot.slane %v344, 1
        %v471 = vrot.slane %v345, 1
        %v472 = vsel %vm409, %v470, %v471
        %v473 = vrot.slane %v346, 1
        %v474 = vsel %vm409, %v471, %v473
        %v475 = vrot.slane %v347, 1
        %v476 = vrot.slane %v348, 1
        %v477 = vsel %vm409, %v475, %v476
        %v478 = vrot.slane %v349, 1
        %v479 = vsel %vm409, %v476, %v478
        %v480 = vrot.slane %v350, 1
        %v481 = vrot.slane %v351, 1
        %v482 = vsel %vm409, %v480, %v481
        %v483 = vrot.slane %v352, 1
        %v484 = vsel %vm409, %v481, %v483
        %v485 = vrot.slane %v353, 1
        %v486 = vrot.slane %v354, 1
        %v487 = vsel %vm409, %v485, %v486
        %v488 = vrot.slane %v355, 1
        %v489 = vsel %vm409, %v486, %v488
        %v522 = vld [vmem:[%s1] sm:$0xf]
        %v523 = vld [vmem:[%s1 + $0x4] sm:$0xf]
        %v524 = vld [vmem:[%s1 + $0x8] sm:$0xf]
        %v525 = vld [vmem:[%s1 + $0xc] sm:$0xf]
        %v526 = vld [vmem:[%s1 + $0x10] sm:$0xf]
        %v527 = vld [vmem:[%s1 + $0x14] sm:$0xf]
        %v528 = vld [vmem:[%s1 + $0x18] sm:$0xf]
        %v529 = vld [vmem:[%s1 + $0x1c] sm:$0xf]
        %v530 = vld [vmem:[%s1 + $0x20] sm:$0xf]
        %v531 = vld [vmem:[%s1 + $0x24] sm:$0xf]
        %v532 = vld [vmem:[%s1 + $0x28] sm:$0xf]
        %v533 = vld [vmem:[%s1 + $0x2c] sm:$0xf]
        %v534 = vld [vmem:[%s1 + $0x30] sm:$0xf]
        %v535 = vld [vmem:[%s1 + $0x34] sm:$0xf]
        %v536 = vld [vmem:[%s1 + $0x38] sm:$0xf]
        %v537 = vld [vmem:[%s1 + $0x3c] sm:$0xf]
        %v538 = vld [vmem:[%s1 + $0x40] sm:$0xf]
        %v539 = vld [vmem:[%s1 + $0x44] sm:$0xf]
        %v543 = vrot.slane %v305, 1
        %v544 = vrot.slane %v306, 1
        %v545 = vsel %vm409, %v543, %v544
        %v546 = vrot.slane %v307, 1
        %v547 = vsel %vm409, %v544, %v546
        %vm548 = vcmask 1045504
        %v549 = vrot.slane %v305, 2
        %v550 = vrot.slane %v306, 2
        %v551 = vsel %vm548, %v549, %v550
        %v552 = vrot.slane %v307, 2
        %v553 = vsel %vm548, %v550, %v552
        %v554 = vrot.slane %v308, 2
        %v555 = vrot.slane %v309, 2
        %v556 = vsel %vm548, %v554, %v555
        %v557 = vrot.slane %v310, 2
        %v558 = vsel %vm548, %v555, %v557
        %v559 = vrot.slane %v311, 2
        %v560 = vrot.slane %v312, 2
        %v561 = vsel %vm548, %v559, %v560
        %v562 = vrot.slane %v313, 2
        %v563 = vsel %vm548, %v560, %v562
        %v564 = vrot.slane %v314, 2
        %v565 = vrot.slane %v315, 2
        %v566 = vsel %vm548, %v564, %v565
        %v567 = vrot.slane %v316, 2
        %v568 = vsel %vm548, %v565, %v567
        %v569 = vrot.slane %v317, 2
        %v570 = vrot.slane %v318, 2
        %v571 = vsel %vm548, %v569, %v570
        %v572 = vrot.slane %v319, 2
        %v573 = vsel %vm548, %v570, %v572
        %v574 = vrot.slane %v320, 2
        %v575 = vrot.slane %v321, 2
        %v576 = vsel %vm548, %v574, %v575
        %v577 = vrot.slane %v322, 2
        %v578 = vsel %vm548, %v575, %v577
        %v579 = vrot.slane %v323, 2
        %v580 = vrot.slane %v324, 2
        %v581 = vsel %vm548, %v579, %v580
        %v582 = vrot.slane %v325, 2
        %v583 = vsel %vm548, %v580, %v582
        %v584 = vrot.slane %v326, 2
        %v585 = vrot.slane %v327, 2
        %v586 = vsel %vm548, %v584, %v585
        %v587 = vrot.slane %v328, 2
        %v588 = vsel %vm548, %v585, %v587
        %v589 = vrot.slane %v329, 2
        %v590 = vrot.slane %v330, 2
        %v591 = vsel %vm548, %v589, %v590
        %v592 = vrot.slane %v331, 2
        %v593 = vsel %vm548, %v590, %v592
        %v594 = vrot.slane %v332, 2
        %v595 = vrot.slane %v333, 2
        %v596 = vsel %vm548, %v594, %v595
        %v597 = vrot.slane %v334, 2
        %v598 = vsel %vm548, %v595, %v597
        %v599 = vrot.slane %v335, 2
        %v600 = vrot.slane %v336, 2
        %v601 = vsel %vm548, %v599, %v600
        %v602 = vrot.slane %v337, 2
        %v603 = vsel %vm548, %v600, %v602
        %v604 = vrot.slane %v338, 2
        %v605 = vrot.slane %v339, 2
        %v606 = vsel %vm548, %v604, %v605
        %v607 = vrot.slane %v340, 2
        %v608 = vsel %vm548, %v605, %v607
        %v609 = vrot.slane %v341, 2
        %v610 = vrot.slane %v342, 2
        %v611 = vsel %vm548, %v609, %v610
        %v612 = vrot.slane %v343, 2
        %v613 = vsel %vm548, %v610, %v612
        %v614 = vrot.slane %v344, 2
        %v615 = vrot.slane %v345, 2
        %v616 = vsel %vm548, %v614, %v615
        %v617 = vrot.slane %v346, 2
        %v618 = vsel %vm548, %v615, %v617
        %v619 = vrot.slane %v347, 2
        %v620 = vrot.slane %v348, 2
        %v621 = vsel %vm548, %v619, %v620
        %v622 = vrot.slane %v349, 2
        %v623 = vsel %vm548, %v620, %v622
        %v624 = vrot.slane %v350, 2
        %v625 = vrot.slane %v351, 2
        %v626 = vsel %vm548, %v624, %v625
        %v627 = vrot.slane %v352, 2
        %v628 = vsel %vm548, %v625, %v627
        %v629 = vrot.slane %v353, 2
        %v630 = vrot.slane %v354, 2
        %v631 = vsel %vm548, %v629, %v630
        %v632 = vrot.slane %v355, 2
        %v633 = vsel %vm548, %v630, %v632
        %v637 = vrot.slane %v356, 1
        %v638 = vrot.slane %v357, 1
        %v639 = vsel %vm409, %v637, %v638
        %v640 = vrot.slane %v358, 1
        %v641 = vsel %vm409, %v638, %v640
        %v642 = vrot.slane %v356, 2
        %v643 = vrot.slane %v357, 2
        %v644 = vsel %vm548, %v642, %v643
        %v645 = vrot.slane %v358, 2
        %v646 = vsel %vm548, %v643, %v645
        %679 = vrot.lane.b32.xlu0 %v545, 16
        %v680 = vpop.permute.xlu0 %679
        %681 = vrot.lane.b32.xlu0 %v547, 16
        %v682 = vpop.permute.xlu0 %681
        %683 = vrot.lane.b32.xlu0 %v412, 16
        %v684 = vpop.permute.xlu0 %683
        %685 = vrot.lane.b32.xlu0 %v414, 16
        %v686 = vpop.permute.xlu0 %685
        %687 = vrot.lane.b32.xlu0 %v417, 16
        %v688 = vpop.permute.xlu0 %687
        %689 = vrot.lane.b32.xlu0 %v419, 16
        %v690 = vpop.permute.xlu0 %689
        %691 = vrot.lane.b32.xlu0 %v422, 16
        %v692 = vpop.permute.xlu0 %691
        %693 = vrot.lane.b32.xlu0 %v424, 16
        %v694 = vpop.permute.xlu0 %693
        %695 = vrot.lane.b32.xlu0 %v427, 16
        %v696 = vpop.permute.xlu0 %695
        %697 = vrot.lane.b32.xlu0 %v429, 16
        %v698 = vpop.permute.xlu0 %697
        %699 = vrot.lane.b32.xlu0 %v432, 16
        %v700 = vpop.permute.xlu0 %699
        %701 = vrot.lane.b32.xlu0 %v434, 16
        %v702 = vpop.permute.xlu0 %701
        %703 = vrot.lane.b32.xlu0 %v437, 16
        %v704 = vpop.permute.xlu0 %703
        %705 = vrot.lane.b32.xlu0 %v439, 16
        %v706 = vpop.permute.xlu0 %705
        %707 = vrot.lane.b32.xlu0 %v442, 16
        %v708 = vpop.permute.xlu0 %707
        %709 = vrot.lane.b32.xlu0 %v444, 16
        %v710 = vpop.permute.xlu0 %709
        %711 = vrot.lane.b32.xlu0 %v447, 16
        %v712 = vpop.permute.xlu0 %711
        %713 = vrot.lane.b32.xlu0 %v449, 16
        %v714 = vpop.permute.xlu0 %713
        %715 = vrot.lane.b32.xlu0 %v452, 16
        %v716 = vpop.permute.xlu0 %715
        %717 = vrot.lane.b32.xlu0 %v454, 16
        %v718 = vpop.permute.xlu0 %717
        %719 = vrot.lane.b32.xlu0 %v457, 16
        %v720 = vpop.permute.xlu0 %719
        %721 = vrot.lane.b32.xlu0 %v459, 16
        %v722 = vpop.permute.xlu0 %721
        %723 = vrot.lane.b32.xlu0 %v462, 16
        %v724 = vpop.permute.xlu0 %723
        %725 = vrot.lane.b32.xlu0 %v464, 16
        %v726 = vpop.permute.xlu0 %725
        %727 = vrot.lane.b32.xlu0 %v467, 16
        %v728 = vpop.permute.xlu0 %727
        %729 = vrot.lane.b32.xlu0 %v469, 16
        %v730 = vpop.permute.xlu0 %729
        %731 = vrot.lane.b32.xlu0 %v472, 16
        %v732 = vpop.permute.xlu0 %731
        %733 = vrot.lane.b32.xlu0 %v474, 16
        %v734 = vpop.permute.xlu0 %733
        %735 = vrot.lane.b32.xlu0 %v477, 16
        %v736 = vpop.permute.xlu0 %735
        %737 = vrot.lane.b32.xlu0 %v479, 16
        %v738 = vpop.permute.xlu0 %737
        %739 = vrot.lane.b32.xlu0 %v482, 16
        %v740 = vpop.permute.xlu0 %739
        %741 = vrot.lane.b32.xlu0 %v484, 16
        %v742 = vpop.permute.xlu0 %741
        %775 = vrot.lane.b32.xlu0 %v551, 32
        %v776 = vpop.permute.xlu0 %775
        %777 = vrot.lane.b32.xlu0 %v553, 32
        %v778 = vpop.permute.xlu0 %777
        %779 = vrot.lane.b32.xlu0 %v556, 32
        %v780 = vpop.permute.xlu0 %779
        %781 = vrot.lane.b32.xlu0 %v558, 32
        %v782 = vpop.permute.xlu0 %781
        %783 = vrot.lane.b32.xlu0 %v561, 32
        %v784 = vpop.permute.xlu0 %783
        %785 = vrot.lane.b32.xlu0 %v563, 32
        %v786 = vpop.permute.xlu0 %785
        %787 = vrot.lane.b32.xlu0 %v566, 32
        %v788 = vpop.permute.xlu0 %787
        %789 = vrot.lane.b32.xlu0 %v568, 32
        %v790 = vpop.permute.xlu0 %789
        %791 = vrot.lane.b32.xlu0 %v571, 32
        %v792 = vpop.permute.xlu0 %791
        %793 = vrot.lane.b32.xlu0 %v573, 32
        %v794 = vpop.permute.xlu0 %793
        %795 = vrot.lane.b32.xlu0 %v576, 32
        %v796 = vpop.permute.xlu0 %795
        %797 = vrot.lane.b32.xlu0 %v578, 32
        %v798 = vpop.permute.xlu0 %797
        %799 = vrot.lane.b32.xlu0 %v581, 32
        %v800 = vpop.permute.xlu0 %799
        %801 = vrot.lane.b32.xlu0 %v583, 32
        %v802 = vpop.permute.xlu0 %801
        %803 = vrot.lane.b32.xlu0 %v586, 32
        %v804 = vpop.permute.xlu0 %803
        %805 = vrot.lane.b32.xlu0 %v588, 32
        %v806 = vpop.permute.xlu0 %805
        %807 = vrot.lane.b32.xlu0 %v591, 32
        %v808 = vpop.permute.xlu0 %807
        %809 = vrot.lane.b32.xlu0 %v593, 32
        %v810 = vpop.permute.xlu0 %809
        %811 = vrot.lane.b32.xlu0 %v596, 32
        %v812 = vpop.permute.xlu0 %811
        %813 = vrot.lane.b32.xlu0 %v598, 32
        %v814 = vpop.permute.xlu0 %813
        %815 = vrot.lane.b32.xlu0 %v601, 32
        %v816 = vpop.permute.xlu0 %815
        %817 = vrot.lane.b32.xlu0 %v603, 32
        %v818 = vpop.permute.xlu0 %817
        %819 = vrot.lane.b32.xlu0 %v606, 32
        %v820 = vpop.permute.xlu0 %819
        %821 = vrot.lane.b32.xlu0 %v608, 32
        %v822 = vpop.permute.xlu0 %821
        %823 = vrot.lane.b32.xlu0 %v611, 32
        %v824 = vpop.permute.xlu0 %823
        %825 = vrot.lane.b32.xlu0 %v613, 32
        %v826 = vpop.permute.xlu0 %825
        %827 = vrot.lane.b32.xlu0 %v616, 32
        %v828 = vpop.permute.xlu0 %827
        %829 = vrot.lane.b32.xlu0 %v618, 32
        %v830 = vpop.permute.xlu0 %829
        %831 = vrot.lane.b32.xlu0 %v621, 32
        %v832 = vpop.permute.xlu0 %831
        %833 = vrot.lane.b32.xlu0 %v623, 32
        %v834 = vpop.permute.xlu0 %833
        %835 = vrot.lane.b32.xlu0 %v626, 32
        %v836 = vpop.permute.xlu0 %835
        %837 = vrot.lane.b32.xlu0 %v628, 32
        %v838 = vpop.permute.xlu0 %837
        %871 = vrot.lane.b32.xlu0 %v308, 48
        %v872 = vpop.permute.xlu0 %871
        %873 = vrot.lane.b32.xlu0 %v309, 48
        %v874 = vpop.permute.xlu0 %873
        %875 = vrot.lane.b32.xlu0 %v311, 48
        %v876 = vpop.permute.xlu0 %875
        %877 = vrot.lane.b32.xlu0 %v312, 48
        %v878 = vpop.permute.xlu0 %877
        %879 = vrot.lane.b32.xlu0 %v314, 48
        %v880 = vpop.permute.xlu0 %879
        %881 = vrot.lane.b32.xlu0 %v315, 48
        %v882 = vpop.permute.xlu0 %881
        %883 = vrot.lane.b32.xlu0 %v317, 48
        %v884 = vpop.permute.xlu0 %883
        %885 = vrot.lane.b32.xlu0 %v318, 48
        %v886 = vpop.permute.xlu0 %885
        %887 = vrot.lane.b32.xlu0 %v320, 48
        %v888 = vpop.permute.xlu0 %887
        %889 = vrot.lane.b32.xlu0 %v321, 48
        %v890 = vpop.permute.xlu0 %889
        %891 = vrot.lane.b32.xlu0 %v323, 48
        %v892 = vpop.permute.xlu0 %891
        %893 = vrot.lane.b32.xlu0 %v324, 48
        %v894 = vpop.permute.xlu0 %893
        %895 = vrot.lane.b32.xlu0 %v326, 48
        %v896 = vpop.permute.xlu0 %895
        %897 = vrot.lane.b32.xlu0 %v327, 48
        %v898 = vpop.permute.xlu0 %897
        %899 = vrot.lane.b32.xlu0 %v329, 48
        %v900 = vpop.permute.xlu0 %899
        %901 = vrot.lane.b32.xlu0 %v330, 48
        %v902 = vpop.permute.xlu0 %901
        %903 = vrot.lane.b32.xlu0 %v332, 48
        %v904 = vpop.permute.xlu0 %903
        %905 = vrot.lane.b32.xlu0 %v333, 48
        %v906 = vpop.permute.xlu0 %905
        %907 = vrot.lane.b32.xlu0 %v335, 48
        %v908 = vpop.permute.xlu0 %907
        %909 = vrot.lane.b32.xlu0 %v336, 48
        %v910 = vpop.permute.xlu0 %909
        %911 = vrot.lane.b32.xlu0 %v338, 48
        %v912 = vpop.permute.xlu0 %911
        %913 = vrot.lane.b32.xlu0 %v339, 48
        %v914 = vpop.permute.xlu0 %913
        %915 = vrot.lane.b32.xlu0 %v341, 48
        %v916 = vpop.permute.xlu0 %915
        %917 = vrot.lane.b32.xlu0 %v342, 48
        %v918 = vpop.permute.xlu0 %917
        %919 = vrot.lane.b32.xlu0 %v344, 48
        %v920 = vpop.permute.xlu0 %919
        %921 = vrot.lane.b32.xlu0 %v345, 48
        %v922 = vpop.permute.xlu0 %921
        %923 = vrot.lane.b32.xlu0 %v347, 48
        %v924 = vpop.permute.xlu0 %923
        %925 = vrot.lane.b32.xlu0 %v348, 48
        %v926 = vpop.permute.xlu0 %925
        %927 = vrot.lane.b32.xlu0 %v350, 48
        %v928 = vpop.permute.xlu0 %927
        %929 = vrot.lane.b32.xlu0 %v351, 48
        %v930 = vpop.permute.xlu0 %929
        %931 = vrot.lane.b32.xlu0 %v353, 48
        %v932 = vpop.permute.xlu0 %931
        %933 = vrot.lane.b32.xlu0 %v354, 48
        %v934 = vpop.permute.xlu0 %933
        %967 = vrot.lane.b32.xlu0 %v412, 64
        %v968 = vpop.permute.xlu0 %967
        %969 = vrot.lane.b32.xlu0 %v414, 64
        %v970 = vpop.permute.xlu0 %969
        %971 = vrot.lane.b32.xlu0 %v417, 64
        %v972 = vpop.permute.xlu0 %971
        %973 = vrot.lane.b32.xlu0 %v419, 64
        %v974 = vpop.permute.xlu0 %973
        %975 = vrot.lane.b32.xlu0 %v422, 64
        %v976 = vpop.permute.xlu0 %975
        %977 = vrot.lane.b32.xlu0 %v424, 64
        %v978 = vpop.permute.xlu0 %977
        %979 = vrot.lane.b32.xlu0 %v427, 64
        %v980 = vpop.permute.xlu0 %979
        %981 = vrot.lane.b32.xlu0 %v429, 64
        %v982 = vpop.permute.xlu0 %981
        %983 = vrot.lane.b32.xlu0 %v432, 64
        %v984 = vpop.permute.xlu0 %983
        %985 = vrot.lane.b32.xlu0 %v434, 64
        %v986 = vpop.permute.xlu0 %985
        %987 = vrot.lane.b32.xlu0 %v437, 64
        %v988 = vpop.permute.xlu0 %987
        %989 = vrot.lane.b32.xlu0 %v439, 64
        %v990 = vpop.permute.xlu0 %989
        %991 = vrot.lane.b32.xlu0 %v442, 64
        %v992 = vpop.permute.xlu0 %991
        %993 = vrot.lane.b32.xlu0 %v444, 64
        %v994 = vpop.permute.xlu0 %993
        %995 = vrot.lane.b32.xlu0 %v447, 64
        %v996 = vpop.permute.xlu0 %995
        %997 = vrot.lane.b32.xlu0 %v449, 64
        %v998 = vpop.permute.xlu0 %997
        %999 = vrot.lane.b32.xlu0 %v452, 64
        %v1000 = vpop.permute.xlu0 %999
        %1001 = vrot.lane.b32.xlu0 %v454, 64
        %v1002 = vpop.permute.xlu0 %1001
        %1003 = vrot.lane.b32.xlu0 %v457, 64
        %v1004 = vpop.permute.xlu0 %1003
        %1005 = vrot.lane.b32.xlu0 %v459, 64
        %v1006 = vpop.permute.xlu0 %1005
        %1007 = vrot.lane.b32.xlu0 %v462, 64
        %v1008 = vpop.permute.xlu0 %1007
        %1009 = vrot.lane.b32.xlu0 %v464, 64
        %v1010 = vpop.permute.xlu0 %1009
        %1011 = vrot.lane.b32.xlu0 %v467, 64
        %v1012 = vpop.permute.xlu0 %1011
        %1013 = vrot.lane.b32.xlu0 %v469, 64
        %v1014 = vpop.permute.xlu0 %1013
        %1015 = vrot.lane.b32.xlu0 %v472, 64
        %v1016 = vpop.permute.xlu0 %1015
        %1017 = vrot.lane.b32.xlu0 %v474, 64
        %v1018 = vpop.permute.xlu0 %1017
        %1019 = vrot.lane.b32.xlu0 %v477, 64
        %v1020 = vpop.permute.xlu0 %1019
        %1021 = vrot.lane.b32.xlu0 %v479, 64
        %v1022 = vpop.permute.xlu0 %1021
        %1023 = vrot.lane.b32.xlu0 %v482, 64
        %v1024 = vpop.permute.xlu0 %1023
        %1025 = vrot.lane.b32.xlu0 %v484, 64
        %v1026 = vpop.permute.xlu0 %1025
        %1027 = vrot.lane.b32.xlu0 %v487, 64
        %v1028 = vpop.permute.xlu0 %1027
        %1029 = vrot.lane.b32.xlu0 %v489, 64
        %v1030 = vpop.permute.xlu0 %1029
        %1063 = vrot.lane.b32.xlu0 %v556, 80
        %v1064 = vpop.permute.xlu0 %1063
        %1065 = vrot.lane.b32.xlu0 %v558, 80
        %v1066 = vpop.permute.xlu0 %1065
        %1067 = vrot.lane.b32.xlu0 %v561, 80
        %v1068 = vpop.permute.xlu0 %1067
        %1069 = vrot.lane.b32.xlu0 %v563, 80
        %v1070 = vpop.permute.xlu0 %1069
        %1071 = vrot.lane.b32.xlu0 %v566, 80
        %v1072 = vpop.permute.xlu0 %1071
        %1073 = vrot.lane.b32.xlu0 %v568, 80
        %v1074 = vpop.permute.xlu0 %1073
        %1075 = vrot.lane.b32.xlu0 %v571, 80
        %v1076 = vpop.permute.xlu0 %1075
        %1077 = vrot.lane.b32.xlu0 %v573, 80
        %v1078 = vpop.permute.xlu0 %1077
        %1079 = vrot.lane.b32.xlu0 %v576, 80
        %v1080 = vpop.permute.xlu0 %1079
        %1081 = vrot.lane.b32.xlu0 %v578, 80
        %v1082 = vpop.permute.xlu0 %1081
        %1083 = vrot.lane.b32.xlu0 %v581, 80
        %v1084 = vpop.permute.xlu0 %1083
        %1085 = vrot.lane.b32.xlu0 %v583, 80
        %v1086 = vpop.permute.xlu0 %1085
        %1087 = vrot.lane.b32.xlu0 %v586, 80
        %v1088 = vpop.permute.xlu0 %1087
        %1089 = vrot.lane.b32.xlu0 %v588, 80
        %v1090 = vpop.permute.xlu0 %1089
        %1091 = vrot.lane.b32.xlu0 %v591, 80
        %v1092 = vpop.permute.xlu0 %1091
        %1093 = vrot.lane.b32.xlu0 %v593, 80
        %v1094 = vpop.permute.xlu0 %1093
        %1095 = vrot.lane.b32.xlu0 %v596, 80
        %v1096 = vpop.permute.xlu0 %1095
        %1097 = vrot.lane.b32.xlu0 %v598, 80
        %v1098 = vpop.permute.xlu0 %1097
        %1099 = vrot.lane.b32.xlu0 %v601, 80
        %v1100 = vpop.permute.xlu0 %1099
        %1101 = vrot.lane.b32.xlu0 %v603, 80
        %v1102 = vpop.permute.xlu0 %1101
        %1103 = vrot.lane.b32.xlu0 %v606, 80
        %v1104 = vpop.permute.xlu0 %1103
        %1105 = vrot.lane.b32.xlu0 %v608, 80
        %v1106 = vpop.permute.xlu0 %1105
        %1107 = vrot.lane.b32.xlu0 %v611, 80
        %v1108 = vpop.permute.xlu0 %1107
        %1109 = vrot.lane.b32.xlu0 %v613, 80
        %v1110 = vpop.permute.xlu0 %1109
        %1111 = vrot.lane.b32.xlu0 %v616, 80
        %v1112 = vpop.permute.xlu0 %1111
        %1113 = vrot.lane.b32.xlu0 %v618, 80
        %v1114 = vpop.permute.xlu0 %1113
        %1115 = vrot.lane.b32.xlu0 %v621, 80
        %v1116 = vpop.permute.xlu0 %1115
        %1117 = vrot.lane.b32.xlu0 %v623, 80
        %v1118 = vpop.permute.xlu0 %1117
        %1119 = vrot.lane.b32.xlu0 %v626, 80
        %v1120 = vpop.permute.xlu0 %1119
        %1121 = vrot.lane.b32.xlu0 %v628, 80
        %v1122 = vpop.permute.xlu0 %1121
        %1123 = vrot.lane.b32.xlu0 %v631, 80
        %v1124 = vpop.permute.xlu0 %1123
        %1125 = vrot.lane.b32.xlu0 %v633, 80
        %v1126 = vpop.permute.xlu0 %1125
        %1159 = vrot.lane.b32.xlu0 %v311, 96
        %v1160 = vpop.permute.xlu0 %1159
        %1161 = vrot.lane.b32.xlu0 %v312, 96
        %v1162 = vpop.permute.xlu0 %1161
        %1163 = vrot.lane.b32.xlu0 %v314, 96
        %v1164 = vpop.permute.xlu0 %1163
        %1165 = vrot.lane.b32.xlu0 %v315, 96
        %v1166 = vpop.permute.xlu0 %1165
        %1167 = vrot.lane.b32.xlu0 %v317, 96
        %v1168 = vpop.permute.xlu0 %1167
        %1169 = vrot.lane.b32.xlu0 %v318, 96
        %v1170 = vpop.permute.xlu0 %1169
        %1171 = vrot.lane.b32.xlu0 %v320, 96
        %v1172 = vpop.permute.xlu0 %1171
        %1173 = vrot.lane.b32.xlu0 %v321, 96
        %v1174 = vpop.permute.xlu0 %1173
        %1175 = vrot.lane.b32.xlu0 %v323, 96
        %v1176 = vpop.permute.xlu0 %1175
        %1177 = vrot.lane.b32.xlu0 %v324, 96
        %v1178 = vpop.permute.xlu0 %1177
        %1179 = vrot.lane.b32.xlu0 %v326, 96
        %v1180 = vpop.permute.xlu0 %1179
        %1181 = vrot.lane.b32.xlu0 %v327, 96
        %v1182 = vpop.permute.xlu0 %1181
        %1183 = vrot.lane.b32.xlu0 %v329, 96
        %v1184 = vpop.permute.xlu0 %1183
        %1185 = vrot.lane.b32.xlu0 %v330, 96
        %v1186 = vpop.permute.xlu0 %1185
        %1187 = vrot.lane.b32.xlu0 %v332, 96
        %v1188 = vpop.permute.xlu0 %1187
        %1189 = vrot.lane.b32.xlu0 %v333, 96
        %v1190 = vpop.permute.xlu0 %1189
        %1191 = vrot.lane.b32.xlu0 %v335, 96
        %v1192 = vpop.permute.xlu0 %1191
        %1193 = vrot.lane.b32.xlu0 %v336, 96
        %v1194 = vpop.permute.xlu0 %1193
        %1195 = vrot.lane.b32.xlu0 %v338, 96
        %v1196 = vpop.permute.xlu0 %1195
        %1197 = vrot.lane.b32.xlu0 %v339, 96
        %v1198 = vpop.permute.xlu0 %1197
        %1199 = vrot.lane.b32.xlu0 %v341, 96
        %v1200 = vpop.permute.xlu0 %1199
        %1201 = vrot.lane.b32.xlu0 %v342, 96
        %v1202 = vpop.permute.xlu0 %1201
        %1203 = vrot.lane.b32.xlu0 %v344, 96
        %v1204 = vpop.permute.xlu0 %1203
        %1205 = vrot.lane.b32.xlu0 %v345, 96
        %v1206 = vpop.permute.xlu0 %1205
        %1207 = vrot.lane.b32.xlu0 %v347, 96
        %v1208 = vpop.permute.xlu0 %1207
        %1209 = vrot.lane.b32.xlu0 %v348, 96
        %v1210 = vpop.permute.xlu0 %1209
        %1211 = vrot.lane.b32.xlu0 %v350, 96
        %v1212 = vpop.permute.xlu0 %1211
        %1213 = vrot.lane.b32.xlu0 %v351, 96
        %v1214 = vpop.permute.xlu0 %1213
        %1215 = vrot.lane.b32.xlu0 %v353, 96
        %v1216 = vpop.permute.xlu0 %1215
        %1217 = vrot.lane.b32.xlu0 %v354, 96
        %v1218 = vpop.permute.xlu0 %1217
        %1219 = vrot.lane.b32.xlu0 %v356, 96
        %v1220 = vpop.permute.xlu0 %1219
        %1221 = vrot.lane.b32.xlu0 %v357, 96
        %v1222 = vpop.permute.xlu0 %1221
        %1255 = vrot.lane.b32.xlu0 %v417, 112
        %v1256 = vpop.permute.xlu0 %1255
        %1257 = vrot.lane.b32.xlu0 %v419, 112
        %v1258 = vpop.permute.xlu0 %1257
        %1259 = vrot.lane.b32.xlu0 %v422, 112
        %v1260 = vpop.permute.xlu0 %1259
        %1261 = vrot.lane.b32.xlu0 %v424, 112
        %v1262 = vpop.permute.xlu0 %1261
        %1263 = vrot.lane.b32.xlu0 %v427, 112
        %v1264 = vpop.permute.xlu0 %1263
        %1265 = vrot.lane.b32.xlu0 %v429, 112
        %v1266 = vpop.permute.xlu0 %1265
        %1267 = vrot.lane.b32.xlu0 %v432, 112
        %v1268 = vpop.permute.xlu0 %1267
        %1269 = vrot.lane.b32.xlu0 %v434, 112
        %v1270 = vpop.permute.xlu0 %1269
        %1271 = vrot.lane.b32.xlu0 %v437, 112
        %v1272 = vpop.permute.xlu0 %1271
        %1273 = vrot.lane.b32.xlu0 %v439, 112
        %v1274 = vpop.permute.xlu0 %1273
        %1275 = vrot.lane.b32.xlu0 %v442, 112
        %v1276 = vpop.permute.xlu0 %1275
        %1277 = vrot.lane.b32.xlu0 %v444, 112
        %v1278 = vpop.permute.xlu0 %1277
        %1279 = vrot.lane.b32.xlu0 %v447, 112
        %v1280 = vpop.permute.xlu0 %1279
        %1281 = vrot.lane.b32.xlu0 %v449, 112
        %v1282 = vpop.permute.xlu0 %1281
        %1283 = vrot.lane.b32.xlu0 %v452, 112
        %v1284 = vpop.permute.xlu0 %1283
        %1285 = vrot.lane.b32.xlu0 %v454, 112
        %v1286 = vpop.permute.xlu0 %1285
        %1287 = vrot.lane.b32.xlu0 %v457, 112
        %v1288 = vpop.permute.xlu0 %1287
        %1289 = vrot.lane.b32.xlu0 %v459, 112
        %v1290 = vpop.permute.xlu0 %1289
        %1291 = vrot.lane.b32.xlu0 %v462, 112
        %v1292 = vpop.permute.xlu0 %1291
        %1293 = vrot.lane.b32.xlu0 %v464, 112
        %v1294 = vpop.permute.xlu0 %1293
        %1295 = vrot.lane.b32.xlu0 %v467, 112
        %v1296 = vpop.permute.xlu0 %1295
        %1297 = vrot.lane.b32.xlu0 %v469, 112
        %v1298 = vpop.permute.xlu0 %1297
        %1299 = vrot.lane.b32.xlu0 %v472, 112
        %v1300 = vpop.permute.xlu0 %1299
        %1301 = vrot.lane.b32.xlu0 %v474, 112
        %v1302 = vpop.permute.xlu0 %1301
        %1303 = vrot.lane.b32.xlu0 %v477, 112
        %v1304 = vpop.permute.xlu0 %1303
        %1305 = vrot.lane.b32.xlu0 %v479, 112
        %v1306 = vpop.permute.xlu0 %1305
        %1307 = vrot.lane.b32.xlu0 %v482, 112
        %v1308 = vpop.permute.xlu0 %1307
        %1309 = vrot.lane.b32.xlu0 %v484, 112
        %v1310 = vpop.permute.xlu0 %1309
        %1311 = vrot.lane.b32.xlu0 %v487, 112
        %v1312 = vpop.permute.xlu0 %1311
        %1313 = vrot.lane.b32.xlu0 %v489, 112
        %v1314 = vpop.permute.xlu0 %1313
        %1315 = vrot.lane.b32.xlu0 %v639, 112
        %v1316 = vpop.permute.xlu0 %1315
        %1317 = vrot.lane.b32.xlu0 %v641, 112
        %v1318 = vpop.permute.xlu0 %1317
        %vm1351 = vcmask 130048
        %v1352 = vsel %vm1351, %v305, %v680
        %v1353 = vsel %vm1351, %v306, %v682
        %v1354 = vsel %vm1351, %v308, %v684
        %v1355 = vsel %vm1351, %v309, %v686
        %v1356 = vsel %vm1351, %v311, %v688
        %v1357 = vsel %vm1351, %v312, %v690
        %v1358 = vsel %vm1351, %v314, %v692
        %v1359 = vsel %vm1351, %v315, %v694
        %v1360 = vsel %vm1351, %v317, %v696
        %v1361 = vsel %vm1351, %v318, %v698
        %v1362 = vsel %vm1351, %v320, %v700
        %v1363 = vsel %vm1351, %v321, %v702
        %v1364 = vsel %vm1351, %v323, %v704
        %v1365 = vsel %vm1351, %v324, %v706
        %v1366 = vsel %vm1351, %v326, %v708
        %v1367 = vsel %vm1351, %v327, %v710
        %v1368 = vsel %vm1351, %v329, %v712
        %v1369 = vsel %vm1351, %v330, %v714
        %v1370 = vsel %vm1351, %v332, %v716
        %v1371 = vsel %vm1351, %v333, %v718
        %v1372 = vsel %vm1351, %v335, %v720
        %v1373 = vsel %vm1351, %v336, %v722
        %v1374 = vsel %vm1351, %v338, %v724
        %v1375 = vsel %vm1351, %v339, %v726
        %v1376 = vsel %vm1351, %v341, %v728
        %v1377 = vsel %vm1351, %v342, %v730
        %v1378 = vsel %vm1351, %v344, %v732
        %v1379 = vsel %vm1351, %v345, %v734
        %v1380 = vsel %vm1351, %v347, %v736
        %v1381 = vsel %vm1351, %v348, %v738
        %v1382 = vsel %vm1351, %v350, %v740
        %v1383 = vsel %vm1351, %v351, %v742
        %vm1384 = vcmask 261120
        %v1385 = vsel %vm1384, %v1352, %v776
        %v1386 = vsel %vm1384, %v1353, %v778
        %v1387 = vsel %vm1384, %v1354, %v780
        %v1388 = vsel %vm1384, %v1355, %v782
        %v1389 = vsel %vm1384, %v1356, %v784
        %v1390 = vsel %vm1384, %v1357, %v786
        %v1391 = vsel %vm1384, %v1358, %v788
        %v1392 = vsel %vm1384, %v1359, %v790
        %v1393 = vsel %vm1384, %v1360, %v792
        %v1394 = vsel %vm1384, %v1361, %v794
        %v1395 = vsel %vm1384, %v1362, %v796
        %v1396 = vsel %vm1384, %v1363, %v798
        %v1397 = vsel %vm1384, %v1364, %v800
        %v1398 = vsel %vm1384, %v1365, %v802
        %v1399 = vsel %vm1384, %v1366, %v804
        %v1400 = vsel %vm1384, %v1367, %v806
        %v1401 = vsel %vm1384, %v1368, %v808
        %v1402 = vsel %vm1384, %v1369, %v810
        %v1403 = vsel %vm1384, %v1370, %v812
        %v1404 = vsel %vm1384, %v1371, %v814
        %v1405 = vsel %vm1384, %v1372, %v816
        %v1406 = vsel %vm1384, %v1373, %v818
        %v1407 = vsel %vm1384, %v1374, %v820
        %v1408 = vsel %vm1384, %v1375, %v822
        %v1409 = vsel %vm1384, %v1376, %v824
        %v1410 = vsel %vm1384, %v1377, %v826
        %v1411 = vsel %vm1384, %v1378, %v828
        %v1412 = vsel %vm1384, %v1379, %v830
        %v1413 = vsel %vm1384, %v1380, %v832
        %v1414 = vsel %vm1384, %v1381, %v834
        %v1415 = vsel %vm1384, %v1382, %v836
        %v1416 = vsel %vm1384, %v1383, %v838
        %vm1417 = vcmask 392192
        %v1418 = vsel %vm1417, %v1385, %v872
        %v1419 = vsel %vm1417, %v1386, %v874
        %v1420 = vsel %vm1417, %v1387, %v876
        %v1421 = vsel %vm1417, %v1388, %v878
        %v1422 = vsel %vm1417, %v1389, %v880
        %v1423 = vsel %vm1417, %v1390, %v882
        %v1424 = vsel %vm1417, %v1391, %v884
        %v1425 = vsel %vm1417, %v1392, %v886
        %v1426 = vsel %vm1417, %v1393, %v888
        %v1427 = vsel %vm1417, %v1394, %v890
        %v1428 = vsel %vm1417, %v1395, %v892
        %v1429 = vsel %vm1417, %v1396, %v894
        %v1430 = vsel %vm1417, %v1397, %v896
        %v1431 = vsel %vm1417, %v1398, %v898
        %v1432 = vsel %vm1417, %v1399, %v900
        %v1433 = vsel %vm1417, %v1400, %v902
        %v1434 = vsel %vm1417, %v1401, %v904
        %v1435 = vsel %vm1417, %v1402, %v906
        %v1436 = vsel %vm1417, %v1403, %v908
        %v1437 = vsel %vm1417, %v1404, %v910
        %v1438 = vsel %vm1417, %v1405, %v912
        %v1439 = vsel %vm1417, %v1406, %v914
        %v1440 = vsel %vm1417, %v1407, %v916
        %v1441 = vsel %vm1417, %v1408, %v918
        %v1442 = vsel %vm1417, %v1409, %v920
        %v1443 = vsel %vm1417, %v1410, %v922
        %v1444 = vsel %vm1417, %v1411, %v924
        %v1445 = vsel %vm1417, %v1412, %v926
        %v1446 = vsel %vm1417, %v1413, %v928
        %v1447 = vsel %vm1417, %v1414, %v930
        %v1448 = vsel %vm1417, %v1415, %v932
        %v1449 = vsel %vm1417, %v1416, %v934
        %vm1450 = vcmask 523264
        %v1451 = vsel %vm1450, %v1418, %v968
        %v1452 = vsel %vm1450, %v1419, %v970
        %v1453 = vsel %vm1450, %v1420, %v972
        %v1454 = vsel %vm1450, %v1421, %v974
        %v1455 = vsel %vm1450, %v1422, %v976
        %v1456 = vsel %vm1450, %v1423, %v978
        %v1457 = vsel %vm1450, %v1424, %v980
        %v1458 = vsel %vm1450, %v1425, %v982
        %v1459 = vsel %vm1450, %v1426, %v984
        %v1460 = vsel %vm1450, %v1427, %v986
        %v1461 = vsel %vm1450, %v1428, %v988
        %v1462 = vsel %vm1450, %v1429, %v990
        %v1463 = vsel %vm1450, %v1430, %v992
        %v1464 = vsel %vm1450, %v1431, %v994
        %v1465 = vsel %vm1450, %v1432, %v996
        %v1466 = vsel %vm1450, %v1433, %v998
        %v1467 = vsel %vm1450, %v1434, %v1000
        %v1468 = vsel %vm1450, %v1435, %v1002
        %v1469 = vsel %vm1450, %v1436, %v1004
        %v1470 = vsel %vm1450, %v1437, %v1006
        %v1471 = vsel %vm1450, %v1438, %v1008
        %v1472 = vsel %vm1450, %v1439, %v1010
        %v1473 = vsel %vm1450, %v1440, %v1012
        %v1474 = vsel %vm1450, %v1441, %v1014
        %v1475 = vsel %vm1450, %v1442, %v1016
        %v1476 = vsel %vm1450, %v1443, %v1018
        %v1477 = vsel %vm1450, %v1444, %v1020
        %v1478 = vsel %vm1450, %v1445, %v1022
        %v1479 = vsel %vm1450, %v1446, %v1024
        %v1480 = vsel %vm1450, %v1447, %v1026
        %v1481 = vsel %vm1450, %v1448, %v1028
        %v1482 = vsel %vm1450, %v1449, %v1030
        %vm1483 = vcmask 654336
        %v1484 = vsel %vm1483, %v1451, %v1064
        %v1485 = vsel %vm1483, %v1452, %v1066
        %v1486 = vsel %vm1483, %v1453, %v1068
        %v1487 = vsel %vm1483, %v1454, %v1070
        %v1488 = vsel %vm1483, %v1455, %v1072
        %v1489 = vsel %vm1483, %v1456, %v1074
        %v1490 = vsel %vm1483, %v1457, %v1076
        %v1491 = vsel %vm1483, %v1458, %v1078
        %v1492 = vsel %vm1483, %v1459, %v1080
        %v1493 = vsel %vm1483, %v1460, %v1082
        %v1494 = vsel %vm1483, %v1461, %v1084
        %v1495 = vsel %vm1483, %v1462, %v1086
        %v1496 = vsel %vm1483, %v1463, %v1088
        %v1497 = vsel %vm1483, %v1464, %v1090
        %v1498 = vsel %vm1483, %v1465, %v1092
        %v1499 = vsel %vm1483, %v1466, %v1094
        %v1500 = vsel %vm1483, %v1467, %v1096
        %v1501 = vsel %vm1483, %v1468, %v1098
        %v1502 = vsel %vm1483, %v1469, %v1100
        %v1503 = vsel %vm1483, %v1470, %v1102
        %v1504 = vsel %vm1483, %v1471, %v1104
        %v1505 = vsel %vm1483, %v1472, %v1106
        %v1506 = vsel %vm1483, %v1473, %v1108
        %v1507 = vsel %vm1483, %v1474, %v1110
        %v1508 = vsel %vm1483, %v1475, %v1112
        %v1509 = vsel %vm1483, %v1476, %v1114
        %v1510 = vsel %vm1483, %v1477, %v1116
        %v1511 = vsel %vm1483, %v1478, %v1118
        %v1512 = vsel %vm1483, %v1479, %v1120
        %v1513 = vsel %vm1483, %v1480, %v1122
        %v1514 = vsel %vm1483, %v1481, %v1124
        %v1515 = vsel %vm1483, %v1482, %v1126
        %vm1516 = vcmask 785408
        %v1517 = vsel %vm1516, %v1484, %v1160
        %v1518 = vsel %vm1516, %v1485, %v1162
        %v1519 = vsel %vm1516, %v1486, %v1164
        %v1520 = vsel %vm1516, %v1487, %v1166
        %v1521 = vsel %vm1516, %v1488, %v1168
        %v1522 = vsel %vm1516, %v1489, %v1170
        %v1523 = vsel %vm1516, %v1490, %v1172
        %v1524 = vsel %vm1516, %v1491, %v1174
        %v1525 = vsel %vm1516, %v1492, %v1176
        %v1526 = vsel %vm1516, %v1493, %v1178
        %v1527 = vsel %vm1516, %v1494, %v1180
        %v1528 = vsel %vm1516, %v1495, %v1182
        %v1529 = vsel %vm1516, %v1496, %v1184
        %v1530 = vsel %vm1516, %v1497, %v1186
        %v1531 = vsel %vm1516, %v1498, %v1188
        %v1532 = vsel %vm1516, %v1499, %v1190
        %v1533 = vsel %vm1516, %v1500, %v1192
        %v1534 = vsel %vm1516, %v1501, %v1194
        %v1535 = vsel %vm1516, %v1502, %v1196
        %v1536 = vsel %vm1516, %v1503, %v1198
        %v1537 = vsel %vm1516, %v1504, %v1200
        %v1538 = vsel %vm1516, %v1505, %v1202
        %v1539 = vsel %vm1516, %v1506, %v1204
        %v1540 = vsel %vm1516, %v1507, %v1206
        %v1541 = vsel %vm1516, %v1508, %v1208
        %v1542 = vsel %vm1516, %v1509, %v1210
        %v1543 = vsel %vm1516, %v1510, %v1212
        %v1544 = vsel %vm1516, %v1511, %v1214
        %v1545 = vsel %vm1516, %v1512, %v1216
        %v1546 = vsel %vm1516, %v1513, %v1218
        %v1547 = vsel %vm1516, %v1514, %v1220
        %v1548 = vsel %vm1516, %v1515, %v1222
        %vm1549 = vcmask 916480
        %v1550 = vsel %vm1549, %v1517, %v1256
        %v1551 = vsel %vm1549, %v1518, %v1258
        %v1552 = vsel %vm1549, %v1519, %v1260
        %v1553 = vsel %vm1549, %v1520, %v1262
        %v1554 = vsel %vm1549, %v1521, %v1264
        %v1555 = vsel %vm1549, %v1522, %v1266
        %v1556 = vsel %vm1549, %v1523, %v1268
        %v1557 = vsel %vm1549, %v1524, %v1270
        %v1558 = vsel %vm1549, %v1525, %v1272
        %v1559 = vsel %vm1549, %v1526, %v1274
        %v1560 = vsel %vm1549, %v1527, %v1276
        %v1561 = vsel %vm1549, %v1528, %v1278
        %v1562 = vsel %vm1549, %v1529, %v1280
        %v1563 = vsel %vm1549, %v1530, %v1282
        %v1564 = vsel %vm1549, %v1531, %v1284
        %v1565 = vsel %vm1549, %v1532, %v1286
        %v1566 = vsel %vm1549, %v1533, %v1288
        %v1567 = vsel %vm1549, %v1534, %v1290
        %v1568 = vsel %vm1549, %v1535, %v1292
        %v1569 = vsel %vm1549, %v1536, %v1294
        %v1570 = vsel %vm1549, %v1537, %v1296
        %v1571 = vsel %vm1549, %v1538, %v1298
        %v1572 = vsel %vm1549, %v1539, %v1300
        %v1573 = vsel %vm1549, %v1540, %v1302
        %v1574 = vsel %vm1549, %v1541, %v1304
        %v1575 = vsel %vm1549, %v1542, %v1306
        %v1576 = vsel %vm1549, %v1543, %v1308
        %v1577 = vsel %vm1549, %v1544, %v1310
        %v1578 = vsel %vm1549, %v1545, %v1312
        %v1579 = vsel %vm1549, %v1546, %v1314
        %v1580 = vsel %vm1549, %v1547, %v1316
        %v1581 = vsel %vm1549, %v1548, %v1318
        %v1582 = vpack.c.bf16 %v1551, %v1550
        %v1583 = vpack.c.bf16 %v563, %v561
        %v1584 = vpack.c.bf16 %v1553, %v1552
        %v1585 = vpack.c.bf16 %v568, %v566
        %v1586 = vpack.c.bf16 %v1555, %v1554
        %v1587 = vpack.c.bf16 %v573, %v571
        %v1588 = vpack.c.bf16 %v1557, %v1556
        %v1589 = vpack.c.bf16 %v578, %v576
        %v1590 = vpack.c.bf16 %v1559, %v1558
        %v1591 = vpack.c.bf16 %v583, %v581
        %v1592 = vpack.c.bf16 %v1561, %v1560
        %v1593 = vpack.c.bf16 %v588, %v586
        %v1594 = vpack.c.bf16 %v1563, %v1562
        %v1595 = vpack.c.bf16 %v593, %v591
        %v1596 = vpack.c.bf16 %v1565, %v1564
        %v1597 = vpack.c.bf16 %v598, %v596
        %v1598 = vpack.c.bf16 %v1567, %v1566
        %v1599 = vpack.c.bf16 %v603, %v601
        %v1600 = vpack.c.bf16 %v1569, %v1568
        %v1601 = vpack.c.bf16 %v608, %v606
        %v1602 = vpack.c.bf16 %v1571, %v1570
        %v1603 = vpack.c.bf16 %v613, %v611
        %v1604 = vpack.c.bf16 %v1573, %v1572
        %v1605 = vpack.c.bf16 %v618, %v616
        %v1606 = vpack.c.bf16 %v1575, %v1574
        %v1607 = vpack.c.bf16 %v623, %v621
        %v1608 = vpack.c.bf16 %v1577, %v1576
        %v1609 = vpack.c.bf16 %v628, %v626
        %v1610 = vpack.c.bf16 %v1579, %v1578
        %v1611 = vpack.c.bf16 %v633, %v631
        %v1612 = vpack.c.bf16 %v1581, %v1580
        %v1613 = vpack.c.bf16 %v646, %v644
        %v1632 = vunpack.c.l.b16 %v522
        %v1633 = vunpack.c.l.b16 %v523
        %v1634 = vunpack.c.l.b16 %v524
        %v1635 = vunpack.c.l.b16 %v525
        %v1636 = vunpack.c.l.b16 %v526
        %v1637 = vunpack.c.l.b16 %v527
        %v1638 = vunpack.c.l.b16 %v528
        %v1639 = vunpack.c.l.b16 %v529
        %v1640 = vunpack.c.l.b16 %v530
        %v1641 = vunpack.c.l.b16 %v531
        %v1642 = vunpack.c.l.b16 %v532
        %v1643 = vunpack.c.l.b16 %v533
        %v1644 = vunpack.c.l.b16 %v534
        %v1645 = vunpack.c.l.b16 %v535
        %v1646 = vunpack.c.l.b16 %v536
        %v1647 = vunpack.c.l.b16 %v537
        %v1648 = vunpack.c.l.b16 %v538
        %v1649 = vunpack.c.l.b16 %v539
        %v1650 = vpack.c.b16 %v1633, %v1632
        %v1651 = vpack.c.b16 %v1635, %v1634
        %v1652 = vpack.c.b16 %v1637, %v1636
        %v1653 = vpack.c.b16 %v1639, %v1638
        %v1654 = vpack.c.b16 %v1641, %v1640
        %v1655 = vpack.c.b16 %v1643, %v1642
        %v1656 = vpack.c.b16 %v1645, %v1644
        %v1657 = vpack.c.b16 %v1647, %v1646
        %v1658 = vpack.c.b16 %v1649, %v1648
        %v1669 = vsel %vm1351, %v1583, 0
        %v1672 = vsel %vm1351, %v1585, 0
        %v1675 = vsel %vm1351, %v1587, 0
        %v1678 = vsel %vm1351, %v1589, 0
        %v1681 = vsel %vm1351, %v1591, 0
        %v1684 = vsel %vm1351, %v1593, 0
        %v1687 = vsel %vm1351, %v1595, 0
        %v1690 = vsel %vm1351, %v1597, 0
        %v1693 = vsel %vm1351, %v1599, 0
        %v1696 = vsel %vm1351, %v1601, 0
        %v1699 = vsel %vm1351, %v1603, 0
        %v1702 = vsel %vm1351, %v1605, 0
        %v1705 = vsel %vm1351, %v1607, 0
        %v1708 = vsel %vm1351, %v1609, 0
        %v1711 = vsel %vm1351, %v1611, 0
        %v1714 = vsel %vm1351, %v1613, 0
        %1716 = vmatprep.subr.bf16.mxu0 0
        %1717 = vmatpush1.bf16.msra.mxu0 %v1657
        %1718 = vmatprep.subr.bf16.mxu0 0
        %1719 = vmatpush1.bf16.msra.mxu0 %v1656
        %1720 = vmatprep.subr.bf16.mxu0 0
        %1721 = vmatpush1.bf16.msra.mxu0 %v1655
        %1722 = vmatprep.subr.bf16.mxu0 0
        %1723 = vmatpush1.bf16.msra.mxu0 %v1654
        %1724 = vmatprep.subr.bf16.mxu0 0
        %1725 = vmatpush1.bf16.msra.mxu0 %v1653
        %1726 = vmatprep.subr.bf16.mxu0 0
        %1727 = vmatpush1.bf16.msra.mxu0 %v1652
        %1728 = vmatprep.subr.bf16.mxu0 0
        %1729 = vmatpush1.bf16.msra.mxu0 %v1651
        %1730 = vmatprep.subr.bf16.mxu0 0
        %1731 = vmatpush1.bf16.msra.mxu0 %v1650
        %1732 = vmatprep.subr.bf16.mxu0 0
        %1733 = vmatpush2.bf16.msra.mxu0 0
        %1734 = vmatprep.subr.bf16.mxu0 0
        %1735 = vmatpush2.bf16.msra.mxu0 0
        %1736 = vmatprep.subr.bf16.mxu0 0
        %1737 = vmatpush2.bf16.msra.mxu0 0
        %1738 = vmatprep.subr.bf16.mxu0 0
        %1739 = vmatpush2.bf16.msra.mxu0 0
        %1740 = vmatprep.subr.bf16.mxu0 0
        %1741 = vmatpush2.bf16.msra.mxu0 0
        %1742 = vmatprep.subr.bf16.mxu0 0
        %1743 = vmatpush2.bf16.msra.mxu0 0
        %1744 = vmatprep.subr.bf16.mxu0 0
        %1745 = vmatpush2.bf16.msra.mxu0 0
        %1746 = vmatprep.subr.bf16.mxu0 0
        %1747 = vmatpush2.bf16.msra.mxu0 %v1658
        %1748 = vmatprep.mubr.bf16.mxu0 %v1669
        %1749 = vmatmul.mubr.bf16.gmra.mxu0 %v1582
        %v1750 = vpop.f32.mrf.mxu0
        %v1751 = vadd.f32 0.0, %v1750
        %v1752 = vpop.f32.mrf.mxu0
        %v1753 = vpop.f32.mrf.mxu0
        %v1754 = vadd.f32 0.0, %v1753
        %v1755 = vpop.f32.mrf.mxu0
        %1756 = vmatprep.mubr.bf16.mxu0 %v1672
        %1757 = vmatmul.mubr.bf16.gmra.mxu0 %v1584
        %v1758 = vpop.f32.mrf.mxu0
        %v1759 = vadd.f32 0.0, %v1758
        %v1760 = vpop.f32.mrf.mxu0
        %v1761 = vpop.f32.mrf.mxu0
        %v1762 = vadd.f32 0.0, %v1761
        %v1763 = vpop.f32.mrf.mxu0
        %1764 = vmatprep.mubr.bf16.mxu0 %v1675
        %1765 = vmatmul.mubr.bf16.gmra.mxu0 %v1586
        %v1766 = vpop.f32.mrf.mxu0
        %v1767 = vadd.f32 0.0, %v1766
        %v1768 = vpop.f32.mrf.mxu0
        %v1769 = vpop.f32.mrf.mxu0
        %v1770 = vadd.f32 0.0, %v1769
        %v1771 = vpop.f32.mrf.mxu0
        %1772 = vmatprep.mubr.bf16.mxu0 %v1678
        %1773 = vmatmul.mubr.bf16.gmra.mxu0 %v1588
        %v1774 = vpop.f32.mrf.mxu0
        %v1775 = vadd.f32 0.0, %v1774
        %v1776 = vpop.f32.mrf.mxu0
        %v1777 = vpop.f32.mrf.mxu0
        %v1778 = vadd.f32 0.0, %v1777
        %v1779 = vpop.f32.mrf.mxu0
        %1780 = vmatprep.mubr.bf16.mxu0 %v1681
        %1781 = vmatmul.mubr.bf16.gmra.mxu0 %v1590
        %v1782 = vpop.f32.mrf.mxu0
        %v1783 = vadd.f32 0.0, %v1782
        %v1784 = vpop.f32.mrf.mxu0
        %v1785 = vpop.f32.mrf.mxu0
        %v1786 = vadd.f32 0.0, %v1785
        %v1787 = vpop.f32.mrf.mxu0
        %1788 = vmatprep.mubr.bf16.mxu0 %v1684
        %1789 = vmatmul.mubr.bf16.gmra.mxu0 %v1592
        %v1790 = vpop.f32.mrf.mxu0
        %v1791 = vadd.f32 0.0, %v1790
        %v1792 = vpop.f32.mrf.mxu0
        %v1793 = vpop.f32.mrf.mxu0
        %v1794 = vadd.f32 0.0, %v1793
        %v1795 = vpop.f32.mrf.mxu0
        %1796 = vmatprep.mubr.bf16.mxu0 %v1687
        %1797 = vmatmul.mubr.bf16.gmra.mxu0 %v1594
        %v1798 = vpop.f32.mrf.mxu0
        %v1799 = vadd.f32 0.0, %v1798
        %v1800 = vpop.f32.mrf.mxu0
        %v1801 = vpop.f32.mrf.mxu0
        %v1802 = vadd.f32 0.0, %v1801
        %v1803 = vpop.f32.mrf.mxu0
        %1804 = vmatprep.mubr.bf16.mxu0 %v1690
        %1805 = vmatmul.mubr.bf16.gmra.mxu0 %v1596
        %v1806 = vpop.f32.mrf.mxu0
        %v1807 = vadd.f32 0.0, %v1806
        %v1808 = vpop.f32.mrf.mxu0
        %v1809 = vpop.f32.mrf.mxu0
        %v1810 = vadd.f32 0.0, %v1809
        %v1811 = vpop.f32.mrf.mxu0
        %1812 = vmatprep.mubr.bf16.mxu0 %v1693
        %1813 = vmatmul.mubr.bf16.gmra.mxu0 %v1598
        %v1814 = vpop.f32.mrf.mxu0
        %v1815 = vadd.f32 0.0, %v1814
        %v1816 = vpop.f32.mrf.mxu0
        %v1817 = vpop.f32.mrf.mxu0
        %v1818 = vadd.f32 0.0, %v1817
        %v1819 = vpop.f32.mrf.mxu0
        %1820 = vmatprep.mubr.bf16.mxu0 %v1696
        %1821 = vmatmul.mubr.bf16.gmra.mxu0 %v1600
        %v1822 = vpop.f32.mrf.mxu0
        %v1823 = vadd.f32 0.0, %v1822
        %v1824 = vpop.f32.mrf.mxu0
        %v1825 = vpop.f32.mrf.mxu0
        %v1826 = vadd.f32 0.0, %v1825
        %v1827 = vpop.f32.mrf.mxu0
        %1828 = vmatprep.mubr.bf16.mxu0 %v1699
        %1829 = vmatmul.mubr.bf16.gmra.mxu0 %v1602
        %v1830 = vpop.f32.mrf.mxu0
        %v1831 = vadd.f32 0.0, %v1830
        %v1832 = vpop.f32.mrf.mxu0
        %v1833 = vpop.f32.mrf.mxu0
        %v1834 = vadd.f32 0.0, %v1833
        %v1835 = vpop.f32.mrf.mxu0
        %1836 = vmatprep.mubr.bf16.mxu0 %v1702
        %1837 = vmatmul.mubr.bf16.gmra.mxu0 %v1604
        %v1838 = vpop.f32.mrf.mxu0
        %v1839 = vadd.f32 0.0, %v1838
        %v1840 = vpop.f32.mrf.mxu0
        %v1841 = vpop.f32.mrf.mxu0
        %v1842 = vadd.f32 0.0, %v1841
        %v1843 = vpop.f32.mrf.mxu0
        %1844 = vmatprep.mubr.bf16.mxu0 %v1705
        %1845 = vmatmul.mubr.bf16.gmra.mxu0 %v1606
        %v1846 = vpop.f32.mrf.mxu0
        %v1847 = vadd.f32 0.0, %v1846
        %v1848 = vpop.f32.mrf.mxu0
        %v1849 = vpop.f32.mrf.mxu0
        %v1850 = vadd.f32 0.0, %v1849
        %v1851 = vpop.f32.mrf.mxu0
        %1852 = vmatprep.mubr.bf16.mxu0 %v1708
        %1853 = vmatmul.mubr.bf16.gmra.mxu0 %v1608
        %v1854 = vpop.f32.mrf.mxu0
        %v1855 = vadd.f32 0.0, %v1854
        %v1856 = vpop.f32.mrf.mxu0
        %v1857 = vpop.f32.mrf.mxu0
        %v1858 = vadd.f32 0.0, %v1857
        %v1859 = vpop.f32.mrf.mxu0
        %1860 = vmatprep.mubr.bf16.mxu0 %v1711
        %1861 = vmatmul.mubr.bf16.gmra.mxu0 %v1610
        %v1862 = vpop.f32.mrf.mxu0
        %v1863 = vadd.f32 0.0, %v1862
        %v1864 = vpop.f32.mrf.mxu0
        %v1865 = vpop.f32.mrf.mxu0
        %v1866 = vadd.f32 0.0, %v1865
        %v1867 = vpop.f32.mrf.mxu0
        %1868 = vmatprep.mubr.bf16.mxu0 %v1714
        %1869 = vmatmul.mubr.bf16.gmra.mxu0 %v1612
        %v1870 = vpop.f32.mrf.mxu0
        %v1871 = vadd.f32 0.0, %v1870
        %v1872 = vpop.f32.mrf.mxu0
        %v1873 = vpop.f32.mrf.mxu0
        %v1874 = vadd.f32 0.0, %v1873
        %v1875 = vpop.f32.mrf.mxu0
        %1876 = vdwg.mxu0
        %v1877 = vld [vmem:[%s2] sm:$0x1]
        %v1878 = vld [vmem:[%s3] sm:$0x1]
        %v1879 = vsel %vm1351, %v1751, 0.0
        %v1880 = vsel %vm1351, %v1754, 0.0
        %v1881 = vadd.f32 %v1879, %v1880
        %v1882 = vsel %vm1351, %v1759, 0.0
        %v1883 = vadd.f32 %v1881, %v1882
        %v1884 = vsel %vm1351, %v1762, 0.0
        %v1885 = vadd.f32 %v1883, %v1884
        %v1886 = vsel %vm1351, %v1767, 0.0
        %v1887 = vadd.f32 %v1885, %v1886
        %v1888 = vsel %vm1351, %v1770, 0.0
        %v1889 = vadd.f32 %v1887, %v1888
        %v1890 = vsel %vm1351, %v1775, 0.0
        %v1891 = vadd.f32 %v1889, %v1890
        %v1892 = vsel %vm1351, %v1778, 0.0
        %v1893 = vadd.f32 %v1891, %v1892
        %v1894 = vsel %vm1351, %v1783, 0.0
        %v1895 = vadd.f32 %v1893, %v1894
        %v1896 = vsel %vm1351, %v1786, 0.0
        %v1897 = vadd.f32 %v1895, %v1896
        %v1898 = vsel %vm1351, %v1791, 0.0
        %v1899 = vadd.f32 %v1897, %v1898
        %v1900 = vsel %vm1351, %v1794, 0.0
        %v1901 = vadd.f32 %v1899, %v1900
        %v1902 = vsel %vm1351, %v1799, 0.0
        %v1903 = vadd.f32 %v1901, %v1902
        %v1904 = vsel %vm1351, %v1802, 0.0
        %v1905 = vadd.f32 %v1903, %v1904
        %v1906 = vsel %vm1351, %v1807, 0.0
        %v1907 = vadd.f32 %v1905, %v1906
        %v1908 = vsel %vm1351, %v1810, 0.0
        %v1909 = vadd.f32 %v1907, %v1908
        %v1910 = vsel %vm1351, %v1815, 0.0
        %v1911 = vadd.f32 %v1909, %v1910
        %v1912 = vsel %vm1351, %v1818, 0.0
        %v1913 = vadd.f32 %v1911, %v1912
        %v1914 = vsel %vm1351, %v1823, 0.0
        %v1915 = vadd.f32 %v1913, %v1914
        %v1916 = vsel %vm1351, %v1826, 0.0
        %v1917 = vadd.f32 %v1915, %v1916
        %v1918 = vsel %vm1351, %v1831, 0.0
        %v1919 = vadd.f32 %v1917, %v1918
        %v1920 = vsel %vm1351, %v1834, 0.0
        %v1921 = vadd.f32 %v1919, %v1920
        %v1922 = vsel %vm1351, %v1839, 0.0
        %v1923 = vadd.f32 %v1921, %v1922
        %v1924 = vsel %vm1351, %v1842, 0.0
        %v1925 = vadd.f32 %v1923, %v1924
        %v1926 = vsel %vm1351, %v1847, 0.0
        %v1927 = vadd.f32 %v1925, %v1926
        %v1928 = vsel %vm1351, %v1850, 0.0
        %v1929 = vadd.f32 %v1927, %v1928
        %v1930 = vsel %vm1351, %v1855, 0.0
        %v1931 = vadd.f32 %v1929, %v1930
        %v1932 = vsel %vm1351, %v1858, 0.0
        %v1933 = vadd.f32 %v1931, %v1932
        %v1934 = vsel %vm1351, %v1863, 0.0
        %v1935 = vadd.f32 %v1933, %v1934
        %v1936 = vsel %vm1351, %v1866, 0.0
        %v1937 = vadd.f32 %v1935, %v1936
        %v1938 = vsel %vm1351, %v1871, 0.0
        %v1939 = vadd.f32 %v1937, %v1938
        %v1940 = vsel %vm1351, %v1874, 0.0
        %v1941 = vadd.f32 %v1939, %v1940
        %v1942 = vrot.slane %v1941, 4
        %v1943 = vadd.f32 %v1941, %v1942
        %v1944 = vrot.slane %v1943, 2
        %v1945 = vadd.f32 %v1943, %v1944
        %v1946 = vrot.slane %v1945, 1
        %v1947 = vadd.f32 %v1945, %v1946
        %v1948 = vmul.f32 %v1751, %v1751
        %v1949 = vmul.f32 %v1754, %v1754
        %v1950 = vmul.f32 %v1759, %v1759
        %v1951 = vmul.f32 %v1762, %v1762
        %v1952 = vmul.f32 %v1767, %v1767
        %v1953 = vmul.f32 %v1770, %v1770
        %v1954 = vmul.f32 %v1775, %v1775
        %v1955 = vmul.f32 %v1778, %v1778
        %v1956 = vmul.f32 %v1783, %v1783
        %v1957 = vmul.f32 %v1786, %v1786
        %v1958 = vmul.f32 %v1791, %v1791
        %v1959 = vmul.f32 %v1794, %v1794
        %v1960 = vmul.f32 %v1799, %v1799
        %v1961 = vmul.f32 %v1802, %v1802
        %v1962 = vmul.f32 %v1807, %v1807
        %v1963 = vmul.f32 %v1810, %v1810
        %v1964 = vmul.f32 %v1815, %v1815
        %v1965 = vmul.f32 %v1818, %v1818
        %v1966 = vmul.f32 %v1823, %v1823
        %v1967 = vmul.f32 %v1826, %v1826
        %v1968 = vmul.f32 %v1831, %v1831
        %v1969 = vmul.f32 %v1834, %v1834
        %v1970 = vmul.f32 %v1839, %v1839
        %v1971 = vmul.f32 %v1842, %v1842
        %v1972 = vmul.f32 %v1847, %v1847
        %v1973 = vmul.f32 %v1850, %v1850
        %v1974 = vmul.f32 %v1855, %v1855
        %v1975 = vmul.f32 %v1858, %v1858
        %v1976 = vmul.f32 %v1863, %v1863
        %v1977 = vmul.f32 %v1866, %v1866
        %v1978 = vmul.f32 %v1871, %v1871
        %v1979 = vmul.f32 %v1874, %v1874
        %v1980 = vsel %vm1351, %v1948, 0.0
        %v1981 = vsel %vm1351, %v1949, 0.0
        %v1982 = vadd.f32 %v1980, %v1981
        %v1983 = vsel %vm1351, %v1950, 0.0
        %v1984 = vadd.f32 %v1982, %v1983
        %v1985 = vsel %vm1351, %v1951, 0.0
        %v1986 = vadd.f32 %v1984, %v1985
        %v1987 = vsel %vm1351, %v1952, 0.0
        %v1988 = vadd.f32 %v1986, %v1987
        %v1989 = vsel %vm1351, %v1953, 0.0
        %v1990 = vadd.f32 %v1988, %v1989
        %v1991 = vsel %vm1351, %v1954, 0.0
        %v1992 = vadd.f32 %v1990, %v1991
        %v1993 = vsel %vm1351, %v1955, 0.0
        %v1994 = vadd.f32 %v1992, %v1993
        %v1995 = vsel %vm1351, %v1956, 0.0
        %v1996 = vadd.f32 %v1994, %v1995
        %v1997 = vsel %vm1351, %v1957, 0.0
        %v1998 = vadd.f32 %v1996, %v1997
        %v1999 = vsel %vm1351, %v1958, 0.0
        %v2000 = vadd.f32 %v1998, %v1999
        %v2001 = vsel %vm1351, %v1959, 0.0
        %v2002 = vadd.f32 %v2000, %v2001
        %v2003 = vsel %vm1351, %v1960, 0.0
        %v2004 = vadd.f32 %v2002, %v2003
        %v2005 = vsel %vm1351, %v1961, 0.0
        %v2006 = vadd.f32 %v2004, %v2005
        %v2007 = vsel %vm1351, %v1962, 0.0
        %v2008 = vadd.f32 %v2006, %v2007
        %v2009 = vsel %vm1351, %v1963, 0.0
        %v2010 = vadd.f32 %v2008, %v2009
        %v2011 = vsel %vm1351, %v1964, 0.0
        %v2012 = vadd.f32 %v2010, %v2011
        %v2013 = vsel %vm1351, %v1965, 0.0
        %v2014 = vadd.f32 %v2012, %v2013
        %v2015 = vsel %vm1351, %v1966, 0.0
        %v2016 = vadd.f32 %v2014, %v2015
        %v2017 = vsel %vm1351, %v1967, 0.0
        %v2018 = vadd.f32 %v2016, %v2017
        %v2019 = vsel %vm1351, %v1968, 0.0
        %v2020 = vadd.f32 %v2018, %v2019
        %v2021 = vsel %vm1351, %v1969, 0.0
        %v2022 = vadd.f32 %v2020, %v2021
        %v2023 = vsel %vm1351, %v1970, 0.0
        %v2024 = vadd.f32 %v2022, %v2023
        %v2025 = vsel %vm1351, %v1971, 0.0
        %v2026 = vadd.f32 %v2024, %v2025
        %v2027 = vsel %vm1351, %v1972, 0.0
        %v2028 = vadd.f32 %v2026, %v2027
        %v2029 = vsel %vm1351, %v1973, 0.0
        %v2030 = vadd.f32 %v2028, %v2029
        %v2031 = vsel %vm1351, %v1974, 0.0
        %v2032 = vadd.f32 %v2030, %v2031
        %v2033 = vsel %vm1351, %v1975, 0.0
        %v2034 = vadd.f32 %v2032, %v2033
        %v2035 = vsel %vm1351, %v1976, 0.0
        %v2036 = vadd.f32 %v2034, %v2035
        %v2037 = vsel %vm1351, %v1977, 0.0
        %v2038 = vadd.f32 %v2036, %v2037
        %v2039 = vsel %vm1351, %v1978, 0.0
        %v2040 = vadd.f32 %v2038, %v2039
        %v2041 = vsel %vm1351, %v1979, 0.0
        %v2042 = vadd.f32 %v2040, %v2041
        %v2043 = vrot.slane %v2042, 4
        %v2044 = vadd.f32 %v2042, %v2043
        %v2045 = vrot.slane %v2044, 2
        %v2046 = vadd.f32 %v2044, %v2045
        %v2047 = vrot.slane %v2046, 1
        %v2048 = vadd.f32 %v2046, %v2047
        %vm2049 = vcmask 1040384
        %v2050 = vsel %vm2049, %v1947, %v2048
        %v2052 = vsel %vm1351, %v2050, 0
        %2054 = vmatprep.subr.mxu0 0.0
        %2055 = vmatpush1.msra.mxu0 0.0
        %2056 = vmatprep.subr.mxu0 0.0
        %2057 = vmatpush1.msra.mxu0 0.0
        %2058 = vmatprep.subr.mxu0 0.0
        %2059 = vmatpush1.msra.mxu0 0.0
        %2060 = vmatprep.subr.mxu0 0.0
        %2061 = vmatpush1.msra.mxu0 0.0
        %2062 = vmatprep.subr.mxu0 0.0
        %2063 = vmatpush1.msra.mxu0 0.0
        %2064 = vmatprep.subr.mxu0 0.0
        %2065 = vmatpush1.msra.mxu0 0.0
        %2066 = vmatprep.subr.mxu0 0.0
        %2067 = vmatpush1.msra.mxu0 0.0
        %2068 = vmatprep.subr.mxu0 0.0
        %2069 = vmatpush1.msra.mxu0 0.0
        %2070 = vmatprep.subr.mxu0 0.0
        %2071 = vmatpush1.msra.mxu0 0.0
        %2072 = vmatprep.subr.mxu0 0.0
        %2073 = vmatpush1.msra.mxu0 0.0
        %2074 = vmatprep.subr.mxu0 0.0
        %2075 = vmatpush1.msra.mxu0 0.0
        %2076 = vmatprep.subr.mxu0 0.0
        %2077 = vmatpush1.msra.mxu0 0.0
        %2078 = vmatprep.subr.mxu0 0.0
        %2079 = vmatpush1.msra.mxu0 0.0
        %2080 = vmatprep.subr.mxu0 0.0
        %2081 = vmatpush1.msra.mxu0 0.0
        %2082 = vmatprep.subr.mxu0 0.0
        %2083 = vmatpush1.msra.mxu0 %v360
        %2084 = vmatprep.subr.mxu0 0.0
        %2085 = vmatpush1.msra.mxu0 %v359
        %2086 = vmatprep.subr.mxu0 0.0
        %2087 = vmatpush2.msra.mxu0 0.0
        %2088 = vmatprep.subr.mxu0 0.0
        %2089 = vmatpush2.msra.mxu0 0.0
        %2090 = vmatprep.subr.mxu0 0.0
        %2091 = vmatpush2.msra.mxu0 0.0
        %2092 = vmatprep.subr.mxu0 0.0
        %2093 = vmatpush2.msra.mxu0 0.0
        %2094 = vmatprep.subr.mxu0 0.0
        %2095 = vmatpush2.msra.mxu0 0.0
        %2096 = vmatprep.subr.mxu0 0.0
        %2097 = vmatpush2.msra.mxu0 0.0
        %2098 = vmatprep.subr.mxu0 0.0
        %2099 = vmatpush2.msra.mxu0 0.0
        %2100 = vmatprep.subr.mxu0 0.0
        %2101 = vmatpush2.msra.mxu0 0.0
        %2102 = vmatprep.subr.mxu0 0.0
        %2103 = vmatpush2.msra.mxu0 0.0
        %2104 = vmatprep.subr.mxu0 0.0
        %2105 = vmatpush2.msra.mxu0 0.0
        %2106 = vmatprep.subr.mxu0 0.0
        %2107 = vmatpush2.msra.mxu0 0.0
        %2108 = vmatprep.subr.mxu0 0.0
        %2109 = vmatpush2.msra.mxu0 0.0
        %2110 = vmatprep.subr.mxu0 0.0
        %2111 = vmatpush2.msra.mxu0 0.0
        %2112 = vmatprep.subr.mxu0 0.0
        %2113 = vmatpush2.msra.mxu0 0.0
        %2114 = vmatprep.subr.mxu0 0.0
        %2115 = vmatpush2.msra.mxu0 0.0
        %2116 = vmatprep.subr.mxu0 0.0
        %2117 = vmatpush2.msra.mxu0 0.0
        %2118 = vmatprep.mubr.f32.mxu0 0.0
        %2119 = vmatmul.mubr.f32.gmra.mxu0 %v2052
        %v2120 = vpop.f32.mrf.mxu0
        %v2121 = vadd.f32 0.0, %v2120
        %v2122 = vpop.f32.mrf.mxu0
        %2123 = vdwg.mxu0
        %v2124 = vmul.f32 %v2121, %v2121
        %v2126 = vrot.slane %v2124, 7
        %v2128 = vsub.f32 %v2121, %v2126
        %v2129 = vmax.f32 %v2128, 0.0
        %v2130 = vadd.f32 %v2129, 1e-05
        %v2131 = vrsqrt.pop %v2130
        %v2134 = vunpack.c.l.s4 1966171168
        %v2135 = vunpack.c.0.s8 %v2134
        %v2136 = vlaneseq
        %v2137 = vshrl.u32 %v2136, 7
        %v2138 = vsub.s32 %v2135, %v2137
        %v2139 = vrot.slane %v2131, %v2138
        %v2140 = vcombine.high %v2139, %v2139
        %v2142 = vunpack.c.l.s4 1966171168
        %v2143 = vunpack.c.0.s8 %v2142
        %v2144 = vlaneseq
        %v2145 = vshrl.u32 %v2144, 7
        %v2146 = vsub.s32 %v2143, %v2145
        %v2147 = vrot.slane %v2140, %v2146
        %v2149 = vmul.f32 %v1877, %v2147
        %v2150 = vmul.f32 %v2121, %v2149
        %v2151 = vsub.f32 %v1878, %v2150
        %v2153 = vlaneseq
        %v2154 = vshrl.u32 %v2153, 7
        %v2155 = vsub.s32 0, %v2154
        %v2156 = vrot.slane %v2149, %v2155
        %v2158 = vmul.f32 %v1751, %v2156
        %v2159 = vmul.f32 %v1754, %v2156
        %v2160 = vmul.f32 %v1759, %v2156
        %v2161 = vmul.f32 %v1762, %v2156
        %v2162 = vmul.f32 %v1767, %v2156
        %v2163 = vmul.f32 %v1770, %v2156
        %v2164 = vmul.f32 %v1775, %v2156
        %v2165 = vmul.f32 %v1778, %v2156
        %v2166 = vmul.f32 %v1783, %v2156
        %v2167 = vmul.f32 %v1786, %v2156
        %v2168 = vmul.f32 %v1791, %v2156
        %v2169 = vmul.f32 %v1794, %v2156
        %v2170 = vmul.f32 %v1799, %v2156
        %v2171 = vmul.f32 %v1802, %v2156
        %v2172 = vmul.f32 %v1807, %v2156
        %v2173 = vmul.f32 %v1810, %v2156
        %v2174 = vmul.f32 %v1815, %v2156
        %v2175 = vmul.f32 %v1818, %v2156
        %v2176 = vmul.f32 %v1823, %v2156
        %v2177 = vmul.f32 %v1826, %v2156
        %v2178 = vmul.f32 %v1831, %v2156
        %v2179 = vmul.f32 %v1834, %v2156
        %v2180 = vmul.f32 %v1839, %v2156
        %v2181 = vmul.f32 %v1842, %v2156
        %v2182 = vmul.f32 %v1847, %v2156
        %v2183 = vmul.f32 %v1850, %v2156
        %v2184 = vmul.f32 %v1855, %v2156
        %v2185 = vmul.f32 %v1858, %v2156
        %v2186 = vmul.f32 %v1863, %v2156
        %v2187 = vmul.f32 %v1866, %v2156
        %v2188 = vmul.f32 %v1871, %v2156
        %v2189 = vmul.f32 %v1874, %v2156
        %v2191 = vlaneseq
        %v2192 = vshrl.u32 %v2191, 7
        %v2193 = vsub.s32 0, %v2192
        %v2194 = vrot.slane %v2151, %v2193
        %v2196 = vadd.f32 %v2158, %v2194
        %v2197 = vadd.f32 %v2159, %v2194
        %v2198 = vadd.f32 %v2160, %v2194
        %v2199 = vadd.f32 %v2161, %v2194
        %v2200 = vadd.f32 %v2162, %v2194
        %v2201 = vadd.f32 %v2163, %v2194
        %v2202 = vadd.f32 %v2164, %v2194
        %v2203 = vadd.f32 %v2165, %v2194
        %v2204 = vadd.f32 %v2166, %v2194
        %v2205 = vadd.f32 %v2167, %v2194
        %v2206 = vadd.f32 %v2168, %v2194
        %v2207 = vadd.f32 %v2169, %v2194
        %v2208 = vadd.f32 %v2170, %v2194
        %v2209 = vadd.f32 %v2171, %v2194
        %v2210 = vadd.f32 %v2172, %v2194
        %v2211 = vadd.f32 %v2173, %v2194
        %v2212 = vadd.f32 %v2174, %v2194
        %v2213 = vadd.f32 %v2175, %v2194
        %v2214 = vadd.f32 %v2176, %v2194
        %v2215 = vadd.f32 %v2177, %v2194
        %v2216 = vadd.f32 %v2178, %v2194
        %v2217 = vadd.f32 %v2179, %v2194
        %v2218 = vadd.f32 %v2180, %v2194
        %v2219 = vadd.f32 %v2181, %v2194
        %v2220 = vadd.f32 %v2182, %v2194
        %v2221 = vadd.f32 %v2183, %v2194
        %v2222 = vadd.f32 %v2184, %v2194
        %v2223 = vadd.f32 %v2185, %v2194
        %v2224 = vadd.f32 %v2186, %v2194
        %v2225 = vadd.f32 %v2187, %v2194
        %v2226 = vadd.f32 %v2188, %v2194
        %v2227 = vadd.f32 %v2189, %v2194
        %vm2228 = vcmp.gt.f32.partialorder %v2196, 0.0
        %vm2229 = vcmp.gt.f32.partialorder %v2197, 0.0
        %vm2230 = vcmp.gt.f32.partialorder %v2198, 0.0
        %vm2231 = vcmp.gt.f32.partialorder %v2199, 0.0
        %vm2232 = vcmp.gt.f32.partialorder %v2200, 0.0
        %vm2233 = vcmp.gt.f32.partialorder %v2201, 0.0
        %vm2234 = vcmp.gt.f32.partialorder %v2202, 0.0
        %vm2235 = vcmp.gt.f32.partialorder %v2203, 0.0
        %vm2236 = vcmp.gt.f32.partialorder %v2204, 0.0
        %vm2237 = vcmp.gt.f32.partialorder %v2205, 0.0
        %vm2238 = vcmp.gt.f32.partialorder %v2206, 0.0
        %vm2239 = vcmp.gt.f32.partialorder %v2207, 0.0
        %vm2240 = vcmp.gt.f32.partialorder %v2208, 0.0
        %vm2241 = vcmp.gt.f32.partialorder %v2209, 0.0
        %vm2242 = vcmp.gt.f32.partialorder %v2210, 0.0
        %vm2243 = vcmp.gt.f32.partialorder %v2211, 0.0
        %vm2244 = vcmp.gt.f32.partialorder %v2212, 0.0
        %vm2245 = vcmp.gt.f32.partialorder %v2213, 0.0
        %vm2246 = vcmp.gt.f32.partialorder %v2214, 0.0
        %vm2247 = vcmp.gt.f32.partialorder %v2215, 0.0
        %vm2248 = vcmp.gt.f32.partialorder %v2216, 0.0
        %vm2249 = vcmp.gt.f32.partialorder %v2217, 0.0
        %vm2250 = vcmp.gt.f32.partialorder %v2218, 0.0
        %vm2251 = vcmp.gt.f32.partialorder %v2219, 0.0
        %vm2252 = vcmp.gt.f32.partialorder %v2220, 0.0
        %vm2253 = vcmp.gt.f32.partialorder %v2221, 0.0
        %vm2254 = vcmp.gt.f32.partialorder %v2222, 0.0
        %vm2255 = vcmp.gt.f32.partialorder %v2223, 0.0
        %vm2256 = vcmp.gt.f32.partialorder %v2224, 0.0
        %vm2257 = vcmp.gt.f32.partialorder %v2225, 0.0
        %vm2258 = vcmp.gt.f32.partialorder %v2226, 0.0
        %vm2259 = vcmp.gt.f32.partialorder %v2227, 0.0
        %v2260 = vmul.f32 %v2196, 0.01
        %v2261 = vmul.f32 %v2197, 0.01
        %v2262 = vmul.f32 %v2198, 0.01
        %v2263 = vmul.f32 %v2199, 0.01
        %v2264 = vmul.f32 %v2200, 0.01
        %v2265 = vmul.f32 %v2201, 0.01
        %v2266 = vmul.f32 %v2202, 0.01
        %v2267 = vmul.f32 %v2203, 0.01
        %v2268 = vmul.f32 %v2204, 0.01
        %v2269 = vmul.f32 %v2205, 0.01
        %v2270 = vmul.f32 %v2206, 0.01
        %v2271 = vmul.f32 %v2207, 0.01
        %v2272 = vmul.f32 %v2208, 0.01
        %v2273 = vmul.f32 %v2209, 0.01
        %v2274 = vmul.f32 %v2210, 0.01
        %v2275 = vmul.f32 %v2211, 0.01
        %v2276 = vmul.f32 %v2212, 0.01
        %v2277 = vmul.f32 %v2213, 0.01
        %v2278 = vmul.f32 %v2214, 0.01
        %v2279 = vmul.f32 %v2215, 0.01
        %v2280 = vmul.f32 %v2216, 0.01
        %v2281 = vmul.f32 %v2217, 0.01
        %v2282 = vmul.f32 %v2218, 0.01
        %v2283 = vmul.f32 %v2219, 0.01
        %v2284 = vmul.f32 %v2220, 0.01
        %v2285 = vmul.f32 %v2221, 0.01
        %v2286 = vmul.f32 %v2222, 0.01
        %v2287 = vmul.f32 %v2223, 0.01
        %v2288 = vmul.f32 %v2224, 0.01
        %v2289 = vmul.f32 %v2225, 0.01
        %v2290 = vmul.f32 %v2226, 0.01
        %v2291 = vmul.f32 %v2227, 0.01
        %v2292 = vsel %vm2228, %v2196, %v2260
        %v2293 = vsel %vm2229, %v2197, %v2261
        %v2294 = vsel %vm2230, %v2198, %v2262
        %v2295 = vsel %vm2231, %v2199, %v2263
        %v2296 = vsel %vm2232, %v2200, %v2264
        %v2297 = vsel %vm2233, %v2201, %v2265
        %v2298 = vsel %vm2234, %v2202, %v2266
        %v2299 = vsel %vm2235, %v2203, %v2267
        %v2300 = vsel %vm2236, %v2204, %v2268
        %v2301 = vsel %vm2237, %v2205, %v2269
        %v2302 = vsel %vm2238, %v2206, %v2270
        %v2303 = vsel %vm2239, %v2207, %v2271
        %v2304 = vsel %vm2240, %v2208, %v2272
        %v2305 = vsel %vm2241, %v2209, %v2273
        %v2306 = vsel %vm2242, %v2210, %v2274
        %v2307 = vsel %vm2243, %v2211, %v2275
        %v2308 = vsel %vm2244, %v2212, %v2276
        %v2309 = vsel %vm2245, %v2213, %v2277
        %v2310 = vsel %vm2246, %v2214, %v2278
        %v2311 = vsel %vm2247, %v2215, %v2279
        %v2312 = vsel %vm2248, %v2216, %v2280
        %v2313 = vsel %vm2249, %v2217, %v2281
        %v2314 = vsel %vm2250, %v2218, %v2282
        %v2315 = vsel %vm2251, %v2219, %v2283
        %v2316 = vsel %vm2252, %v2220, %v2284
        %v2317 = vsel %vm2253, %v2221, %v2285
        %v2318 = vsel %vm2254, %v2222, %v2286
        %v2319 = vsel %vm2255, %v2223, %v2287
        %v2320 = vsel %vm2256, %v2224, %v2288
        %v2321 = vsel %vm2257, %v2225, %v2289
        %v2322 = vsel %vm2258, %v2226, %v2290
        %v2323 = vsel %vm2259, %v2227, %v2291
        %2324 = vst.msk [vmem:[#allocation2] sm:$0xff] %vm1351, 0.0
        %2325 = vst.msk [vmem:[#allocation2 + $0x8] sm:$0xff] %vm1351, 0.0
        %vm2326 = vcmask 123904
        %2327 = vst.msk [vmem:[#allocation2 + $0x10] sm:$0x3] %vm2326, 0.0
        %s2328 = scalar_lea.vmem [#allocation2], 408
        %2329 = vst.msk [vmem:[%s2328] sm:$0xff] %vm1351, 0.0
        %2330 = vst.msk [vmem:[%s2328 + $0x8] sm:$0xff] %vm1351, 0.0
        %2331 = vst.msk [vmem:[%s2328 + $0x10] sm:$0x3] %vm2326, 0.0
        %s2332 = scalar_lea.vmem [#allocation2], 24
        %vm2333 = vcmask 122880
        %2334 = vst.msk [vmem:[%s2332] sm:$0x1] %vm2333, 0.0
        %2335 = vst.msk [vmem:[%s2332 + $0x18] sm:$0x1] %vm2333, 0.0
        %2336 = vst.msk [vmem:[%s2332 + $0x30] sm:$0x1] %vm2333, 0.0
        %2337 = vst.msk [vmem:[%s2332 + $0x48] sm:$0x1] %vm2333, 0.0
        %2338 = vst.msk [vmem:[%s2332 + $0x60] sm:$0x1] %vm2333, 0.0
        %2339 = vst.msk [vmem:[%s2332 + $0x78] sm:$0x1] %vm2333, 0.0
        %2340 = vst.msk [vmem:[%s2332 + $0x90] sm:$0x1] %vm2333, 0.0
        %2341 = vst.msk [vmem:[%s2332 + $0xa8] sm:$0x1] %vm2333, 0.0
        %2342 = vst.msk [vmem:[%s2332 + $0xc0] sm:$0x1] %vm2333, 0.0
        %2343 = vst.msk [vmem:[%s2332 + $0xd8] sm:$0x1] %vm2333, 0.0
        %2344 = vst.msk [vmem:[%s2332 + $0xf0] sm:$0x1] %vm2333, 0.0
        %2345 = vst.msk [vmem:[%s2332 + $0x108] sm:$0x1] %vm2333, 0.0
        %2346 = vst.msk [vmem:[%s2332 + $0x120] sm:$0x1] %vm2333, 0.0
        %2347 = vst.msk [vmem:[%s2332 + $0x138] sm:$0x1] %vm2333, 0.0
        %2348 = vst.msk [vmem:[%s2332 + $0x150] sm:$0x1] %vm2333, 0.0
        %2349 = vst.msk [vmem:[%s2332 + $0x168] sm:$0x1] %vm2333, 0.0
        %2350 = vst.msk [vmem:[%s2332 + $0x11] sm:$0x1] %vm2333, 0.0
        %2351 = vst.msk [vmem:[%s2332 + $0x29] sm:$0x1] %vm2333, 0.0
        %2352 = vst.msk [vmem:[%s2332 + $0x41] sm:$0x1] %vm2333, 0.0
        %2353 = vst.msk [vmem:[%s2332 + $0x59] sm:$0x1] %vm2333, 0.0
        %2354 = vst.msk [vmem:[%s2332 + $0x71] sm:$0x1] %vm2333, 0.0
        %2355 = vst.msk [vmem:[%s2332 + $0x89] sm:$0x1] %vm2333, 0.0
        %2356 = vst.msk [vmem:[%s2332 + $0xa1] sm:$0x1] %vm2333, 0.0
        %2357 = vst.msk [vmem:[%s2332 + $0xb9] sm:$0x1] %vm2333, 0.0
        %2358 = vst.msk [vmem:[%s2332 + $0xd1] sm:$0x1] %vm2333, 0.0
        %2359 = vst.msk [vmem:[%s2332 + $0xe9] sm:$0x1] %vm2333, 0.0
        %2360 = vst.msk [vmem:[%s2332 + $0x101] sm:$0x1] %vm2333, 0.0
        %2361 = vst.msk [vmem:[%s2332 + $0x119] sm:$0x1] %vm2333, 0.0
        %2362 = vst.msk [vmem:[%s2332 + $0x131] sm:$0x1] %vm2333, 0.0
        %2363 = vst.msk [vmem:[%s2332 + $0x149] sm:$0x1] %vm2333, 0.0
        %2364 = vst.msk [vmem:[%s2332 + $0x161] sm:$0x1] %vm2333, 0.0
        %2365 = vst.msk [vmem:[%s2332 + $0x179] sm:$0x1] %vm2333, 0.0
        %2366 = vst.msk [vmem:[%s2332 + $0x1] sm:$0xff] %vm1351, %v2292
        %2367 = vst.msk [vmem:[%s2332 + $0x9] sm:$0xff] %vm1351, %v2293
        %2368 = vst.msk [vmem:[%s2332 + $0x19] sm:$0xff] %vm1351, %v2294
        %2369 = vst.msk [vmem:[%s2332 + $0x21] sm:$0xff] %vm1351, %v2295
        %2370 = vst.msk [vmem:[%s2332 + $0x31] sm:$0xff] %vm1351, %v2296
        %2371 = vst.msk [vmem:[%s2332 + $0x39] sm:$0xff] %vm1351, %v2297
        %2372 = vst.msk [vmem:[%s2332 + $0x49] sm:$0xff] %vm1351, %v2298
        %2373 = vst.msk [vmem:[%s2332 + $0x51] sm:$0xff] %vm1351, %v2299
        %2374 = vst.msk [vmem:[%s2332 + $0x61] sm:$0xff] %vm1351, %v2300
        %2375 = vst.msk [vmem:[%s2332 + $0x69] sm:$0xff] %vm1351, %v2301
        %2376 = vst.msk [vmem:[%s2332 + $0x79] sm:$0xff] %vm1351, %v2302
        %2377 = vst.msk [vmem:[%s2332 + $0x81] sm:$0xff] %vm1351, %v2303
        %2378 = vst.msk [vmem:[%s2332 + $0x91] sm:$0xff] %vm1351, %v2304
        %2379 = vst.msk [vmem:[%s2332 + $0x99] sm:$0xff] %vm1351, %v2305
        %2380 = vst.msk [vmem:[%s2332 + $0xa9] sm:$0xff] %vm1351, %v2306
        %2381 = vst.msk [vmem:[%s2332 + $0xb1] sm:$0xff] %vm1351, %v2307
        %2382 = vst.msk [vmem:[%s2332 + $0xc1] sm:$0xff] %vm1351, %v2308
        %2383 = vst.msk [vmem:[%s2332 + $0xc9] sm:$0xff] %vm1351, %v2309
        %2384 = vst.msk [vmem:[%s2332 + $0xd9] sm:$0xff] %vm1351, %v2310
        %2385 = vst.msk [vmem:[%s2332 + $0xe1] sm:$0xff] %vm1351, %v2311
        %2386 = vst.msk [vmem:[%s2332 + $0xf1] sm:$0xff] %vm1351, %v2312
        %2387 = vst.msk [vmem:[%s2332 + $0xf9] sm:$0xff] %vm1351, %v2313
        %2388 = vst.msk [vmem:[%s2332 + $0x109] sm:$0xff] %vm1351, %v2314
        %2389 = vst.msk [vmem:[%s2332 + $0x111] sm:$0xff] %vm1351, %v2315
        %2390 = vst.msk [vmem:[%s2332 + $0x121] sm:$0xff] %vm1351, %v2316
        %2391 = vst.msk [vmem:[%s2332 + $0x129] sm:$0xff] %vm1351, %v2317
        %2392 = vst.msk [vmem:[%s2332 + $0x139] sm:$0xff] %vm1351, %v2318
        %2393 = vst.msk [vmem:[%s2332 + $0x141] sm:$0xff] %vm1351, %v2319
        %2394 = vst.msk [vmem:[%s2332 + $0x151] sm:$0xff] %vm1351, %v2320
        %2395 = vst.msk [vmem:[%s2332 + $0x159] sm:$0xff] %vm1351, %v2321
        %2396 = vst.msk [vmem:[%s2332 + $0x169] sm:$0xff] %vm1351, %v2322
        %2397 = vst.msk [vmem:[%s2332 + $0x171] sm:$0xff] %vm1351, %v2323
        %v2398 = vld [vmem:[#allocation2] sm:$0xff]
        %v2399 = vld [vmem:[#allocation2 + $0x8] sm:$0xff]
        %v2400 = vld [vmem:[#allocation2 + $0x10] sm:$0x3]
        %v2401 = vld [vmem:[#allocation2 + $0x18] sm:$0xff]
        %v2402 = vld [vmem:[#allocation2 + $0x20] sm:$0xff]
        %v2403 = vld [vmem:[#allocation2 + $0x28] sm:$0x3]
        %v2404 = vld [vmem:[#allocation2 + $0x30] sm:$0xff]
        %v2405 = vld [vmem:[#allocation2 + $0x38] sm:$0xff]
        %v2406 = vld [vmem:[#allocation2 + $0x40] sm:$0x3]
        %v2407 = vld [vmem:[#allocation2 + $0x48] sm:$0xff]
        %v2408 = vld [vmem:[#allocation2 + $0x50] sm:$0xff]
        %v2409 = vld [vmem:[#allocation2 + $0x58] sm:$0x3]
        %v2410 = vld [vmem:[#allocation2 + $0x60] sm:$0xff]
        %v2411 = vld [vmem:[#allocation2 + $0x68] sm:$0xff]
        %v2412 = vld [vmem:[#allocation2 + $0x70] sm:$0x3]
        %v2413 = vld [vmem:[#allocation2 + $0x78] sm:$0xff]
        %v2414 = vld [vmem:[#allocation2 + $0x80] sm:$0xff]
        %v2415 = vld [vmem:[#allocation2 + $0x88] sm:$0x3]
        %v2416 = vld [vmem:[#allocation2 + $0x90] sm:$0xff]
        %v2417 = vld [vmem:[#allocation2 + $0x98] sm:$0xff]
        %v2418 = vld [vmem:[#allocation2 + $0xa0] sm:$0x3]
        %v2419 = vld [vmem:[#allocation2 + $0xa8] sm:$0xff]
        %v2420 = vld [vmem:[#allocation2 + $0xb0] sm:$0xff]
        %v2421 = vld [vmem:[#allocation2 + $0xb8] sm:$0x3]
        %v2422 = vld [vmem:[#allocation2 + $0xc0] sm:$0xff]
        %v2423 = vld [vmem:[#allocation2 + $0xc8] sm:$0xff]
        %v2424 = vld [vmem:[#allocation2 + $0xd0] sm:$0x3]
        %v2425 = vld [vmem:[#allocation2 + $0xd8] sm:$0xff]
        %v2426 = vld [vmem:[#allocation2 + $0xe0] sm:$0xff]
        %v2427 = vld [vmem:[#allocation2 + $0xe8] sm:$0x3]
        %v2428 = vld [vmem:[#allocation2 + $0xf0] sm:$0xff]
        %v2429 = vld [vmem:[#allocation2 + $0xf8] sm:$0xff]
        %v2430 = vld [vmem:[#allocation2 + $0x100] sm:$0x3]
        %v2431 = vld [vmem:[#allocation2 + $0x108] sm:$0xff]
        %v2432 = vld [vmem:[#allocation2 + $0x110] sm:$0xff]
        %v2433 = vld [vmem:[#allocation2 + $0x118] sm:$0x3]
        %v2434 = vld [vmem:[#allocation2 + $0x120] sm:$0xff]
        %v2435 = vld [vmem:[#allocation2 + $0x128] sm:$0xff]
        %v2436 = vld [vmem:[#allocation2 + $0x130] sm:$0x3]
        %v2437 = vld [vmem:[#allocation2 + $0x138] sm:$0xff]
        %v2438 = vld [vmem:[#allocation2 + $0x140] sm:$0xff]
        %v2439 = vld [vmem:[#allocation2 + $0x148] sm:$0x3]
        %v2440 = vld [vmem:[#allocation2 + $0x150] sm:$0xff]
        %v2441 = vld [vmem:[#allocation2 + $0x158] sm:$0xff]
        %v2442 = vld [vmem:[#allocation2 + $0x160] sm:$0x3]
        %v2443 = vld [vmem:[#allocation2 + $0x168] sm:$0xff]
        %v2444 = vld [vmem:[#allocation2 + $0x170] sm:$0xff]
        %v2445 = vld [vmem:[#allocation2 + $0x178] sm:$0x3]
        %v2446 = vld [vmem:[#allocation2 + $0x180] sm:$0xff]
        %v2447 = vld [vmem:[#allocation2 + $0x188] sm:$0xff]
        %v2448 = vld [vmem:[#allocation2 + $0x190] sm:$0x3]
        %v2449 = vld [vmem:[#allocation2 + $0x198] sm:$0xff]
        %v2450 = vld [vmem:[#allocation2 + $0x1a0] sm:$0xff]
        %v2451 = vld [vmem:[#allocation2 + $0x1a8] sm:$0x3]
        %v2452 = vld [vmem:[%s4] sm:$0xf]
        %v2453 = vld [vmem:[%s4 + $0x4] sm:$0xf]
        %v2454 = vld [vmem:[%s4 + $0x8] sm:$0xf]
        %v2455 = vld [vmem:[%s4 + $0xc] sm:$0xf]
        %v2456 = vld [vmem:[%s4 + $0x10] sm:$0xf]
        %v2457 = vld [vmem:[%s4 + $0x14] sm:$0xf]
        %v2458 = vld [vmem:[%s4 + $0x18] sm:$0xf]
        %v2459 = vld [vmem:[%s4 + $0x1c] sm:$0xf]
        %v2460 = vld [vmem:[%s4 + $0x20] sm:$0xf]
        %v2461 = vld [vmem:[%s4 + $0x24] sm:$0xf]
        %v2462 = vld [vmem:[%s4 + $0x28] sm:$0xf]
        %v2463 = vld [vmem:[%s4 + $0x2c] sm:$0xf]
        %v2464 = vld [vmem:[%s4 + $0x30] sm:$0xf]
        %v2465 = vld [vmem:[%s4 + $0x34] sm:$0xf]
        %v2466 = vld [vmem:[%s4 + $0x38] sm:$0xf]
        %v2467 = vld [vmem:[%s4 + $0x3c] sm:$0xf]
        %v2468 = vld [vmem:[%s4 + $0x40] sm:$0xf]
        %v2469 = vld [vmem:[%s4 + $0x44] sm:$0xf]
        %v2518 = vrot.slane %v2398, 1
        %v2519 = vrot.slane %v2399, 1
        %v2520 = vsel %vm409, %v2518, %v2519
        %v2521 = vrot.slane %v2400, 1
        %v2522 = vsel %vm409, %v2519, %v2521
        %v2523 = vrot.slane %v2401, 1
        %v2524 = vrot.slane %v2402, 1
        %v2525 = vsel %vm409, %v2523, %v2524
        %v2526 = vrot.slane %v2403, 1
        %v2527 = vsel %vm409, %v2524, %v2526
        %v2528 = vrot.slane %v2404, 1
        %v2529 = vrot.slane %v2405, 1
        %v2530 = vsel %vm409, %v2528, %v2529
        %v2531 = vrot.slane %v2406, 1
        %v2532 = vsel %vm409, %v2529, %v2531
        %v2533 = vrot.slane %v2407, 1
        %v2534 = vrot.slane %v2408, 1
        %v2535 = vsel %vm409, %v2533, %v2534
        %v2536 = vrot.slane %v2409, 1
        %v2537 = vsel %vm409, %v2534, %v2536
        %v2538 = vrot.slane %v2410, 1
        %v2539 = vrot.slane %v2411, 1
        %v2540 = vsel %vm409, %v2538, %v2539
        %v2541 = vrot.slane %v2412, 1
        %v2542 = vsel %vm409, %v2539, %v2541
        %v2543 = vrot.slane %v2413, 1
        %v2544 = vrot.slane %v2414, 1
        %v2545 = vsel %vm409, %v2543, %v2544
        %v2546 = vrot.slane %v2415, 1
        %v2547 = vsel %vm409, %v2544, %v2546
        %v2548 = vrot.slane %v2416, 1
        %v2549 = vrot.slane %v2417, 1
        %v2550 = vsel %vm409, %v2548, %v2549
        %v2551 = vrot.slane %v2418, 1
        %v2552 = vsel %vm409, %v2549, %v2551
        %v2553 = vrot.slane %v2419, 1
        %v2554 = vrot.slane %v2420, 1
        %v2555 = vsel %vm409, %v2553, %v2554
        %v2556 = vrot.slane %v2421, 1
        %v2557 = vsel %vm409, %v2554, %v2556
        %v2558 = vrot.slane %v2422, 1
        %v2559 = vrot.slane %v2423, 1
        %v2560 = vsel %vm409, %v2558, %v2559
        %v2561 = vrot.slane %v2424, 1
        %v2562 = vsel %vm409, %v2559, %v2561
        %v2563 = vrot.slane %v2425, 1
        %v2564 = vrot.slane %v2426, 1
        %v2565 = vsel %vm409, %v2563, %v2564
        %v2566 = vrot.slane %v2427, 1
        %v2567 = vsel %vm409, %v2564, %v2566
        %v2568 = vrot.slane %v2428, 1
        %v2569 = vrot.slane %v2429, 1
        %v2570 = vsel %vm409, %v2568, %v2569
        %v2571 = vrot.slane %v2430, 1
        %v2572 = vsel %vm409, %v2569, %v2571
        %v2573 = vrot.slane %v2431, 1
        %v2574 = vrot.slane %v2432, 1
        %v2575 = vsel %vm409, %v2573, %v2574
        %v2576 = vrot.slane %v2433, 1
        %v2577 = vsel %vm409, %v2574, %v2576
        %v2578 = vrot.slane %v2434, 1
        %v2579 = vrot.slane %v2435, 1
        %v2580 = vsel %vm409, %v2578, %v2579
        %v2581 = vrot.slane %v2436, 1
        %v2582 = vsel %vm409, %v2579, %v2581
        %v2583 = vrot.slane %v2437, 1
        %v2584 = vrot.slane %v2438, 1
        %v2585 = vsel %vm409, %v2583, %v2584
        %v2586 = vrot.slane %v2439, 1
        %v2587 = vsel %vm409, %v2584, %v2586
        %v2588 = vrot.slane %v2440, 1
        %v2589 = vrot.slane %v2441, 1
        %v2590 = vsel %vm409, %v2588, %v2589
        %v2591 = vrot.slane %v2442, 1
        %v2592 = vsel %vm409, %v2589, %v2591
        %v2593 = vrot.slane %v2443, 1
        %v2594 = vrot.slane %v2444, 1
        %v2595 = vsel %vm409, %v2593, %v2594
        %v2596 = vrot.slane %v2445, 1
        %v2597 = vsel %vm409, %v2594, %v2596
        %v2598 = vrot.slane %v2398, 2
        %v2599 = vrot.slane %v2399, 2
        %v2600 = vsel %vm548, %v2598, %v2599
        %v2601 = vrot.slane %v2400, 2
        %v2602 = vsel %vm548, %v2599, %v2601
        %v2603 = vrot.slane %v2401, 2
        %v2604 = vrot.slane %v2402, 2
        %v2605 = vsel %vm548, %v2603, %v2604
        %v2606 = vrot.slane %v2403, 2
        %v2607 = vsel %vm548, %v2604, %v2606
        %v2608 = vrot.slane %v2404, 2
        %v2609 = vrot.slane %v2405, 2
        %v2610 = vsel %vm548, %v2608, %v2609
        %v2611 = vrot.slane %v2406, 2
        %v2612 = vsel %vm548, %v2609, %v2611
        %v2613 = vrot.slane %v2407, 2
        %v2614 = vrot.slane %v2408, 2
        %v2615 = vsel %vm548, %v2613, %v2614
        %v2616 = vrot.slane %v2409, 2
        %v2617 = vsel %vm548, %v2614, %v2616
        %v2618 = vrot.slane %v2410, 2
        %v2619 = vrot.slane %v2411, 2
        %v2620 = vsel %vm548, %v2618, %v2619
        %v2621 = vrot.slane %v2412, 2
        %v2622 = vsel %vm548, %v2619, %v2621
        %v2623 = vrot.slane %v2413, 2
        %v2624 = vrot.slane %v2414, 2
        %v2625 = vsel %vm548, %v2623, %v2624
        %v2626 = vrot.slane %v2415, 2
        %v2627 = vsel %vm548, %v2624, %v2626
        %v2628 = vrot.slane %v2416, 2
        %v2629 = vrot.slane %v2417, 2
        %v2630 = vsel %vm548, %v2628, %v2629
        %v2631 = vrot.slane %v2418, 2
        %v2632 = vsel %vm548, %v2629, %v2631
        %v2633 = vrot.slane %v2419, 2
        %v2634 = vrot.slane %v2420, 2
        %v2635 = vsel %vm548, %v2633, %v2634
        %v2636 = vrot.slane %v2421, 2
        %v2637 = vsel %vm548, %v2634, %v2636
        %v2638 = vrot.slane %v2422, 2
        %v2639 = vrot.slane %v2423, 2
        %v2640 = vsel %vm548, %v2638, %v2639
        %v2641 = vrot.slane %v2424, 2
        %v2642 = vsel %vm548, %v2639, %v2641
        %v2643 = vrot.slane %v2425, 2
        %v2644 = vrot.slane %v2426, 2
        %v2645 = vsel %vm548, %v2643, %v2644
        %v2646 = vrot.slane %v2427, 2
        %v2647 = vsel %vm548, %v2644, %v2646
        %v2648 = vrot.slane %v2428, 2
        %v2649 = vrot.slane %v2429, 2
        %v2650 = vsel %vm548, %v2648, %v2649
        %v2651 = vrot.slane %v2430, 2
        %v2652 = vsel %vm548, %v2649, %v2651
        %v2653 = vrot.slane %v2431, 2
        %v2654 = vrot.slane %v2432, 2
        %v2655 = vsel %vm548, %v2653, %v2654
        %v2656 = vrot.slane %v2433, 2
        %v2657 = vsel %vm548, %v2654, %v2656
        %v2658 = vrot.slane %v2434, 2
        %v2659 = vrot.slane %v2435, 2
        %v2660 = vsel %vm548, %v2658, %v2659
        %v2661 = vrot.slane %v2436, 2
        %v2662 = vsel %vm548, %v2659, %v2661
        %v2663 = vrot.slane %v2437, 2
        %v2664 = vrot.slane %v2438, 2
        %v2665 = vsel %vm548, %v2663, %v2664
        %v2666 = vrot.slane %v2439, 2
        %v2667 = vsel %vm548, %v2664, %v2666
        %v2668 = vrot.slane %v2440, 2
        %v2669 = vrot.slane %v2441, 2
        %v2670 = vsel %vm548, %v2668, %v2669
        %v2671 = vrot.slane %v2442, 2
        %v2672 = vsel %vm548, %v2669, %v2671
        %v2673 = vrot.slane %v2443, 2
        %v2674 = vrot.slane %v2444, 2
        %v2675 = vsel %vm548, %v2673, %v2674
        %v2676 = vrot.slane %v2445, 2
        %v2677 = vsel %vm548, %v2674, %v2676
        %v2681 = vrot.slane %v2446, 1
        %v2682 = vrot.slane %v2447, 1
        %v2683 = vsel %vm409, %v2681, %v2682
        %v2684 = vrot.slane %v2448, 1
        %v2685 = vsel %vm409, %v2682, %v2684
        %v2686 = vrot.slane %v2446, 2
        %v2687 = vrot.slane %v2447, 2
        %v2688 = vsel %vm548, %v2686, %v2687
        %v2689 = vrot.slane %v2448, 2
        %v2690 = vsel %vm548, %v2687, %v2689
        %v2694 = vrot.slane %v2449, 1
        %v2695 = vrot.slane %v2450, 1
        %v2696 = vsel %vm409, %v2694, %v2695
        %v2697 = vrot.slane %v2451, 1
        %v2698 = vsel %vm409, %v2695, %v2697
        %v2699 = vrot.slane %v2449, 2
        %v2700 = vrot.slane %v2450, 2
        %v2701 = vsel %vm548, %v2699, %v2700
        %v2702 = vrot.slane %v2451, 2
        %v2703 = vsel %vm548, %v2700, %v2702
        %2736 = vrot.lane.b32.xlu0 %v2520, 16
        %v2737 = vpop.permute.xlu0 %2736
        %2738 = vrot.lane.b32.xlu0 %v2522, 16
        %v2739 = vpop.permute.xlu0 %2738
        %2740 = vrot.lane.b32.xlu0 %v2525, 16
        %v2741 = vpop.permute.xlu0 %2740
        %2742 = vrot.lane.b32.xlu0 %v2527, 16
        %v2743 = vpop.permute.xlu0 %2742
        %2744 = vrot.lane.b32.xlu0 %v2530, 16
        %v2745 = vpop.permute.xlu0 %2744
        %2746 = vrot.lane.b32.xlu0 %v2532, 16
        %v2747 = vpop.permute.xlu0 %2746
        %2748 = vrot.lane.b32.xlu0 %v2535, 16
        %v2749 = vpop.permute.xlu0 %2748
        %2750 = vrot.lane.b32.xlu0 %v2537, 16
        %v2751 = vpop.permute.xlu0 %2750
        %2752 = vrot.lane.b32.xlu0 %v2540, 16
        %v2753 = vpop.permute.xlu0 %2752
        %2754 = vrot.lane.b32.xlu0 %v2542, 16
        %v2755 = vpop.permute.xlu0 %2754
        %2756 = vrot.lane.b32.xlu0 %v2545, 16
        %v2757 = vpop.permute.xlu0 %2756
        %2758 = vrot.lane.b32.xlu0 %v2547, 16
        %v2759 = vpop.permute.xlu0 %2758
        %2760 = vrot.lane.b32.xlu0 %v2550, 16
        %v2761 = vpop.permute.xlu0 %2760
        %2762 = vrot.lane.b32.xlu0 %v2552, 16
        %v2763 = vpop.permute.xlu0 %2762
        %2764 = vrot.lane.b32.xlu0 %v2555, 16
        %v2765 = vpop.permute.xlu0 %2764
        %2766 = vrot.lane.b32.xlu0 %v2557, 16
        %v2767 = vpop.permute.xlu0 %2766
        %2768 = vrot.lane.b32.xlu0 %v2560, 16
        %v2769 = vpop.permute.xlu0 %2768
        %2770 = vrot.lane.b32.xlu0 %v2562, 16
        %v2771 = vpop.permute.xlu0 %2770
        %2772 = vrot.lane.b32.xlu0 %v2565, 16
        %v2773 = vpop.permute.xlu0 %2772
        %2774 = vrot.lane.b32.xlu0 %v2567, 16
        %v2775 = vpop.permute.xlu0 %2774
        %2776 = vrot.lane.b32.xlu0 %v2570, 16
        %v2777 = vpop.permute.xlu0 %2776
        %2778 = vrot.lane.b32.xlu0 %v2572, 16
        %v2779 = vpop.permute.xlu0 %2778
        %2780 = vrot.lane.b32.xlu0 %v2575, 16
        %v2781 = vpop.permute.xlu0 %2780
        %2782 = vrot.lane.b32.xlu0 %v2577, 16
        %v2783 = vpop.permute.xlu0 %2782
        %2784 = vrot.lane.b32.xlu0 %v2580, 16
        %v2785 = vpop.permute.xlu0 %2784
        %2786 = vrot.lane.b32.xlu0 %v2582, 16
        %v2787 = vpop.permute.xlu0 %2786
        %2788 = vrot.lane.b32.xlu0 %v2585, 16
        %v2789 = vpop.permute.xlu0 %2788
        %2790 = vrot.lane.b32.xlu0 %v2587, 16
        %v2791 = vpop.permute.xlu0 %2790
        %2792 = vrot.lane.b32.xlu0 %v2590, 16
        %v2793 = vpop.permute.xlu0 %2792
        %2794 = vrot.lane.b32.xlu0 %v2592, 16
        %v2795 = vpop.permute.xlu0 %2794
        %2796 = vrot.lane.b32.xlu0 %v2595, 16
        %v2797 = vpop.permute.xlu0 %2796
        %2798 = vrot.lane.b32.xlu0 %v2597, 16
        %v2799 = vpop.permute.xlu0 %2798
        %2832 = vrot.lane.b32.xlu0 %v2600, 32
        %v2833 = vpop.permute.xlu0 %2832
        %2834 = vrot.lane.b32.xlu0 %v2602, 32
        %v2835 = vpop.permute.xlu0 %2834
        %2836 = vrot.lane.b32.xlu0 %v2605, 32
        %v2837 = vpop.permute.xlu0 %2836
        %2838 = vrot.lane.b32.xlu0 %v2607, 32
        %v2839 = vpop.permute.xlu0 %2838
        %2840 = vrot.lane.b32.xlu0 %v2610, 32
        %v2841 = vpop.permute.xlu0 %2840
        %2842 = vrot.lane.b32.xlu0 %v2612, 32
        %v2843 = vpop.permute.xlu0 %2842
        %2844 = vrot.lane.b32.xlu0 %v2615, 32
        %v2845 = vpop.permute.xlu0 %2844
        %2846 = vrot.lane.b32.xlu0 %v2617, 32
        %v2847 = vpop.permute.xlu0 %2846
        %2848 = vrot.lane.b32.xlu0 %v2620, 32
        %v2849 = vpop.permute.xlu0 %2848
        %2850 = vrot.lane.b32.xlu0 %v2622, 32
        %v2851 = vpop.permute.xlu0 %2850
        %2852 = vrot.lane.b32.xlu0 %v2625, 32
        %v2853 = vpop.permute.xlu0 %2852
        %2854 = vrot.lane.b32.xlu0 %v2627, 32
        %v2855 = vpop.permute.xlu0 %2854
        %2856 = vrot.lane.b32.xlu0 %v2630, 32
        %v2857 = vpop.permute.xlu0 %2856
        %2858 = vrot.lane.b32.xlu0 %v2632, 32
        %v2859 = vpop.permute.xlu0 %2858
        %2860 = vrot.lane.b32.xlu0 %v2635, 32
        %v2861 = vpop.permute.xlu0 %2860
        %2862 = vrot.lane.b32.xlu0 %v2637, 32
        %v2863 = vpop.permute.xlu0 %2862
        %2864 = vrot.lane.b32.xlu0 %v2640, 32
        %v2865 = vpop.permute.xlu0 %2864
        %2866 = vrot.lane.b32.xlu0 %v2642, 32
        %v2867 = vpop.permute.xlu0 %2866
        %2868 = vrot.lane.b32.xlu0 %v2645, 32
        %v2869 = vpop.permute.xlu0 %2868
        %2870 = vrot.lane.b32.xlu0 %v2647, 32
        %v2871 = vpop.permute.xlu0 %2870
        %2872 = vrot.lane.b32.xlu0 %v2650, 32
        %v2873 = vpop.permute.xlu0 %2872
        %2874 = vrot.lane.b32.xlu0 %v2652, 32
        %v2875 = vpop.permute.xlu0 %2874
        %2876 = vrot.lane.b32.xlu0 %v2655, 32
        %v2877 = vpop.permute.xlu0 %2876
        %2878 = vrot.lane.b32.xlu0 %v2657, 32
        %v2879 = vpop.permute.xlu0 %2878
        %2880 = vrot.lane.b32.xlu0 %v2660, 32
        %v2881 = vpop.permute.xlu0 %2880
        %2882 = vrot.lane.b32.xlu0 %v2662, 32
        %v2883 = vpop.permute.xlu0 %2882
        %2884 = vrot.lane.b32.xlu0 %v2665, 32
        %v2885 = vpop.permute.xlu0 %2884
        %2886 = vrot.lane.b32.xlu0 %v2667, 32
        %v2887 = vpop.permute.xlu0 %2886
        %2888 = vrot.lane.b32.xlu0 %v2670, 32
        %v2889 = vpop.permute.xlu0 %2888
        %2890 = vrot.lane.b32.xlu0 %v2672, 32
        %v2891 = vpop.permute.xlu0 %2890
        %2892 = vrot.lane.b32.xlu0 %v2675, 32
        %v2893 = vpop.permute.xlu0 %2892
        %2894 = vrot.lane.b32.xlu0 %v2677, 32
        %v2895 = vpop.permute.xlu0 %2894
        %2928 = vrot.lane.b32.xlu0 %v2401, 48
        %v2929 = vpop.permute.xlu0 %2928
        %2930 = vrot.lane.b32.xlu0 %v2402, 48
        %v2931 = vpop.permute.xlu0 %2930
        %2932 = vrot.lane.b32.xlu0 %v2404, 48
        %v2933 = vpop.permute.xlu0 %2932
        %2934 = vrot.lane.b32.xlu0 %v2405, 48
        %v2935 = vpop.permute.xlu0 %2934
        %2936 = vrot.lane.b32.xlu0 %v2407, 48
        %v2937 = vpop.permute.xlu0 %2936
        %2938 = vrot.lane.b32.xlu0 %v2408, 48
        %v2939 = vpop.permute.xlu0 %2938
        %2940 = vrot.lane.b32.xlu0 %v2410, 48
        %v2941 = vpop.permute.xlu0 %2940
        %2942 = vrot.lane.b32.xlu0 %v2411, 48
        %v2943 = vpop.permute.xlu0 %2942
        %2944 = vrot.lane.b32.xlu0 %v2413, 48
        %v2945 = vpop.permute.xlu0 %2944
        %2946 = vrot.lane.b32.xlu0 %v2414, 48
        %v2947 = vpop.permute.xlu0 %2946
        %2948 = vrot.lane.b32.xlu0 %v2416, 48
        %v2949 = vpop.permute.xlu0 %2948
        %2950 = vrot.lane.b32.xlu0 %v2417, 48
        %v2951 = vpop.permute.xlu0 %2950
        %2952 = vrot.lane.b32.xlu0 %v2419, 48
        %v2953 = vpop.permute.xlu0 %2952
        %2954 = vrot.lane.b32.xlu0 %v2420, 48
        %v2955 = vpop.permute.xlu0 %2954
        %2956 = vrot.lane.b32.xlu0 %v2422, 48
        %v2957 = vpop.permute.xlu0 %2956
        %2958 = vrot.lane.b32.xlu0 %v2423, 48
        %v2959 = vpop.permute.xlu0 %2958
        %2960 = vrot.lane.b32.xlu0 %v2425, 48
        %v2961 = vpop.permute.xlu0 %2960
        %2962 = vrot.lane.b32.xlu0 %v2426, 48
        %v2963 = vpop.permute.xlu0 %2962
        %2964 = vrot.lane.b32.xlu0 %v2428, 48
        %v2965 = vpop.permute.xlu0 %2964
        %2966 = vrot.lane.b32.xlu0 %v2429, 48
        %v2967 = vpop.permute.xlu0 %2966
        %2968 = vrot.lane.b32.xlu0 %v2431, 48
        %v2969 = vpop.permute.xlu0 %2968
        %2970 = vrot.lane.b32.xlu0 %v2432, 48
        %v2971 = vpop.permute.xlu0 %2970
        %2972 = vrot.lane.b32.xlu0 %v2434, 48
        %v2973 = vpop.permute.xlu0 %2972
        %2974 = vrot.lane.b32.xlu0 %v2435, 48
        %v2975 = vpop.permute.xlu0 %2974
        %2976 = vrot.lane.b32.xlu0 %v2437, 48
        %v2977 = vpop.permute.xlu0 %2976
        %2978 = vrot.lane.b32.xlu0 %v2438, 48
        %v2979 = vpop.permute.xlu0 %2978
        %2980 = vrot.lane.b32.xlu0 %v2440, 48
        %v2981 = vpop.permute.xlu0 %2980
        %2982 = vrot.lane.b32.xlu0 %v2441, 48
        %v2983 = vpop.permute.xlu0 %2982
        %2984 = vrot.lane.b32.xlu0 %v2443, 48
        %v2985 = vpop.permute.xlu0 %2984
        %2986 = vrot.lane.b32.xlu0 %v2444, 48
        %v2987 = vpop.permute.xlu0 %2986
        %2988 = vrot.lane.b32.xlu0 %v2446, 48
        %v2989 = vpop.permute.xlu0 %2988
        %2990 = vrot.lane.b32.xlu0 %v2447, 48
        %v2991 = vpop.permute.xlu0 %2990
        %3024 = vrot.lane.b32.xlu0 %v2525, 64
        %v3025 = vpop.permute.xlu0 %3024
        %3026 = vrot.lane.b32.xlu0 %v2527, 64
        %v3027 = vpop.permute.xlu0 %3026
        %3028 = vrot.lane.b32.xlu0 %v2530, 64
        %v3029 = vpop.permute.xlu0 %3028
        %3030 = vrot.lane.b32.xlu0 %v2532, 64
        %v3031 = vpop.permute.xlu0 %3030
        %3032 = vrot.lane.b32.xlu0 %v2535, 64
        %v3033 = vpop.permute.xlu0 %3032
        %3034 = vrot.lane.b32.xlu0 %v2537, 64
        %v3035 = vpop.permute.xlu0 %3034
        %3036 = vrot.lane.b32.xlu0 %v2540, 64
        %v3037 = vpop.permute.xlu0 %3036
        %3038 = vrot.lane.b32.xlu0 %v2542, 64
        %v3039 = vpop.permute.xlu0 %3038
        %3040 = vrot.lane.b32.xlu0 %v2545, 64
        %v3041 = vpop.permute.xlu0 %3040
        %3042 = vrot.lane.b32.xlu0 %v2547, 64
        %v3043 = vpop.permute.xlu0 %3042
        %3044 = vrot.lane.b32.xlu0 %v2550, 64
        %v3045 = vpop.permute.xlu0 %3044
        %3046 = vrot.lane.b32.xlu0 %v2552, 64
        %v3047 = vpop.permute.xlu0 %3046
        %3048 = vrot.lane.b32.xlu0 %v2555, 64
        %v3049 = vpop.permute.xlu0 %3048
        %3050 = vrot.lane.b32.xlu0 %v2557, 64
        %v3051 = vpop.permute.xlu0 %3050
        %3052 = vrot.lane.b32.xlu0 %v2560, 64
        %v3053 = vpop.permute.xlu0 %3052
        %3054 = vrot.lane.b32.xlu0 %v2562, 64
        %v3055 = vpop.permute.xlu0 %3054
        %3056 = vrot.lane.b32.xlu0 %v2565, 64
        %v3057 = vpop.permute.xlu0 %3056
        %3058 = vrot.lane.b32.xlu0 %v2567, 64
        %v3059 = vpop.permute.xlu0 %3058
        %3060 = vrot.lane.b32.xlu0 %v2570, 64
        %v3061 = vpop.permute.xlu0 %3060
        %3062 = vrot.lane.b32.xlu0 %v2572, 64
        %v3063 = vpop.permute.xlu0 %3062
        %3064 = vrot.lane.b32.xlu0 %v2575, 64
        %v3065 = vpop.permute.xlu0 %3064
        %3066 = vrot.lane.b32.xlu0 %v2577, 64
        %v3067 = vpop.permute.xlu0 %3066
        %3068 = vrot.lane.b32.xlu0 %v2580, 64
        %v3069 = vpop.permute.xlu0 %3068
        %3070 = vrot.lane.b32.xlu0 %v2582, 64
        %v3071 = vpop.permute.xlu0 %3070
        %3072 = vrot.lane.b32.xlu0 %v2585, 64
        %v3073 = vpop.permute.xlu0 %3072
        %3074 = vrot.lane.b32.xlu0 %v2587, 64
        %v3075 = vpop.permute.xlu0 %3074
        %3076 = vrot.lane.b32.xlu0 %v2590, 64
        %v3077 = vpop.permute.xlu0 %3076
        %3078 = vrot.lane.b32.xlu0 %v2592, 64
        %v3079 = vpop.permute.xlu0 %3078
        %3080 = vrot.lane.b32.xlu0 %v2595, 64
        %v3081 = vpop.permute.xlu0 %3080
        %3082 = vrot.lane.b32.xlu0 %v2597, 64
        %v3083 = vpop.permute.xlu0 %3082
        %3084 = vrot.lane.b32.xlu0 %v2683, 64
        %v3085 = vpop.permute.xlu0 %3084
        %3086 = vrot.lane.b32.xlu0 %v2685, 64
        %v3087 = vpop.permute.xlu0 %3086
        %3120 = vrot.lane.b32.xlu0 %v2605, 80
        %v3121 = vpop.permute.xlu0 %3120
        %3122 = vrot.lane.b32.xlu0 %v2607, 80
        %v3123 = vpop.permute.xlu0 %3122
        %3124 = vrot.lane.b32.xlu0 %v2610, 80
        %v3125 = vpop.permute.xlu0 %3124
        %3126 = vrot.lane.b32.xlu0 %v2612, 80
        %v3127 = vpop.permute.xlu0 %3126
        %3128 = vrot.lane.b32.xlu0 %v2615, 80
        %v3129 = vpop.permute.xlu0 %3128
        %3130 = vrot.lane.b32.xlu0 %v2617, 80
        %v3131 = vpop.permute.xlu0 %3130
        %3132 = vrot.lane.b32.xlu0 %v2620, 80
        %v3133 = vpop.permute.xlu0 %3132
        %3134 = vrot.lane.b32.xlu0 %v2622, 80
        %v3135 = vpop.permute.xlu0 %3134
        %3136 = vrot.lane.b32.xlu0 %v2625, 80
        %v3137 = vpop.permute.xlu0 %3136
        %3138 = vrot.lane.b32.xlu0 %v2627, 80
        %v3139 = vpop.permute.xlu0 %3138
        %3140 = vrot.lane.b32.xlu0 %v2630, 80
        %v3141 = vpop.permute.xlu0 %3140
        %3142 = vrot.lane.b32.xlu0 %v2632, 80
        %v3143 = vpop.permute.xlu0 %3142
        %3144 = vrot.lane.b32.xlu0 %v2635, 80
        %v3145 = vpop.permute.xlu0 %3144
        %3146 = vrot.lane.b32.xlu0 %v2637, 80
        %v3147 = vpop.permute.xlu0 %3146
        %3148 = vrot.lane.b32.xlu0 %v2640, 80
        %v3149 = vpop.permute.xlu0 %3148
        %3150 = vrot.lane.b32.xlu0 %v2642, 80
        %v3151 = vpop.permute.xlu0 %3150
        %3152 = vrot.lane.b32.xlu0 %v2645, 80
        %v3153 = vpop.permute.xlu0 %3152
        %3154 = vrot.lane.b32.xlu0 %v2647, 80
        %v3155 = vpop.permute.xlu0 %3154
        %3156 = vrot.lane.b32.xlu0 %v2650, 80
        %v3157 = vpop.permute.xlu0 %3156
        %3158 = vrot.lane.b32.xlu0 %v2652, 80
        %v3159 = vpop.permute.xlu0 %3158
        %3160 = vrot.lane.b32.xlu0 %v2655, 80
        %v3161 = vpop.permute.xlu0 %3160
        %3162 = vrot.lane.b32.xlu0 %v2657, 80
        %v3163 = vpop.permute.xlu0 %3162
        %3164 = vrot.lane.b32.xlu0 %v2660, 80
        %v3165 = vpop.permute.xlu0 %3164
        %3166 = vrot.lane.b32.xlu0 %v2662, 80
        %v3167 = vpop.permute.xlu0 %3166
        %3168 = vrot.lane.b32.xlu0 %v2665, 80
        %v3169 = vpop.permute.xlu0 %3168
        %3170 = vrot.lane.b32.xlu0 %v2667, 80
        %v3171 = vpop.permute.xlu0 %3170
        %3172 = vrot.lane.b32.xlu0 %v2670, 80
        %v3173 = vpop.permute.xlu0 %3172
        %3174 = vrot.lane.b32.xlu0 %v2672, 80
        %v3175 = vpop.permute.xlu0 %3174
        %3176 = vrot.lane.b32.xlu0 %v2675, 80
        %v3177 = vpop.permute.xlu0 %3176
        %3178 = vrot.lane.b32.xlu0 %v2677, 80
        %v3179 = vpop.permute.xlu0 %3178
        %3180 = vrot.lane.b32.xlu0 %v2688, 80
        %v3181 = vpop.permute.xlu0 %3180
        %3182 = vrot.lane.b32.xlu0 %v2690, 80
        %v3183 = vpop.permute.xlu0 %3182
        %3216 = vrot.lane.b32.xlu0 %v2404, 96
        %v3217 = vpop.permute.xlu0 %3216
        %3218 = vrot.lane.b32.xlu0 %v2405, 96
        %v3219 = vpop.permute.xlu0 %3218
        %3220 = vrot.lane.b32.xlu0 %v2407, 96
        %v3221 = vpop.permute.xlu0 %3220
        %3222 = vrot.lane.b32.xlu0 %v2408, 96
        %v3223 = vpop.permute.xlu0 %3222
        %3224 = vrot.lane.b32.xlu0 %v2410, 96
        %v3225 = vpop.permute.xlu0 %3224
        %3226 = vrot.lane.b32.xlu0 %v2411, 96
        %v3227 = vpop.permute.xlu0 %3226
        %3228 = vrot.lane.b32.xlu0 %v2413, 96
        %v3229 = vpop.permute.xlu0 %3228
        %3230 = vrot.lane.b32.xlu0 %v2414, 96
        %v3231 = vpop.permute.xlu0 %3230
        %3232 = vrot.lane.b32.xlu0 %v2416, 96
        %v3233 = vpop.permute.xlu0 %3232
        %3234 = vrot.lane.b32.xlu0 %v2417, 96
        %v3235 = vpop.permute.xlu0 %3234
        %3236 = vrot.lane.b32.xlu0 %v2419, 96
        %v3237 = vpop.permute.xlu0 %3236
        %3238 = vrot.lane.b32.xlu0 %v2420, 96
        %v3239 = vpop.permute.xlu0 %3238
        %3240 = vrot.lane.b32.xlu0 %v2422, 96
        %v3241 = vpop.permute.xlu0 %3240
        %3242 = vrot.lane.b32.xlu0 %v2423, 96
        %v3243 = vpop.permute.xlu0 %3242
        %3244 = vrot.lane.b32.xlu0 %v2425, 96
        %v3245 = vpop.permute.xlu0 %3244
        %3246 = vrot.lane.b32.xlu0 %v2426, 96
        %v3247 = vpop.permute.xlu0 %3246
        %3248 = vrot.lane.b32.xlu0 %v2428, 96
        %v3249 = vpop.permute.xlu0 %3248
        %3250 = vrot.lane.b32.xlu0 %v2429, 96
        %v3251 = vpop.permute.xlu0 %3250
        %3252 = vrot.lane.b32.xlu0 %v2431, 96
        %v3253 = vpop.permute.xlu0 %3252
        %3254 = vrot.lane.b32.xlu0 %v2432, 96
        %v3255 = vpop.permute.xlu0 %3254
        %3256 = vrot.lane.b32.xlu0 %v2434, 96
        %v3257 = vpop.permute.xlu0 %3256
        %3258 = vrot.lane.b32.xlu0 %v2435, 96
        %v3259 = vpop.permute.xlu0 %3258
        %3260 = vrot.lane.b32.xlu0 %v2437, 96
        %v3261 = vpop.permute.xlu0 %3260
        %3262 = vrot.lane.b32.xlu0 %v2438, 96
        %v3263 = vpop.permute.xlu0 %3262
        %3264 = vrot.lane.b32.xlu0 %v2440, 96
        %v3265 = vpop.permute.xlu0 %3264
        %3266 = vrot.lane.b32.xlu0 %v2441, 96
        %v3267 = vpop.permute.xlu0 %3266
        %3268 = vrot.lane.b32.xlu0 %v2443, 96
        %v3269 = vpop.permute.xlu0 %3268
        %3270 = vrot.lane.b32.xlu0 %v2444, 96
        %v3271 = vpop.permute.xlu0 %3270
        %3272 = vrot.lane.b32.xlu0 %v2446, 96
        %v3273 = vpop.permute.xlu0 %3272
        %3274 = vrot.lane.b32.xlu0 %v2447, 96
        %v3275 = vpop.permute.xlu0 %3274
        %3276 = vrot.lane.b32.xlu0 %v2449, 96
        %v3277 = vpop.permute.xlu0 %3276
        %3278 = vrot.lane.b32.xlu0 %v2450, 96
        %v3279 = vpop.permute.xlu0 %3278
        %3312 = vrot.lane.b32.xlu0 %v2530, 112
        %v3313 = vpop.permute.xlu0 %3312
        %3314 = vrot.lane.b32.xlu0 %v2532, 112
        %v3315 = vpop.permute.xlu0 %3314
        %3316 = vrot.lane.b32.xlu0 %v2535, 112
        %v3317 = vpop.permute.xlu0 %3316
        %3318 = vrot.lane.b32.xlu0 %v2537, 112
        %v3319 = vpop.permute.xlu0 %3318
        %3320 = vrot.lane.b32.xlu0 %v2540, 112
        %v3321 = vpop.permute.xlu0 %3320
        %3322 = vrot.lane.b32.xlu0 %v2542, 112
        %v3323 = vpop.permute.xlu0 %3322
        %3324 = vrot.lane.b32.xlu0 %v2545, 112
        %v3325 = vpop.permute.xlu0 %3324
        %3326 = vrot.lane.b32.xlu0 %v2547, 112
        %v3327 = vpop.permute.xlu0 %3326
        %3328 = vrot.lane.b32.xlu0 %v2550, 112
        %v3329 = vpop.permute.xlu0 %3328
        %3330 = vrot.lane.b32.xlu0 %v2552, 112
        %v3331 = vpop.permute.xlu0 %3330
        %3332 = vrot.lane.b32.xlu0 %v2555, 112
        %v3333 = vpop.permute.xlu0 %3332
        %3334 = vrot.lane.b32.xlu0 %v2557, 112
        %v3335 = vpop.permute.xlu0 %3334
        %3336 = vrot.lane.b32.xlu0 %v2560, 112
        %v3337 = vpop.permute.xlu0 %3336
        %3338 = vrot.lane.b32.xlu0 %v2562, 112
        %v3339 = vpop.permute.xlu0 %3338
        %3340 = vrot.lane.b32.xlu0 %v2565, 112
        %v3341 = vpop.permute.xlu0 %3340
        %3342 = vrot.lane.b32.xlu0 %v2567, 112
        %v3343 = vpop.permute.xlu0 %3342
        %3344 = vrot.lane.b32.xlu0 %v2570, 112
        %v3345 = vpop.permute.xlu0 %3344
        %3346 = vrot.lane.b32.xlu0 %v2572, 112
        %v3347 = vpop.permute.xlu0 %3346
        %3348 = vrot.lane.b32.xlu0 %v2575, 112
        %v3349 = vpop.permute.xlu0 %3348
        %3350 = vrot.lane.b32.xlu0 %v2577, 112
        %v3351 = vpop.permute.xlu0 %3350
        %3352 = vrot.lane.b32.xlu0 %v2580, 112
        %v3353 = vpop.permute.xlu0 %3352
        %3354 = vrot.lane.b32.xlu0 %v2582, 112
        %v3355 = vpop.permute.xlu0 %3354
        %3356 = vrot.lane.b32.xlu0 %v2585, 112
        %v3357 = vpop.permute.xlu0 %3356
        %3358 = vrot.lane.b32.xlu0 %v2587, 112
        %v3359 = vpop.permute.xlu0 %3358
        %3360 = vrot.lane.b32.xlu0 %v2590, 112
        %v3361 = vpop.permute.xlu0 %3360
        %3362 = vrot.lane.b32.xlu0 %v2592, 112
        %v3363 = vpop.permute.xlu0 %3362
        %3364 = vrot.lane.b32.xlu0 %v2595, 112
        %v3365 = vpop.permute.xlu0 %3364
        %3366 = vrot.lane.b32.xlu0 %v2597, 112
        %v3367 = vpop.permute.xlu0 %3366
        %3368 = vrot.lane.b32.xlu0 %v2683, 112
        %v3369 = vpop.permute.xlu0 %3368
        %3370 = vrot.lane.b32.xlu0 %v2685, 112
        %v3371 = vpop.permute.xlu0 %3370
        %3372 = vrot.lane.b32.xlu0 %v2696, 112
        %v3373 = vpop.permute.xlu0 %3372
        %3374 = vrot.lane.b32.xlu0 %v2698, 112
        %v3375 = vpop.permute.xlu0 %3374
        %v3408 = vsel %vm1351, %v2398, %v2737
        %v3409 = vsel %vm1351, %v2399, %v2739
        %v3410 = vsel %vm1351, %v2401, %v2741
        %v3411 = vsel %vm1351, %v2402, %v2743
        %v3412 = vsel %vm1351, %v2404, %v2745
        %v3413 = vsel %vm1351, %v2405, %v2747
        %v3414 = vsel %vm1351, %v2407, %v2749
        %v3415 = vsel %vm1351, %v2408, %v2751
        %v3416 = vsel %vm1351, %v2410, %v2753
        %v3417 = vsel %vm1351, %v2411, %v2755
        %v3418 = vsel %vm1351, %v2413, %v2757
        %v3419 = vsel %vm1351, %v2414, %v2759
        %v3420 = vsel %vm1351, %v2416, %v2761
        %v3421 = vsel %vm1351, %v2417, %v2763
        %v3422 = vsel %vm1351, %v2419, %v2765
        %v3423 = vsel %vm1351, %v2420, %v2767
        %v3424 = vsel %vm1351, %v2422, %v2769
        %v3425 = vsel %vm1351, %v2423, %v2771
        %v3426 = vsel %vm1351, %v2425, %v2773
        %v3427 = vsel %vm1351, %v2426, %v2775
        %v3428 = vsel %vm1351, %v2428, %v2777
        %v3429 = vsel %vm1351, %v2429, %v2779
        %v3430 = vsel %vm1351, %v2431, %v2781
        %v3431 = vsel %vm1351, %v2432, %v2783
        %v3432 = vsel %vm1351, %v2434, %v2785
        %v3433 = vsel %vm1351, %v2435, %v2787
        %v3434 = vsel %vm1351, %v2437, %v2789
        %v3435 = vsel %vm1351, %v2438, %v2791
        %v3436 = vsel %vm1351, %v2440, %v2793
        %v3437 = vsel %vm1351, %v2441, %v2795
        %v3438 = vsel %vm1351, %v2443, %v2797
        %v3439 = vsel %vm1351, %v2444, %v2799
        %v3440 = vsel %vm1384, %v3408, %v2833
        %v3441 = vsel %vm1384, %v3409, %v2835
        %v3442 = vsel %vm1384, %v3410, %v2837
        %v3443 = vsel %vm1384, %v3411, %v2839
        %v3444 = vsel %vm1384, %v3412, %v2841
        %v3445 = vsel %vm1384, %v3413, %v2843
        %v3446 = vsel %vm1384, %v3414, %v2845
        %v3447 = vsel %vm1384, %v3415, %v2847
        %v3448 = vsel %vm1384, %v3416, %v2849
        %v3449 = vsel %vm1384, %v3417, %v2851
        %v3450 = vsel %vm1384, %v3418, %v2853
        %v3451 = vsel %vm1384, %v3419, %v2855
        %v3452 = vsel %vm1384, %v3420, %v2857
        %v3453 = vsel %vm1384, %v3421, %v2859
        %v3454 = vsel %vm1384, %v3422, %v2861
        %v3455 = vsel %vm1384, %v3423, %v2863
        %v3456 = vsel %vm1384, %v3424, %v2865
        %v3457 = vsel %vm1384, %v3425, %v2867
        %v3458 = vsel %vm1384, %v3426, %v2869
        %v3459 = vsel %vm1384, %v3427, %v2871
        %v3460 = vsel %vm1384, %v3428, %v2873
        %v3461 = vsel %vm1384, %v3429, %v2875
        %v3462 = vsel %vm1384, %v3430, %v2877
        %v3463 = vsel %vm1384, %v3431, %v2879
        %v3464 = vsel %vm1384, %v3432, %v2881
        %v3465 = vsel %vm1384, %v3433, %v2883
        %v3466 = vsel %vm1384, %v3434, %v2885
        %v3467 = vsel %vm1384, %v3435, %v2887
        %v3468 = vsel %vm1384, %v3436, %v2889
        %v3469 = vsel %vm1384, %v3437, %v2891
        %v3470 = vsel %vm1384, %v3438, %v2893
        %v3471 = vsel %vm1384, %v3439, %v2895
        %v3472 = vsel %vm1417, %v3440, %v2929
        %v3473 = vsel %vm1417, %v3441, %v2931
        %v3474 = vsel %vm1417, %v3442, %v2933
        %v3475 = vsel %vm1417, %v3443, %v2935
        %v3476 = vsel %vm1417, %v3444, %v2937
        %v3477 = vsel %vm1417, %v3445, %v2939
        %v3478 = vsel %vm1417, %v3446, %v2941
        %v3479 = vsel %vm1417, %v3447, %v2943
        %v3480 = vsel %vm1417, %v3448, %v2945
        %v3481 = vsel %vm1417, %v3449, %v2947
        %v3482 = vsel %vm1417, %v3450, %v2949
        %v3483 = vsel %vm1417, %v3451, %v2951
        %v3484 = vsel %vm1417, %v3452, %v2953
        %v3485 = vsel %vm1417, %v3453, %v2955
        %v3486 = vsel %vm1417, %v3454, %v2957
        %v3487 = vsel %vm1417, %v3455, %v2959
        %v3488 = vsel %vm1417, %v3456, %v2961
        %v3489 = vsel %vm1417, %v3457, %v2963
        %v3490 = vsel %vm1417, %v3458, %v2965
        %v3491 = vsel %vm1417, %v3459, %v2967
        %v3492 = vsel %vm1417, %v3460, %v2969
        %v3493 = vsel %vm1417, %v3461, %v2971
        %v3494 = vsel %vm1417, %v3462, %v2973
        %v3495 = vsel %vm1417, %v3463, %v2975
        %v3496 = vsel %vm1417, %v3464, %v2977
        %v3497 = vsel %vm1417, %v3465, %v2979
        %v3498 = vsel %vm1417, %v3466, %v2981
        %v3499 = vsel %vm1417, %v3467, %v2983
        %v3500 = vsel %vm1417, %v3468, %v2985
        %v3501 = vsel %vm1417, %v3469, %v2987
        %v3502 = vsel %vm1417, %v3470, %v2989
        %v3503 = vsel %vm1417, %v3471, %v2991
        %v3504 = vsel %vm1450, %v3472, %v3025
        %v3505 = vsel %vm1450, %v3473, %v3027
        %v3506 = vsel %vm1450, %v3474, %v3029
        %v3507 = vsel %vm1450, %v3475, %v3031
        %v3508 = vsel %vm1450, %v3476, %v3033
        %v3509 = vsel %vm1450, %v3477, %v3035
        %v3510 = vsel %vm1450, %v3478, %v3037
        %v3511 = vsel %vm1450, %v3479, %v3039
        %v3512 = vsel %vm1450, %v3480, %v3041
        %v3513 = vsel %vm1450, %v3481, %v3043
        %v3514 = vsel %vm1450, %v3482, %v3045
        %v3515 = vsel %vm1450, %v3483, %v3047
        %v3516 = vsel %vm1450, %v3484, %v3049
        %v3517 = vsel %vm1450, %v3485, %v3051
        %v3518 = vsel %vm1450, %v3486, %v3053
        %v3519 = vsel %vm1450, %v3487, %v3055
        %v3520 = vsel %vm1450, %v3488, %v3057
        %v3521 = vsel %vm1450, %v3489, %v3059
        %v3522 = vsel %vm1450, %v3490, %v3061
        %v3523 = vsel %vm1450, %v3491, %v3063
        %v3524 = vsel %vm1450, %v3492, %v3065
        %v3525 = vsel %vm1450, %v3493, %v3067
        %v3526 = vsel %vm1450, %v3494, %v3069
        %v3527 = vsel %vm1450, %v3495, %v3071
        %v3528 = vsel %vm1450, %v3496, %v3073
        %v3529 = vsel %vm1450, %v3497, %v3075
        %v3530 = vsel %vm1450, %v3498, %v3077
        %v3531 = vsel %vm1450, %v3499, %v3079
        %v3532 = vsel %vm1450, %v3500, %v3081
        %v3533 = vsel %vm1450, %v3501, %v3083
        %v3534 = vsel %vm1450, %v3502, %v3085
        %v3535 = vsel %vm1450, %v3503, %v3087
        %v3536 = vsel %vm1483, %v3504, %v3121
        %v3537 = vsel %vm1483, %v3505, %v3123
        %v3538 = vsel %vm1483, %v3506, %v3125
        %v3539 = vsel %vm1483, %v3507, %v3127
        %v3540 = vsel %vm1483, %v3508, %v3129
        %v3541 = vsel %vm1483, %v3509, %v3131
        %v3542 = vsel %vm1483, %v3510, %v3133
        %v3543 = vsel %vm1483, %v3511, %v3135
        %v3544 = vsel %vm1483, %v3512, %v3137
        %v3545 = vsel %vm1483, %v3513, %v3139
        %v3546 = vsel %vm1483, %v3514, %v3141
        %v3547 = vsel %vm1483, %v3515, %v3143
        %v3548 = vsel %vm1483, %v3516, %v3145
        %v3549 = vsel %vm1483, %v3517, %v3147
        %v3550 = vsel %vm1483, %v3518, %v3149
        %v3551 = vsel %vm1483, %v3519, %v3151
        %v3552 = vsel %vm1483, %v3520, %v3153
        %v3553 = vsel %vm1483, %v3521, %v3155
        %v3554 = vsel %vm1483, %v3522, %v3157
        %v3555 = vsel %vm1483, %v3523, %v3159
        %v3556 = vsel %vm1483, %v3524, %v3161
        %v3557 = vsel %vm1483, %v3525, %v3163
        %v3558 = vsel %vm1483, %v3526, %v3165
        %v3559 = vsel %vm1483, %v3527, %v3167
        %v3560 = vsel %vm1483, %v3528, %v3169
        %v3561 = vsel %vm1483, %v3529, %v3171
        %v3562 = vsel %vm1483, %v3530, %v3173
        %v3563 = vsel %vm1483, %v3531, %v3175
        %v3564 = vsel %vm1483, %v3532, %v3177
        %v3565 = vsel %vm1483, %v3533, %v3179
        %v3566 = vsel %vm1483, %v3534, %v3181
        %v3567 = vsel %vm1483, %v3535, %v3183
        %v3568 = vsel %vm1516, %v3536, %v3217
        %v3569 = vsel %vm1516, %v3537, %v3219
        %v3570 = vsel %vm1516, %v3538, %v3221
        %v3571 = vsel %vm1516, %v3539, %v3223
        %v3572 = vsel %vm1516, %v3540, %v3225
        %v3573 = vsel %vm1516, %v3541, %v3227
        %v3574 = vsel %vm1516, %v3542, %v3229
        %v3575 = vsel %vm1516, %v3543, %v3231
        %v3576 = vsel %vm1516, %v3544, %v3233
        %v3577 = vsel %vm1516, %v3545, %v3235
        %v3578 = vsel %vm1516, %v3546, %v3237
        %v3579 = vsel %vm1516, %v3547, %v3239
        %v3580 = vsel %vm1516, %v3548, %v3241
        %v3581 = vsel %vm1516, %v3549, %v3243
        %v3582 = vsel %vm1516, %v3550, %v3245
        %v3583 = vsel %vm1516, %v3551, %v3247
        %v3584 = vsel %vm1516, %v3552, %v3249
        %v3585 = vsel %vm1516, %v3553, %v3251
        %v3586 = vsel %vm1516, %v3554, %v3253
        %v3587 = vsel %vm1516, %v3555, %v3255
        %v3588 = vsel %vm1516, %v3556, %v3257
        %v3589 = vsel %vm1516, %v3557, %v3259
        %v3590 = vsel %vm1516, %v3558, %v3261
        %v3591 = vsel %vm1516, %v3559, %v3263
        %v3592 = vsel %vm1516, %v3560, %v3265
        %v3593 = vsel %vm1516, %v3561, %v3267
        %v3594 = vsel %vm1516, %v3562, %v3269
        %v3595 = vsel %vm1516, %v3563, %v3271
        %v3596 = vsel %vm1516, %v3564, %v3273
        %v3597 = vsel %vm1516, %v3565, %v3275
        %v3598 = vsel %vm1516, %v3566, %v3277
        %v3599 = vsel %vm1516, %v3567, %v3279
        %v3600 = vsel %vm1549, %v3568, %v3313
        %v3601 = vsel %vm1549, %v3569, %v3315
        %v3602 = vsel %vm1549, %v3570, %v3317
        %v3603 = vsel %vm1549, %v3571, %v3319
        %v3604 = vsel %vm1549, %v3572, %v3321
        %v3605 = vsel %vm1549, %v3573, %v3323
        %v3606 = vsel %vm1549, %v3574, %v3325
        %v3607 = vsel %vm1549, %v3575, %v3327
        %v3608 = vsel %vm1549, %v3576, %v3329
        %v3609 = vsel %vm1549, %v3577, %v3331
        %v3610 = vsel %vm1549, %v3578, %v3333
        %v3611 = vsel %vm1549, %v3579, %v3335
        %v3612 = vsel %vm1549, %v3580, %v3337
        %v3613 = vsel %vm1549, %v3581, %v3339
        %v3614 = vsel %vm1549, %v3582, %v3341
        %v3615 = vsel %vm1549, %v3583, %v3343
        %v3616 = vsel %vm1549, %v3584, %v3345
        %v3617 = vsel %vm1549, %v3585, %v3347
        %v3618 = vsel %vm1549, %v3586, %v3349
        %v3619 = vsel %vm1549, %v3587, %v3351
        %v3620 = vsel %vm1549, %v3588, %v3353
        %v3621 = vsel %vm1549, %v3589, %v3355
        %v3622 = vsel %vm1549, %v3590, %v3357
        %v3623 = vsel %vm1549, %v3591, %v3359
        %v3624 = vsel %vm1549, %v3592, %v3361
        %v3625 = vsel %vm1549, %v3593, %v3363
        %v3626 = vsel %vm1549, %v3594, %v3365
        %v3627 = vsel %vm1549, %v3595, %v3367
        %v3628 = vsel %vm1549, %v3596, %v3369
        %v3629 = vsel %vm1549, %v3597, %v3371
        %v3630 = vsel %vm1549, %v3598, %v3373
        %v3631 = vsel %vm1549, %v3599, %v3375
        %v3632 = vpack.c.bf16 %v3601, %v3600
        %v3633 = vpack.c.bf16 %v2612, %v2610
        %v3634 = vpack.c.bf16 %v3603, %v3602
        %v3635 = vpack.c.bf16 %v2617, %v2615
        %v3636 = vpack.c.bf16 %v3605, %v3604
        %v3637 = vpack.c.bf16 %v2622, %v2620
        %v3638 = vpack.c.bf16 %v3607, %v3606
        %v3639 = vpack.c.bf16 %v2627, %v2625
        %v3640 = vpack.c.bf16 %v3609, %v3608
        %v3641 = vpack.c.bf16 %v2632, %v2630
        %v3642 = vpack.c.bf16 %v3611, %v3610
        %v3643 = vpack.c.bf16 %v2637, %v2635
        %v3644 = vpack.c.bf16 %v3613, %v3612
        %v3645 = vpack.c.bf16 %v2642, %v2640
        %v3646 = vpack.c.bf16 %v3615, %v3614
        %v3647 = vpack.c.bf16 %v2647, %v2645
        %v3648 = vpack.c.bf16 %v3617, %v3616
        %v3649 = vpack.c.bf16 %v2652, %v2650
        %v3650 = vpack.c.bf16 %v3619, %v3618
        %v3651 = vpack.c.bf16 %v2657, %v2655
        %v3652 = vpack.c.bf16 %v3621, %v3620
        %v3653 = vpack.c.bf16 %v2662, %v2660
        %v3654 = vpack.c.bf16 %v3623, %v3622
        %v3655 = vpack.c.bf16 %v2667, %v2665
        %v3656 = vpack.c.bf16 %v3625, %v3624
        %v3657 = vpack.c.bf16 %v2672, %v2670
        %v3658 = vpack.c.bf16 %v3627, %v3626
        %v3659 = vpack.c.bf16 %v2677, %v2675
        %v3660 = vpack.c.bf16 %v3629, %v3628
        %v3661 = vpack.c.bf16 %v2690, %v2688
        %v3662 = vpack.c.bf16 %v3631, %v3630
        %v3663 = vpack.c.bf16 %v2703, %v2701
        %v3682 = vunpack.c.l.b16 %v2452
        %v3683 = vunpack.c.l.b16 %v2453
        %v3684 = vunpack.c.l.b16 %v2454
        %v3685 = vunpack.c.l.b16 %v2455
        %v3686 = vunpack.c.l.b16 %v2456
        %v3687 = vunpack.c.l.b16 %v2457
        %v3688 = vunpack.c.l.b16 %v2458
        %v3689 = vunpack.c.l.b16 %v2459
        %v3690 = vunpack.c.l.b16 %v2460
        %v3691 = vunpack.c.l.b16 %v2461
        %v3692 = vunpack.c.l.b16 %v2462
        %v3693 = vunpack.c.l.b16 %v2463
        %v3694 = vunpack.c.l.b16 %v2464
        %v3695 = vunpack.c.l.b16 %v2465
        %v3696 = vunpack.c.l.b16 %v2466
        %v3697 = vunpack.c.l.b16 %v2467
        %v3698 = vunpack.c.l.b16 %v2468
        %v3699 = vunpack.c.l.b16 %v2469
        %v3700 = vpack.c.b16 %v3683, %v3682
        %v3701 = vpack.c.b16 %v3685, %v3684
        %v3702 = vpack.c.b16 %v3687, %v3686
        %v3703 = vpack.c.b16 %v3689, %v3688
        %v3704 = vpack.c.b16 %v3691, %v3690
        %v3705 = vpack.c.b16 %v3693, %v3692
        %v3706 = vpack.c.b16 %v3695, %v3694
        %v3707 = vpack.c.b16 %v3697, %v3696
        %v3708 = vpack.c.b16 %v3699, %v3698
        %v3719 = vsel %vm1351, %v3633, 0
        %v3722 = vsel %vm1351, %v3635, 0
        %v3725 = vsel %vm1351, %v3637, 0
        %v3728 = vsel %vm1351, %v3639, 0
        %v3731 = vsel %vm1351, %v3641, 0
        %v3734 = vsel %vm1351, %v3643, 0
        %v3737 = vsel %vm1351, %v3645, 0
        %v3740 = vsel %vm1351, %v3647, 0
        %v3743 = vsel %vm1351, %v3649, 0
        %v3746 = vsel %vm1351, %v3651, 0
        %v3749 = vsel %vm1351, %v3653, 0
        %v3752 = vsel %vm1351, %v3655, 0
        %v3755 = vsel %vm1351, %v3657, 0
        %v3758 = vsel %vm1351, %v3659, 0
        %v3761 = vsel %vm1351, %v3661, 0
        %v3764 = vsel %vm1351, %v3663, 0
        %3766 = vmatprep.subr.bf16.mxu0 0
        %3767 = vmatpush1.bf16.msra.mxu0 %v3707
        %3768 = vmatprep.subr.bf16.mxu0 0
        %3769 = vmatpush1.bf16.msra.mxu0 %v3706
        %3770 = vmatprep.subr.bf16.mxu0 0
        %3771 = vmatpush1.bf16.msra.mxu0 %v3705
        %3772 = vmatprep.subr.bf16.mxu0 0
        %3773 = vmatpush1.bf16.msra.mxu0 %v3704
        %3774 = vmatprep.subr.bf16.mxu0 0
        %3775 = vmatpush1.bf16.msra.mxu0 %v3703
        %3776 = vmatprep.subr.bf16.mxu0 0
        %3777 = vmatpush1.bf16.msra.mxu0 %v3702
        %3778 = vmatprep.subr.bf16.mxu0 0
        %3779 = vmatpush1.bf16.msra.mxu0 %v3701
        %3780 = vmatprep.subr.bf16.mxu0 0
        %3781 = vmatpush1.bf16.msra.mxu0 %v3700
        %3782 = vmatprep.subr.bf16.mxu0 0
        %3783 = vmatpush2.bf16.msra.mxu0 0
        %3784 = vmatprep.subr.bf16.mxu0 0
        %3785 = vmatpush2.bf16.msra.mxu0 0
        %3786 = vmatprep.subr.bf16.mxu0 0
        %3787 = vmatpush2.bf16.msra.mxu0 0
        %3788 = vmatprep.subr.bf16.mxu0 0
        %3789 = vmatpush2.bf16.msra.mxu0 0
        %3790 = vmatprep.subr.bf16.mxu0 0
        %3791 = vmatpush2.bf16.msra.mxu0 0
        %3792 = vmatprep.subr.bf16.mxu0 0
        %3793 = vmatpush2.bf16.msra.mxu0 0
        %3794 = vmatprep.subr.bf16.mxu0 0
        %3795 = vmatpush2.bf16.msra.mxu0 0
        %3796 = vmatprep.subr.bf16.mxu0 0
        %3797 = vmatpush2.bf16.msra.mxu0 %v3708
        %3798 = vmatprep.mubr.bf16.mxu0 %v3719
        %3799 = vmatmul.mubr.bf16.gmra.mxu0 %v3632
        %v3800 = vpop.f32.mrf.mxu0
        %v3801 = vadd.f32 0.0, %v3800
        %v3802 = vpop.f32.mrf.mxu0
        %v3803 = vpop.f32.mrf.mxu0
        %v3804 = vadd.f32 0.0, %v3803
        %v3805 = vpop.f32.mrf.mxu0
        %3806 = vmatprep.mubr.bf16.mxu0 %v3722
        %3807 = vmatmul.mubr.bf16.gmra.mxu0 %v3634
        %v3808 = vpop.f32.mrf.mxu0
        %v3809 = vadd.f32 0.0, %v3808
        %v3810 = vpop.f32.mrf.mxu0
        %v3811 = vpop.f32.mrf.mxu0
        %v3812 = vadd.f32 0.0, %v3811
        %v3813 = vpop.f32.mrf.mxu0
        %3814 = vmatprep.mubr.bf16.mxu0 %v3725
        %3815 = vmatmul.mubr.bf16.gmra.mxu0 %v3636
        %v3816 = vpop.f32.mrf.mxu0
        %v3817 = vadd.f32 0.0, %v3816
        %v3818 = vpop.f32.mrf.mxu0
        %v3819 = vpop.f32.mrf.mxu0
        %v3820 = vadd.f32 0.0, %v3819
        %v3821 = vpop.f32.mrf.mxu0
        %3822 = vmatprep.mubr.bf16.mxu0 %v3728
        %3823 = vmatmul.mubr.bf16.gmra.mxu0 %v3638
        %v3824 = vpop.f32.mrf.mxu0
        %v3825 = vadd.f32 0.0, %v3824
        %v3826 = vpop.f32.mrf.mxu0
        %v3827 = vpop.f32.mrf.mxu0
        %v3828 = vadd.f32 0.0, %v3827
        %v3829 = vpop.f32.mrf.mxu0
        %3830 = vmatprep.mubr.bf16.mxu0 %v3731
        %3831 = vmatmul.mubr.bf16.gmra.mxu0 %v3640
        %v3832 = vpop.f32.mrf.mxu0
        %v3833 = vadd.f32 0.0, %v3832
        %v3834 = vpop.f32.mrf.mxu0
        %v3835 = vpop.f32.mrf.mxu0
        %v3836 = vadd.f32 0.0, %v3835
        %v3837 = vpop.f32.mrf.mxu0
        %3838 = vmatprep.mubr.bf16.mxu0 %v3734
        %3839 = vmatmul.mubr.bf16.gmra.mxu0 %v3642
        %v3840 = vpop.f32.mrf.mxu0
        %v3841 = vadd.f32 0.0, %v3840
        %v3842 = vpop.f32.mrf.mxu0
        %v3843 = vpop.f32.mrf.mxu0
        %v3844 = vadd.f32 0.0, %v3843
        %v3845 = vpop.f32.mrf.mxu0
        %3846 = vmatprep.mubr.bf16.mxu0 %v3737
        %3847 = vmatmul.mubr.bf16.gmra.mxu0 %v3644
        %v3848 = vpop.f32.mrf.mxu0
        %v3849 = vadd.f32 0.0, %v3848
        %v3850 = vpop.f32.mrf.mxu0
        %v3851 = vpop.f32.mrf.mxu0
        %v3852 = vadd.f32 0.0, %v3851
        %v3853 = vpop.f32.mrf.mxu0
        %3854 = vmatprep.mubr.bf16.mxu0 %v3740
        %3855 = vmatmul.mubr.bf16.gmra.mxu0 %v3646
        %v3856 = vpop.f32.mrf.mxu0
        %v3857 = vadd.f32 0.0, %v3856
        %v3858 = vpop.f32.mrf.mxu0
        %v3859 = vpop.f32.mrf.mxu0
        %v3860 = vadd.f32 0.0, %v3859
        %v3861 = vpop.f32.mrf.mxu0
        %3862 = vmatprep.mubr.bf16.mxu0 %v3743
        %3863 = vmatmul.mubr.bf16.gmra.mxu0 %v3648
        %v3864 = vpop.f32.mrf.mxu0
        %v3865 = vadd.f32 0.0, %v3864
        %v3866 = vpop.f32.mrf.mxu0
        %v3867 = vpop.f32.mrf.mxu0
        %v3868 = vadd.f32 0.0, %v3867
        %v3869 = vpop.f32.mrf.mxu0
        %3870 = vmatprep.mubr.bf16.mxu0 %v3746
        %3871 = vmatmul.mubr.bf16.gmra.mxu0 %v3650
        %v3872 = vpop.f32.mrf.mxu0
        %v3873 = vadd.f32 0.0, %v3872
        %v3874 = vpop.f32.mrf.mxu0
        %v3875 = vpop.f32.mrf.mxu0
        %v3876 = vadd.f32 0.0, %v3875
        %v3877 = vpop.f32.mrf.mxu0
        %3878 = vmatprep.mubr.bf16.mxu0 %v3749
        %3879 = vmatmul.mubr.bf16.gmra.mxu0 %v3652
        %v3880 = vpop.f32.mrf.mxu0
        %v3881 = vadd.f32 0.0, %v3880
        %v3882 = vpop.f32.mrf.mxu0
        %v3883 = vpop.f32.mrf.mxu0
        %v3884 = vadd.f32 0.0, %v3883
        %v3885 = vpop.f32.mrf.mxu0
        %3886 = vmatprep.mubr.bf16.mxu0 %v3752
        %3887 = vmatmul.mubr.bf16.gmra.mxu0 %v3654
        %v3888 = vpop.f32.mrf.mxu0
        %v3889 = vadd.f32 0.0, %v3888
        %v3890 = vpop.f32.mrf.mxu0
        %v3891 = vpop.f32.mrf.mxu0
        %v3892 = vadd.f32 0.0, %v3891
        %v3893 = vpop.f32.mrf.mxu0
        %3894 = vmatprep.mubr.bf16.mxu0 %v3755
        %3895 = vmatmul.mubr.bf16.gmra.mxu0 %v3656
        %v3896 = vpop.f32.mrf.mxu0
        %v3897 = vadd.f32 0.0, %v3896
        %v3898 = vpop.f32.mrf.mxu0
        %v3899 = vpop.f32.mrf.mxu0
        %v3900 = vadd.f32 0.0, %v3899
        %v3901 = vpop.f32.mrf.mxu0
        %3902 = vmatprep.mubr.bf16.mxu0 %v3758
        %3903 = vmatmul.mubr.bf16.gmra.mxu0 %v3658
        %v3904 = vpop.f32.mrf.mxu0
        %v3905 = vadd.f32 0.0, %v3904
        %v3906 = vpop.f32.mrf.mxu0
        %v3907 = vpop.f32.mrf.mxu0
        %v3908 = vadd.f32 0.0, %v3907
        %v3909 = vpop.f32.mrf.mxu0
        %3910 = vmatprep.mubr.bf16.mxu0 %v3761
        %3911 = vmatmul.mubr.bf16.gmra.mxu0 %v3660
        %v3912 = vpop.f32.mrf.mxu0
        %v3913 = vadd.f32 0.0, %v3912
        %v3914 = vpop.f32.mrf.mxu0
        %v3915 = vpop.f32.mrf.mxu0
        %v3916 = vadd.f32 0.0, %v3915
        %v3917 = vpop.f32.mrf.mxu0
        %3918 = vmatprep.mubr.bf16.mxu0 %v3764
        %3919 = vmatmul.mubr.bf16.gmra.mxu0 %v3662
        %v3920 = vpop.f32.mrf.mxu0
        %v3921 = vadd.f32 0.0, %v3920
        %v3922 = vpop.f32.mrf.mxu0
        %v3923 = vpop.f32.mrf.mxu0
        %v3924 = vadd.f32 0.0, %v3923
        %v3925 = vpop.f32.mrf.mxu0
        %3926 = vdwg.mxu0
        %v3927 = vld [vmem:[%s5] sm:$0x1]
        %v3928 = vld [vmem:[%s6] sm:$0x1]
        %v3929 = vsel %vm1351, %v3801, 0.0
        %v3930 = vsel %vm1351, %v3804, 0.0
        %v3931 = vadd.f32 %v3929, %v3930
        %v3932 = vsel %vm1351, %v3809, 0.0
        %v3933 = vadd.f32 %v3931, %v3932
        %v3934 = vsel %vm1351, %v3812, 0.0
        %v3935 = vadd.f32 %v3933, %v3934
        %v3936 = vsel %vm1351, %v3817, 0.0
        %v3937 = vadd.f32 %v3935, %v3936
        %v3938 = vsel %vm1351, %v3820, 0.0
        %v3939 = vadd.f32 %v3937, %v3938
        %v3940 = vsel %vm1351, %v3825, 0.0
        %v3941 = vadd.f32 %v3939, %v3940
        %v3942 = vsel %vm1351, %v3828, 0.0
        %v3943 = vadd.f32 %v3941, %v3942
        %v3944 = vsel %vm1351, %v3833, 0.0
        %v3945 = vadd.f32 %v3943, %v3944
        %v3946 = vsel %vm1351, %v3836, 0.0
        %v3947 = vadd.f32 %v3945, %v3946
        %v3948 = vsel %vm1351, %v3841, 0.0
        %v3949 = vadd.f32 %v3947, %v3948
        %v3950 = vsel %vm1351, %v3844, 0.0
        %v3951 = vadd.f32 %v3949, %v3950
        %v3952 = vsel %vm1351, %v3849, 0.0
        %v3953 = vadd.f32 %v3951, %v3952
        %v3954 = vsel %vm1351, %v3852, 0.0
        %v3955 = vadd.f32 %v3953, %v3954
        %v3956 = vsel %vm1351, %v3857, 0.0
        %v3957 = vadd.f32 %v3955, %v3956
        %v3958 = vsel %vm1351, %v3860, 0.0
        %v3959 = vadd.f32 %v3957, %v3958
        %v3960 = vsel %vm1351, %v3865, 0.0
        %v3961 = vadd.f32 %v3959, %v3960
        %v3962 = vsel %vm1351, %v3868, 0.0
        %v3963 = vadd.f32 %v3961, %v3962
        %v3964 = vsel %vm1351, %v3873, 0.0
        %v3965 = vadd.f32 %v3963, %v3964
        %v3966 = vsel %vm1351, %v3876, 0.0
        %v3967 = vadd.f32 %v3965, %v3966
        %v3968 = vsel %vm1351, %v3881, 0.0
        %v3969 = vadd.f32 %v3967, %v3968
        %v3970 = vsel %vm1351, %v3884, 0.0
        %v3971 = vadd.f32 %v3969, %v3970
        %v3972 = vsel %vm1351, %v3889, 0.0
        %v3973 = vadd.f32 %v3971, %v3972
        %v3974 = vsel %vm1351, %v3892, 0.0
        %v3975 = vadd.f32 %v3973, %v3974
        %v3976 = vsel %vm1351, %v3897, 0.0
        %v3977 = vadd.f32 %v3975, %v3976
        %v3978 = vsel %vm1351, %v3900, 0.0
        %v3979 = vadd.f32 %v3977, %v3978
        %v3980 = vsel %vm1351, %v3905, 0.0
        %v3981 = vadd.f32 %v3979, %v3980
        %v3982 = vsel %vm1351, %v3908, 0.0
        %v3983 = vadd.f32 %v3981, %v3982
        %v3984 = vsel %vm1351, %v3913, 0.0
        %v3985 = vadd.f32 %v3983, %v3984
        %v3986 = vsel %vm1351, %v3916, 0.0
        %v3987 = vadd.f32 %v3985, %v3986
        %v3988 = vsel %vm1351, %v3921, 0.0
        %v3989 = vadd.f32 %v3987, %v3988
        %v3990 = vsel %vm1351, %v3924, 0.0
        %v3991 = vadd.f32 %v3989, %v3990
        %v3992 = vrot.slane %v3991, 4
        %v3993 = vadd.f32 %v3991, %v3992
        %v3994 = vrot.slane %v3993, 2
        %v3995 = vadd.f32 %v3993, %v3994
        %v3996 = vrot.slane %v3995, 1
        %v3997 = vadd.f32 %v3995, %v3996
        %v3998 = vmul.f32 %v3801, %v3801
        %v3999 = vmul.f32 %v3804, %v3804
        %v4000 = vmul.f32 %v3809, %v3809
        %v4001 = vmul.f32 %v3812, %v3812
        %v4002 = vmul.f32 %v3817, %v3817
        %v4003 = vmul.f32 %v3820, %v3820
        %v4004 = vmul.f32 %v3825, %v3825
        %v4005 = vmul.f32 %v3828, %v3828
        %v4006 = vmul.f32 %v3833, %v3833
        %v4007 = vmul.f32 %v3836, %v3836
        %v4008 = vmul.f32 %v3841, %v3841
        %v4009 = vmul.f32 %v3844, %v3844
        %v4010 = vmul.f32 %v3849, %v3849
        %v4011 = vmul.f32 %v3852, %v3852
        %v4012 = vmul.f32 %v3857, %v3857
        %v4013 = vmul.f32 %v3860, %v3860
        %v4014 = vmul.f32 %v3865, %v3865
        %v4015 = vmul.f32 %v3868, %v3868
        %v4016 = vmul.f32 %v3873, %v3873
        %v4017 = vmul.f32 %v3876, %v3876
        %v4018 = vmul.f32 %v3881, %v3881
        %v4019 = vmul.f32 %v3884, %v3884
        %v4020 = vmul.f32 %v3889, %v3889
        %v4021 = vmul.f32 %v3892, %v3892
        %v4022 = vmul.f32 %v3897, %v3897
        %v4023 = vmul.f32 %v3900, %v3900
        %v4024 = vmul.f32 %v3905, %v3905
        %v4025 = vmul.f32 %v3908, %v3908
        %v4026 = vmul.f32 %v3913, %v3913
        %v4027 = vmul.f32 %v3916, %v3916
        %v4028 = vmul.f32 %v3921, %v3921
        %v4029 = vmul.f32 %v3924, %v3924
        %v4030 = vsel %vm1351, %v3998, 0.0
        %v4031 = vsel %vm1351, %v3999, 0.0
        %v4032 = vadd.f32 %v4030, %v4031
        %v4033 = vsel %vm1351, %v4000, 0.0
        %v4034 = vadd.f32 %v4032, %v4033
        %v4035 = vsel %vm1351, %v4001, 0.0
        %v4036 = vadd.f32 %v4034, %v4035
        %v4037 = vsel %vm1351, %v4002, 0.0
        %v4038 = vadd.f32 %v4036, %v4037
        %v4039 = vsel %vm1351, %v4003, 0.0
        %v4040 = vadd.f32 %v4038, %v4039
        %v4041 = vsel %vm1351, %v4004, 0.0
        %v4042 = vadd.f32 %v4040, %v4041
        %v4043 = vsel %vm1351, %v4005, 0.0
        %v4044 = vadd.f32 %v4042, %v4043
        %v4045 = vsel %vm1351, %v4006, 0.0
        %v4046 = vadd.f32 %v4044, %v4045
        %v4047 = vsel %vm1351, %v4007, 0.0
        %v4048 = vadd.f32 %v4046, %v4047
        %v4049 = vsel %vm1351, %v4008, 0.0
        %v4050 = vadd.f32 %v4048, %v4049
        %v4051 = vsel %vm1351, %v4009, 0.0
        %v4052 = vadd.f32 %v4050, %v4051
        %v4053 = vsel %vm1351, %v4010, 0.0
        %v4054 = vadd.f32 %v4052, %v4053
        %v4055 = vsel %vm1351, %v4011, 0.0
        %v4056 = vadd.f32 %v4054, %v4055
        %v4057 = vsel %vm1351, %v4012, 0.0
        %v4058 = vadd.f32 %v4056, %v4057
        %v4059 = vsel %vm1351, %v4013, 0.0
        %v4060 = vadd.f32 %v4058, %v4059
        %v4061 = vsel %vm1351, %v4014, 0.0
        %v4062 = vadd.f32 %v4060, %v4061
        %v4063 = vsel %vm1351, %v4015, 0.0
        %v4064 = vadd.f32 %v4062, %v4063
        %v4065 = vsel %vm1351, %v4016, 0.0
        %v4066 = vadd.f32 %v4064, %v4065
        %v4067 = vsel %vm1351, %v4017, 0.0
        %v4068 = vadd.f32 %v4066, %v4067
        %v4069 = vsel %vm1351, %v4018, 0.0
        %v4070 = vadd.f32 %v4068, %v4069
        %v4071 = vsel %vm1351, %v4019, 0.0
        %v4072 = vadd.f32 %v4070, %v4071
        %v4073 = vsel %vm1351, %v4020, 0.0
        %v4074 = vadd.f32 %v4072, %v4073
        %v4075 = vsel %vm1351, %v4021, 0.0
        %v4076 = vadd.f32 %v4074, %v4075
        %v4077 = vsel %vm1351, %v4022, 0.0
        %v4078 = vadd.f32 %v4076, %v4077
        %v4079 = vsel %vm1351, %v4023, 0.0
        %v4080 = vadd.f32 %v4078, %v4079
        %v4081 = vsel %vm1351, %v4024, 0.0
        %v4082 = vadd.f32 %v4080, %v4081
        %v4083 = vsel %vm1351, %v4025, 0.0
        %v4084 = vadd.f32 %v4082, %v4083
        %v4085 = vsel %vm1351, %v4026, 0.0
        %v4086 = vadd.f32 %v4084, %v4085
        %v4087 = vsel %vm1351, %v4027, 0.0
        %v4088 = vadd.f32 %v4086, %v4087
        %v4089 = vsel %vm1351, %v4028, 0.0
        %v4090 = vadd.f32 %v4088, %v4089
        %v4091 = vsel %vm1351, %v4029, 0.0
        %v4092 = vadd.f32 %v4090, %v4091
        %v4093 = vrot.slane %v4092, 4
        %v4094 = vadd.f32 %v4092, %v4093
        %v4095 = vrot.slane %v4094, 2
        %v4096 = vadd.f32 %v4094, %v4095
        %v4097 = vrot.slane %v4096, 1
        %v4098 = vadd.f32 %v4096, %v4097
        %v4099 = vsel %vm2049, %v3997, %v4098
        %v4101 = vsel %vm1351, %v4099, 0
        %4103 = vmatprep.subr.mxu0 0.0
        %4104 = vmatpush1.msra.mxu0 0.0
        %4105 = vmatprep.subr.mxu0 0.0
        %4106 = vmatpush1.msra.mxu0 0.0
        %4107 = vmatprep.subr.mxu0 0.0
        %4108 = vmatpush1.msra.mxu0 0.0
        %4109 = vmatprep.subr.mxu0 0.0
        %4110 = vmatpush1.msra.mxu0 0.0
        %4111 = vmatprep.subr.mxu0 0.0
        %4112 = vmatpush1.msra.mxu0 0.0
        %4113 = vmatprep.subr.mxu0 0.0
        %4114 = vmatpush1.msra.mxu0 0.0
        %4115 = vmatprep.subr.mxu0 0.0
        %4116 = vmatpush1.msra.mxu0 0.0
        %4117 = vmatprep.subr.mxu0 0.0
        %4118 = vmatpush1.msra.mxu0 0.0
        %4119 = vmatprep.subr.mxu0 0.0
        %4120 = vmatpush1.msra.mxu0 0.0
        %4121 = vmatprep.subr.mxu0 0.0
        %4122 = vmatpush1.msra.mxu0 0.0
        %4123 = vmatprep.subr.mxu0 0.0
        %4124 = vmatpush1.msra.mxu0 0.0
        %4125 = vmatprep.subr.mxu0 0.0
        %4126 = vmatpush1.msra.mxu0 0.0
        %4127 = vmatprep.subr.mxu0 0.0
        %4128 = vmatpush1.msra.mxu0 0.0
        %4129 = vmatprep.subr.mxu0 0.0
        %4130 = vmatpush1.msra.mxu0 0.0
        %4131 = vmatprep.subr.mxu0 0.0
        %4132 = vmatpush1.msra.mxu0 %v360
        %4133 = vmatprep.subr.mxu0 0.0
        %4134 = vmatpush1.msra.mxu0 %v359
        %4135 = vmatprep.subr.mxu0 0.0
        %4136 = vmatpush2.msra.mxu0 0.0
        %4137 = vmatprep.subr.mxu0 0.0
        %4138 = vmatpush2.msra.mxu0 0.0
        %4139 = vmatprep.subr.mxu0 0.0
        %4140 = vmatpush2.msra.mxu0 0.0
        %4141 = vmatprep.subr.mxu0 0.0
        %4142 = vmatpush2.msra.mxu0 0.0
        %4143 = vmatprep.subr.mxu0 0.0
        %4144 = vmatpush2.msra.mxu0 0.0
        %4145 = vmatprep.subr.mxu0 0.0
        %4146 = vmatpush2.msra.mxu0 0.0
        %4147 = vmatprep.subr.mxu0 0.0
        %4148 = vmatpush2.msra.mxu0 0.0
        %4149 = vmatprep.subr.mxu0 0.0
        %4150 = vmatpush2.msra.mxu0 0.0
        %4151 = vmatprep.subr.mxu0 0.0
        %4152 = vmatpush2.msra.mxu0 0.0
        %4153 = vmatprep.subr.mxu0 0.0
        %4154 = vmatpush2.msra.mxu0 0.0
        %4155 = vmatprep.subr.mxu0 0.0
        %4156 = vmatpush2.msra.mxu0 0.0
        %4157 = vmatprep.subr.mxu0 0.0
        %4158 = vmatpush2.msra.mxu0 0.0
        %4159 = vmatprep.subr.mxu0 0.0
        %4160 = vmatpush2.msra.mxu0 0.0
        %4161 = vmatprep.subr.mxu0 0.0
        %4162 = vmatpush2.msra.mxu0 0.0
        %4163 = vmatprep.subr.mxu0 0.0
        %4164 = vmatpush2.msra.mxu0 0.0
        %4165 = vmatprep.subr.mxu0 0.0
        %4166 = vmatpush2.msra.mxu0 0.0
        %4167 = vmatprep.mubr.f32.mxu0 0.0
        %4168 = vmatmul.mubr.f32.gmra.mxu0 %v4101
        %v4169 = vpop.f32.mrf.mxu0
        %v4170 = vadd.f32 0.0, %v4169
        %v4171 = vpop.f32.mrf.mxu0
        %4172 = vdwg.mxu0
        %v4173 = vmul.f32 %v4170, %v4170
        %v4175 = vrot.slane %v4173, 7
        %v4177 = vsub.f32 %v4170, %v4175
        %v4178 = vmax.f32 %v4177, 0.0
        %v4179 = vadd.f32 %v4178, 1e-05
        %v4180 = vrsqrt.pop %v4179
        %v4183 = vunpack.c.l.s4 1966171168
        %v4184 = vunpack.c.0.s8 %v4183
        %v4185 = vlaneseq
        %v4186 = vshrl.u32 %v4185, 7
        %v4187 = vsub.s32 %v4184, %v4186
        %v4188 = vrot.slane %v4180, %v4187
        %v4189 = vcombine.high %v4188, %v4188
        %v4191 = vunpack.c.l.s4 1966171168
        %v4192 = vunpack.c.0.s8 %v4191
        %v4193 = vlaneseq
        %v4194 = vshrl.u32 %v4193, 7
        %v4195 = vsub.s32 %v4192, %v4194
        %v4196 = vrot.slane %v4189, %v4195
        %v4198 = vmul.f32 %v3927, %v4196
        %v4199 = vmul.f32 %v4170, %v4198
        %v4200 = vsub.f32 %v3928, %v4199
        %v4202 = vlaneseq
        %v4203 = vshrl.u32 %v4202, 7
        %v4204 = vsub.s32 0, %v4203
        %v4205 = vrot.slane %v4198, %v4204
        %v4207 = vmul.f32 %v3801, %v4205
        %v4208 = vmul.f32 %v3804, %v4205
        %v4209 = vmul.f32 %v3809, %v4205
        %v4210 = vmul.f32 %v3812, %v4205
        %v4211 = vmul.f32 %v3817, %v4205
        %v4212 = vmul.f32 %v3820, %v4205
        %v4213 = vmul.f32 %v3825, %v4205
        %v4214 = vmul.f32 %v3828, %v4205
        %v4215 = vmul.f32 %v3833, %v4205
        %v4216 = vmul.f32 %v3836, %v4205
        %v4217 = vmul.f32 %v3841, %v4205
        %v4218 = vmul.f32 %v3844, %v4205
        %v4219 = vmul.f32 %v3849, %v4205
        %v4220 = vmul.f32 %v3852, %v4205
        %v4221 = vmul.f32 %v3857, %v4205
        %v4222 = vmul.f32 %v3860, %v4205
        %v4223 = vmul.f32 %v3865, %v4205
        %v4224 = vmul.f32 %v3868, %v4205
        %v4225 = vmul.f32 %v3873, %v4205
        %v4226 = vmul.f32 %v3876, %v4205
        %v4227 = vmul.f32 %v3881, %v4205
        %v4228 = vmul.f32 %v3884, %v4205
        %v4229 = vmul.f32 %v3889, %v4205
        %v4230 = vmul.f32 %v3892, %v4205
        %v4231 = vmul.f32 %v3897, %v4205
        %v4232 = vmul.f32 %v3900, %v4205
        %v4233 = vmul.f32 %v3905, %v4205
        %v4234 = vmul.f32 %v3908, %v4205
        %v4235 = vmul.f32 %v3913, %v4205
        %v4236 = vmul.f32 %v3916, %v4205
        %v4237 = vmul.f32 %v3921, %v4205
        %v4238 = vmul.f32 %v3924, %v4205
        %v4240 = vlaneseq
        %v4241 = vshrl.u32 %v4240, 7
        %v4242 = vsub.s32 0, %v4241
        %v4243 = vrot.slane %v4200, %v4242
        %v4245 = vadd.f32 %v4207, %v4243
        %v4246 = vadd.f32 %v4208, %v4243
        %v4247 = vadd.f32 %v4209, %v4243
        %v4248 = vadd.f32 %v4210, %v4243
        %v4249 = vadd.f32 %v4211, %v4243
        %v4250 = vadd.f32 %v4212, %v4243
        %v4251 = vadd.f32 %v4213, %v4243
        %v4252 = vadd.f32 %v4214, %v4243
        %v4253 = vadd.f32 %v4215, %v4243
        %v4254 = vadd.f32 %v4216, %v4243
        %v4255 = vadd.f32 %v4217, %v4243
        %v4256 = vadd.f32 %v4218, %v4243
        %v4257 = vadd.f32 %v4219, %v4243
        %v4258 = vadd.f32 %v4220, %v4243
        %v4259 = vadd.f32 %v4221, %v4243
        %v4260 = vadd.f32 %v4222, %v4243
        %v4261 = vadd.f32 %v4223, %v4243
        %v4262 = vadd.f32 %v4224, %v4243
        %v4263 = vadd.f32 %v4225, %v4243
        %v4264 = vadd.f32 %v4226, %v4243
        %v4265 = vadd.f32 %v4227, %v4243
        %v4266 = vadd.f32 %v4228, %v4243
        %v4267 = vadd.f32 %v4229, %v4243
        %v4268 = vadd.f32 %v4230, %v4243
        %v4269 = vadd.f32 %v4231, %v4243
        %v4270 = vadd.f32 %v4232, %v4243
        %v4271 = vadd.f32 %v4233, %v4243
        %v4272 = vadd.f32 %v4234, %v4243
        %v4273 = vadd.f32 %v4235, %v4243
        %v4274 = vadd.f32 %v4236, %v4243
        %v4275 = vadd.f32 %v4237, %v4243
        %v4276 = vadd.f32 %v4238, %v4243
        %v4277 = vadd.f32 %v4245, %v412
        %v4278 = vadd.f32 %v4246, %v414
        %v4279 = vadd.f32 %v4247, %v417
        %v4280 = vadd.f32 %v4248, %v419
        %v4281 = vadd.f32 %v4249, %v422
        %v4282 = vadd.f32 %v4250, %v424
        %v4283 = vadd.f32 %v4251, %v427
        %v4284 = vadd.f32 %v4252, %v429
        %v4285 = vadd.f32 %v4253, %v432
        %v4286 = vadd.f32 %v4254, %v434
        %v4287 = vadd.f32 %v4255, %v437
        %v4288 = vadd.f32 %v4256, %v439
        %v4289 = vadd.f32 %v4257, %v442
        %v4290 = vadd.f32 %v4258, %v444
        %v4291 = vadd.f32 %v4259, %v447
        %v4292 = vadd.f32 %v4260, %v449
        %v4293 = vadd.f32 %v4261, %v452
        %v4294 = vadd.f32 %v4262, %v454
        %v4295 = vadd.f32 %v4263, %v457
        %v4296 = vadd.f32 %v4264, %v459
        %v4297 = vadd.f32 %v4265, %v462
        %v4298 = vadd.f32 %v4266, %v464
        %v4299 = vadd.f32 %v4267, %v467
        %v4300 = vadd.f32 %v4268, %v469
        %v4301 = vadd.f32 %v4269, %v472
        %v4302 = vadd.f32 %v4270, %v474
        %v4303 = vadd.f32 %v4271, %v477
        %v4304 = vadd.f32 %v4272, %v479
        %v4305 = vadd.f32 %v4273, %v482
        %v4306 = vadd.f32 %v4274, %v484
        %v4307 = vadd.f32 %v4275, %v487
        %v4308 = vadd.f32 %v4276, %v489
        %vm4309 = vcmp.gt.f32.partialorder %v4277, 0.0
        %vm4310 = vcmp.gt.f32.partialorder %v4278, 0.0
        %vm4311 = vcmp.gt.f32.partialorder %v4279, 0.0
        %vm4312 = vcmp.gt.f32.partialorder %v4280, 0.0
        %vm4313 = vcmp.gt.f32.partialorder %v4281, 0.0
        %vm4314 = vcmp.gt.f32.partialorder %v4282, 0.0
        %vm4315 = vcmp.gt.f32.partialorder %v4283, 0.0
        %vm4316 = vcmp.gt.f32.partialorder %v4284, 0.0
        %vm4317 = vcmp.gt.f32.partialorder %v4285, 0.0
        %vm4318 = vcmp.gt.f32.partialorder %v4286, 0.0
        %vm4319 = vcmp.gt.f32.partialorder %v4287, 0.0
        %vm4320 = vcmp.gt.f32.partialorder %v4288, 0.0
        %vm4321 = vcmp.gt.f32.partialorder %v4289, 0.0
        %vm4322 = vcmp.gt.f32.partialorder %v4290, 0.0
        %vm4323 = vcmp.gt.f32.partialorder %v4291, 0.0
        %vm4324 = vcmp.gt.f32.partialorder %v4292, 0.0
        %vm4325 = vcmp.gt.f32.partialorder %v4293, 0.0
        %vm4326 = vcmp.gt.f32.partialorder %v4294, 0.0
        %vm4327 = vcmp.gt.f32.partialorder %v4295, 0.0
        %vm4328 = vcmp.gt.f32.partialorder %v4296, 0.0
        %vm4329 = vcmp.gt.f32.partialorder %v4297, 0.0
        %vm4330 = vcmp.gt.f32.partialorder %v4298, 0.0
        %vm4331 = vcmp.gt.f32.partialorder %v4299, 0.0
        %vm4332 = vcmp.gt.f32.partialorder %v4300, 0.0
        %vm4333 = vcmp.gt.f32.partialorder %v4301, 0.0
        %vm4334 = vcmp.gt.f32.partialorder %v4302, 0.0
        %vm4335 = vcmp.gt.f32.partialorder %v4303, 0.0
        %vm4336 = vcmp.gt.f32.partialorder %v4304, 0.0
        %vm4337 = vcmp.gt.f32.partialorder %v4305, 0.0
        %vm4338 = vcmp.gt.f32.partialorder %v4306, 0.0
        %vm4339 = vcmp.gt.f32.partialorder %v4307, 0.0
        %vm4340 = vcmp.gt.f32.partialorder %v4308, 0.0
        %v4341 = vmul.f32 %v4277, 0.01
        %v4342 = vmul.f32 %v4278, 0.01
        %v4343 = vmul.f32 %v4279, 0.01
        %v4344 = vmul.f32 %v4280, 0.01
        %v4345 = vmul.f32 %v4281, 0.01
        %v4346 = vmul.f32 %v4282, 0.01
        %v4347 = vmul.f32 %v4283, 0.01
        %v4348 = vmul.f32 %v4284, 0.01
        %v4349 = vmul.f32 %v4285, 0.01
        %v4350 = vmul.f32 %v4286, 0.01
        %v4351 = vmul.f32 %v4287, 0.01
        %v4352 = vmul.f32 %v4288, 0.01
        %v4353 = vmul.f32 %v4289, 0.01
        %v4354 = vmul.f32 %v4290, 0.01
        %v4355 = vmul.f32 %v4291, 0.01
        %v4356 = vmul.f32 %v4292, 0.01
        %v4357 = vmul.f32 %v4293, 0.01
        %v4358 = vmul.f32 %v4294, 0.01
        %v4359 = vmul.f32 %v4295, 0.01
        %v4360 = vmul.f32 %v4296, 0.01
        %v4361 = vmul.f32 %v4297, 0.01
        %v4362 = vmul.f32 %v4298, 0.01
        %v4363 = vmul.f32 %v4299, 0.01
        %v4364 = vmul.f32 %v4300, 0.01
        %v4365 = vmul.f32 %v4301, 0.01
        %v4366 = vmul.f32 %v4302, 0.01
        %v4367 = vmul.f32 %v4303, 0.01
        %v4368 = vmul.f32 %v4304, 0.01
        %v4369 = vmul.f32 %v4305, 0.01
        %v4370 = vmul.f32 %v4306, 0.01
        %v4371 = vmul.f32 %v4307, 0.01
        %v4372 = vmul.f32 %v4308, 0.01
        %v4373 = vsel %vm4309, %v4277, %v4341
        %v4374 = vsel %vm4310, %v4278, %v4342
        %v4375 = vsel %vm4311, %v4279, %v4343
        %v4376 = vsel %vm4312, %v4280, %v4344
        %v4377 = vsel %vm4313, %v4281, %v4345
        %v4378 = vsel %vm4314, %v4282, %v4346
        %v4379 = vsel %vm4315, %v4283, %v4347
        %v4380 = vsel %vm4316, %v4284, %v4348
        %v4381 = vsel %vm4317, %v4285, %v4349
        %v4382 = vsel %vm4318, %v4286, %v4350
        %v4383 = vsel %vm4319, %v4287, %v4351
        %v4384 = vsel %vm4320, %v4288, %v4352
        %v4385 = vsel %vm4321, %v4289, %v4353
        %v4386 = vsel %vm4322, %v4290, %v4354
        %v4387 = vsel %vm4323, %v4291, %v4355
        %v4388 = vsel %vm4324, %v4292, %v4356
        %v4389 = vsel %vm4325, %v4293, %v4357
        %v4390 = vsel %vm4326, %v4294, %v4358
        %v4391 = vsel %vm4327, %v4295, %v4359
        %v4392 = vsel %vm4328, %v4296, %v4360
        %v4393 = vsel %vm4329, %v4297, %v4361
        %v4394 = vsel %vm4330, %v4298, %v4362
        %v4395 = vsel %vm4331, %v4299, %v4363
        %v4396 = vsel %vm4332, %v4300, %v4364
        %v4397 = vsel %vm4333, %v4301, %v4365
        %v4398 = vsel %vm4334, %v4302, %v4366
        %v4399 = vsel %vm4335, %v4303, %v4367
        %v4400 = vsel %vm4336, %v4304, %v4368
        %v4401 = vsel %vm4337, %v4305, %v4369
        %v4402 = vsel %vm4338, %v4306, %v4370
        %v4403 = vsel %vm4339, %v4307, %v4371
        %v4404 = vsel %vm4340, %v4308, %v4372
        %4405 = vxpose.xlu0.b32.start [1/16] %v4373, 128
        %4406 = vxpose.xlu0.b32.cont [2/16] %v4374, 128
        %4407 = vxpose.xlu0.b32.cont [3/16] %v4375, 128
        %4408 = vxpose.xlu0.b32.cont [4/16] %v4376, 128
        %4409 = vxpose.xlu0.b32.cont [5/16] %v4377, 128
        %4410 = vxpose.xlu0.b32.cont [6/16] %v4378, 128
        %4411 = vxpose.xlu0.b32.cont [7/16] %v4379, 128
        %4412 = vxpose.xlu0.b32.cont [8/16] %v4380, 128
        %4413 = vxpose.xlu0.b32.cont [9/16] %v4381, 128
        %4414 = vxpose.xlu0.b32.cont [10/16] %v4382, 128
        %4415 = vxpose.xlu0.b32.cont [11/16] %v4383, 128
        %4416 = vxpose.xlu0.b32.cont [12/16] %v4384, 128
        %4417 = vxpose.xlu0.b32.cont [13/16] %v4385, 128
        %4418 = vxpose.xlu0.b32.cont [14/16] %v4386, 128
        %4419 = vxpose.xlu0.b32.cont [15/16] %v4387, 128
        %4420 = vxpose.xlu0.b32.end [16/16] %v4388, 128
        %v4421 = vpop.trf.xlu0
        %v4422 = vpop.trf.xlu0
        %v4423 = vpop.trf.xlu0
        %v4424 = vpop.trf.xlu0
        %v4425 = vpop.trf.xlu0
        %v4426 = vpop.trf.xlu0
        %v4427 = vpop.trf.xlu0
        %v4428 = vpop.trf.xlu0
        %v4429 = vpop.trf.xlu0
        %v4430 = vpop.trf.xlu0
        %v4431 = vpop.trf.xlu0
        %v4432 = vpop.trf.xlu0
        %v4433 = vpop.trf.xlu0
        %v4434 = vpop.trf.xlu0
        %v4435 = vpop.trf.xlu0
        %v4436 = vpop.trf.xlu0
        %4437 = vxpose.xlu0.b32.start [1/16] %v4389, 128
        %4438 = vxpose.xlu0.b32.cont [2/16] %v4390, 128
        %4439 = vxpose.xlu0.b32.cont [3/16] %v4391, 128
        %4440 = vxpose.xlu0.b32.cont [4/16] %v4392, 128
        %4441 = vxpose.xlu0.b32.cont [5/16] %v4393, 128
        %4442 = vxpose.xlu0.b32.cont [6/16] %v4394, 128
        %4443 = vxpose.xlu0.b32.cont [7/16] %v4395, 128
        %4444 = vxpose.xlu0.b32.cont [8/16] %v4396, 128
        %4445 = vxpose.xlu0.b32.cont [9/16] %v4397, 128
        %4446 = vxpose.xlu0.b32.cont [10/16] %v4398, 128
        %4447 = vxpose.xlu0.b32.cont [11/16] %v4399, 128
        %4448 = vxpose.xlu0.b32.cont [12/16] %v4400, 128
        %4449 = vxpose.xlu0.b32.cont [13/16] %v4401, 128
        %4450 = vxpose.xlu0.b32.cont [14/16] %v4402, 128
        %4451 = vxpose.xlu0.b32.cont [15/16] %v4403, 128
        %4452 = vxpose.xlu0.b32.end [16/16] %v4404, 128
        %v4453 = vpop.trf.xlu0
        %v4454 = vpop.trf.xlu0
        %v4455 = vpop.trf.xlu0
        %v4456 = vpop.trf.xlu0
        %v4457 = vpop.trf.xlu0
        %v4458 = vpop.trf.xlu0
        %v4459 = vpop.trf.xlu0
        %v4460 = vpop.trf.xlu0
        %v4461 = vpop.trf.xlu0
        %v4462 = vpop.trf.xlu0
        %v4463 = vpop.trf.xlu0
        %v4464 = vpop.trf.xlu0
        %v4465 = vpop.trf.xlu0
        %v4466 = vpop.trf.xlu0
        %v4467 = vpop.trf.xlu0
        %v4468 = vpop.trf.xlu0
        %4469 = vst [vmem:[%s298] sm:$0xff] %v4421
        %4470 = vst [vmem:[%s298 + $0x8] sm:$0xff] %v4453
        %4471 = vst [vmem:[%s298 + $0x10] sm:$0xff] %v4422
        %4472 = vst [vmem:[%s298 + $0x18] sm:$0xff] %v4454
        %s4473 = sand.u32 %s203, 1
        %s4474 = scalar_lea.sflag [#allocation4], %s4473
        %s4475 = sand.u32 %s203, 1
        %s4476 = smul.addr %s4475, 32
        %s4477 = scalar_lea.vmem [#allocation3], %s4476
        // Predicated region
        $region53: #{tpu_custom_call.1} parent=51 // pred_check
          %p4478 = pneg %p213
        $region54: #{tpu_custom_call.1} parent=51 // pred_check_branch
          %4480 = sbr.rel (%p4478) target = $region56
        $region55: #{tpu_custom_call.1} parent=51 // pred_region
          %s4482 = ssub.s32 512, 512
          %4483 = vsyncadd %s4474, %s4482
          %s4484 = smul.addr %s22, 4
          %s4485 = smul.addr %s4484, 128
          %s4486 = scalar_lea.hbm %s8, %s4485
          %s4487 = sshll.u32 %s4477, 4
          %s4488 = int_to_ptr.vmem [resolvable:$true] %s4487
          %4493 = dma.vmem_to_hbm [thread:$0]  %s4488, 512, %s4486, %s4474, 256, 256, 16
        $region56: #{tpu_custom_call.1} parent=51 // pred_fallthru
          _
      $region52: #{tpu_custom_call.1} parent=5 // pred_fallthru
        _
      %p4494 = scmp.le.s32.totalorder 2, %s17
      // Predicated region
      $region57: #{tpu_custom_call.1} parent=5 // pred_check
        %p4495 = pneg %p4494
      $region58: #{tpu_custom_call.1} parent=5 // pred_check_branch
        %4497 = sbr.rel (%p4495) target = $region60
      $region59: #{tpu_custom_call.1} parent=5 // pred_region
        %s4498 = ssub.s32 %s17, 2
        // Predicated region
        $region61: #{tpu_custom_call.1} parent=59 // pred_check
          %p4499 = pneg %p219
        $region62: #{tpu_custom_call.1} parent=59 // pred_check_branch
          %4501 = sbr.rel (%p4499) target = $region64
        $region63: #{tpu_custom_call.1} parent=59 // pred_region
          %s4502 = sand.u32 %s204, 1
          %s4503 = scalar_lea.sflag [#allocation4], %s4502
          %s4504 = sand.u32 %s204, 1
          %s4505 = smul.addr %s4504, 32
          %s4506 = scalar_lea.vmem [#allocation3], %s4505
          %4507 = dma.done %s4503, 512
        $region64: #{tpu_custom_call.1} parent=59 // pred_fallthru
          _
      $region60: #{tpu_custom_call.1} parent=5 // pred_fallthru
        _
    $region6: #{tpu_custom_call.1} parent=1 // loop_footer
      %s21 = sadd.s32 1, %s17
    $region7: #{tpu_custom_call.1} parent=1 // loop_footer_branch
      %16 = sbr.rel target = $region3
    $region8: #{tpu_custom_call.1} parent=1 // loop_exit
      _
    %4508 = vsyncpa [#allocation4], 1
    %s4509 = scalar_lea.sflag [#allocation4], 1
    %4510 = vsyncpa %s4509, 1

</llo_original>
